<compile_context>
chip_gen: v7x
topology: tpu7x:2x2x1
jax: 0.10.0
libtpu: 0.0.40
codegen_flags: <defaults>
</compile_context>

<pallas_src>
import jax
import jax.numpy as jnp
from jax import lax
from jax.experimental import pallas as pl
from jax.experimental.pallas import tpu as pltpu

# ---------------- small synthetic hyperparameters ----------------
B = 2          # batch
N_MELS = 8     # mel channels
T = 8          # mel frames
DIM = 32       # backbone hidden dim
INTER = 64     # ConvNeXt intermediate dim
N_LAYERS = 2   # ConvNeXt blocks
KSIZE = 7
PAD = 3
EPS = 1e-6

# ISTFT params fixed by the module:
# ExportableISTFTModule(5200, filter_length=1024, hop_length=256, win_length=1024, 'hann')
MAX_SAMPLES = 5200
N_FFT = 1024
HOP = 256
WIN_LEN = 1024
N_FREQ = N_FFT // 2 + 1            # 513
NF_MAIN = N_FFT // 2               # 512 "main" bins; Nyquist handled separately
R = N_FFT // HOP                   # 4 hop chunks per frame (grid axis 1)
N_BLOCKS = T + R - 1               # 11 overlap-add blocks of length HOP
N_BLOCKS_PAD = 16                  # padded to a sublane multiple for unmasked stores
TRIM_BLOCKS = (N_FFT // 2) // HOP  # center=True trim, in hop blocks
BT = B * T
XCOL = KSIZE * N_MELS              # 56 im2col columns
XCOL_PAD = 64                      # padded to 64 so the embed-conv load is unmasked


# ---------------- in-kernel helpers ----------------
def _layernorm(x, g, b):
    mu = jnp.mean(x, axis=-1, keepdims=True)
    var = jnp.mean(jnp.square(x - mu), axis=-1, keepdims=True)
    return (x - mu) * lax.rsqrt(var + EPS) * g + b


def _gelu_tanh(x):
    # TODO(synk): PyTorch nn.GELU() defaults to exact erf; using the tanh
    # approximation since erf lowering is not guaranteed on Mosaic.
    c = 0.7978845608028654  # sqrt(2/pi)
    return 0.5 * x * (1.0 + jnp.tanh(c * (x + 0.044715 * x * x * x)))


# ---------------- the single fused kernel ----------------
def vocos_fused_kernel(
        xcol_ref, wemb_ref, bemb_ref, ln0g_ref, ln0b_ref,
        dww_ref, dwb_ref, lng_ref, lnb_ref,
        w1_ref, b1_ref, w2_ref, b2_ref, gam_ref,
        lnfg_ref, lnfb_ref, whead_ref, bhead_ref, wnyq_ref, bnyq_ref,
        basis_ref, cnyq_ref, envinv_ref,
        o_ref,
        real_sc, imag_sc, rn_sc, ola_sc):
    r = pl.program_id(1)   # hop-chunk index (grid axis 0 = batch, handled by BlockSpecs)

    # ---------- backbone + head: once per batch, overlapped with the first
    # ---------- basis-chunk DMA of the next steps ----------
    @pl.when(r == 0)
    def _backbone_and_head():
        # embed Conv1d(k=7,pad=3) as ONE im2col matmul (width padded to 64) + LN
        h = jnp.dot(xcol_ref[...], wemb_ref[...], preferred_element_type=jnp.float32)
        x = _layernorm(h + bemb_ref[...], ln0g_ref[...], ln0b_ref[...])      # (T, DIM)

        t_idx = lax.broadcasted_iota(jnp.int32, (T, DIM), 0)                 # hoisted

        # ConvNeXt blocks (statically unrolled)
        for l in range(N_LAYERS):
            dww = dww_ref[l]                                 # (KSIZE, DIM)
            # Depthwise conv over time: pltpu.roll along the sublane (time)
            # axis + boundary masks — XLU slot, no quadratic shift matrix.
            acc = x * dww[PAD:PAD + 1, :]                    # tap d = 0
            for k in range(KSIZE):
                d = k - PAD
                if d == 0:
                    continue
                rolled = pltpu.roll(x, shift=(-d) % T, axis=0)   # rolled[t] = x[t+d]
                if d > 0:
                    valid = t_idx < (T - d)
                else:
                    valid = t_idx >= (-d)
                acc = acc + jnp.where(valid, rolled, 0.0) * dww[k:k + 1, :]
            acc = acc + dwb_ref[l]
            hb = _layernorm(acc, lng_ref[l], lnb_ref[l])
            hb = jnp.dot(hb, w1_ref[l], preferred_element_type=jnp.float32) + b1_ref[l]
            hb = _gelu_tanh(hb)
            hb = jnp.dot(hb, w2_ref[l], preferred_element_type=jnp.float32) + b2_ref[l]
            x = x + gam_ref[l] * hb                          # layer-scale residual

        # final LayerNorm + ISTFTHead (mag/phase fused into one bf16 matmul)
        hf = _layernorm(x, lnfg_ref[...], lnfb_ref[...])
        ho = jnp.dot(hf.astype(jnp.bfloat16), whead_ref[...],
                     preferred_element_type=jnp.float32) + bhead_ref[...]    # (T, 1024)
        mag = jnp.minimum(jnp.exp(ho[:, :NF_MAIN]), 1e2)     # exp then clip(max=1e2)
        ph = ho[:, NF_MAIN:]
        real_sc[...] = mag * jnp.cos(ph)                     # (T, 512)
        imag_sc[...] = mag * jnp.sin(ph)
        # Nyquist bin (bin 512) as a rank-1 update so the big matmul keeps K=512.
        wn = wnyq_ref[...]                                   # (2, DIM)
        bn = bnyq_ref[...]                                   # (2, 1)
        lm_n = jnp.sum(hf * wn[0:1, :], axis=-1, keepdims=True) + bn[0:1, :]
        ph_n = jnp.sum(hf * wn[1:2, :], axis=-1, keepdims=True) + bn[1:2, :]
        rn_sc[...] = jnp.minimum(jnp.exp(lm_n), 1e2) * jnp.cos(ph_n)
        # imag at Nyquist is ignored, matching irfft/torch.istft semantics.
        ola_sc[...] = jnp.zeros_like(ola_sc)

    # ---------- per-chunk ISTFT: two K=512 bf16 matmuls against the current
    # ---------- (1024, HOP) basis slab (pipelined DMA), + Nyquist rank-1 ----
    fr = (jnp.dot(real_sc[...].astype(jnp.bfloat16), basis_ref[:NF_MAIN, :],
                  preferred_element_type=jnp.float32)
          + jnp.dot(imag_sc[...].astype(jnp.bfloat16), basis_ref[NF_MAIN:, :],
                    preferred_element_type=jnp.float32))
    fr = fr + rn_sc[...] * cnyq_ref[...]                     # (T, HOP)

    # ---------- overlap-add: chunk r of frame t lands in OLA block t + r.
    # Pad to a full (16, HOP) tile, shift by r rows with a static sublane roll
    # (zeros wrap around), full-tile accumulate into VMEM scratch.
    fr16 = jnp.concatenate(
        [fr, jnp.zeros((N_BLOCKS_PAD - T, HOP), jnp.float32)], axis=0)
    for rr in range(R):
        @pl.when(r == rr)
        def _accumulate(rr=rr):
            shifted = pltpu.roll(fr16, shift=rr, axis=0) if rr else fr16
            ola_sc[...] = ola_sc[...] + shifted

    # ---------- finalize: envelope normalization + one unmasked (16,256) store
    @pl.when(r == R - 1)
    def _finalize():
        o_ref[...] = ola_sc[...] * envinv_ref[...]


# ---------------- pallas_call wrapper ----------------
def run_vocos_fused(operands):
    xcol = operands[0]
    const_ops = operands[1:-3]
    basis, cnyq, envinv = operands[-3:]

    def const_spec(a):
        n = a.ndim
        return pl.BlockSpec(tuple(a.shape), lambda b, r, _n=n: (0,) * _n)

    in_specs = [pl.BlockSpec((T, XCOL_PAD), lambda b, r: (b, 0))]      # per-batch rows
    in_specs += [const_spec(a) for a in const_ops]
    in_specs += [
        pl.BlockSpec((2 * NF_MAIN, HOP), lambda b, r: (0, r)),         # basis chunk
        pl.BlockSpec((1, HOP), lambda b, r: (0, r)),                   # nyquist row chunk
        const_spec(envinv),
    ]

    out_bytes = B * N_BLOCKS_PAD * HOP * 4
    bytes_accessed = int(sum(int(a.size) * a.dtype.itemsize for a in operands)
                         + (B - 1) * int(basis.size) * basis.dtype.itemsize
                         + out_bytes)
    flops = int(2 * BT * (2 * NF_MAIN + 1) * N_FFT            # ISTFT matmuls
                + 2 * BT * XCOL_PAD * DIM                     # embed conv
                + N_LAYERS * 2 * (2 * BT * DIM * INTER)       # MLPs
                + 2 * BT * DIM * 2 * NF_MAIN)                 # head
    transcendentals = int(BT * (3 * N_FREQ + N_LAYERS * INTER))

    return pl.pallas_call(
        vocos_fused_kernel,
        out_shape=jax.ShapeDtypeStruct((B * N_BLOCKS_PAD, HOP), jnp.float32),
        grid=(B, R),
        in_specs=in_specs,
        out_specs=pl.BlockSpec((N_BLOCKS_PAD, HOP), lambda b, r: (b, 0)),
        scratch_shapes=[
            pltpu.VMEM((T, NF_MAIN), jnp.float32),    # real spectral coeffs
            pltpu.VMEM((T, NF_MAIN), jnp.float32),    # imag spectral coeffs
            pltpu.VMEM((T, 1), jnp.float32),          # Nyquist real coeff
            pltpu.VMEM((N_BLOCKS_PAD, HOP), jnp.float32),   # OLA accumulator
        ],
        compiler_params=pltpu.CompilerParams(
            dimension_semantics=("parallel", "arbitrary"),
            vmem_limit_bytes=32 * 1024 * 1024),
        cost_estimate=pl.CostEstimate(
            flops=flops, transcendentals=transcendentals,
            bytes_accessed=bytes_accessed),
    )(*operands)


# ---------------- parameter / constant setup (deterministic, glue) ----------------
def init_params(key):
    ks = iter(jax.random.split(key, 32))

    def rnd(shape, scale):
        return scale * jax.random.normal(next(ks), shape, jnp.float32)

    p = {
        "w_embed": rnd((KSIZE, N_MELS, DIM), 0.2),
        "b_embed": rnd((1, DIM), 0.1),
        "ln0_g": jnp.ones((1, DIM), jnp.float32),
        "ln0_b": jnp.zeros((1, DIM), jnp.float32),
        "lnf_g": jnp.ones((1, DIM), jnp.float32),
        "lnf_b": jnp.zeros((1, DIM), jnp.float32),
        "w_mag": rnd((DIM, N_FREQ), 0.05),
        "b_mag": jnp.full((1, N_FREQ), -1.0, jnp.float32),
        "w_ph": rnd((DIM, N_FREQ), 0.05),
        "b_ph": rnd((1, N_FREQ), 0.1),
        "blocks": [],
    }
    for _ in range(N_LAYERS):
        p["blocks"].append({
            "dw_w": rnd((KSIZE, DIM), 0.2),
            "dw_b": rnd((1, DIM), 0.1),
            "ln_g": jnp.ones((1, DIM), jnp.float32),
            "ln_b": jnp.zeros((1, DIM), jnp.float32),
            "w1": rnd((DIM, INTER), 0.1),
            "b1": rnd((1, INTER), 0.1),
            "w2": rnd((INTER, DIM), 0.1),
            "b2": rnd((1, DIM), 0.1),
            "gamma": jnp.full((1, DIM), 0.1, jnp.float32),  # ConvNeXt layer scale
        })
    return p


def istft_constants():
    # irfft as a matmul: frame[n] = sum_k coef_k/N * (Re[k] cos(2pi k n/N) - Im[k] sin(...))
    n = jnp.arange(N_FFT, dtype=jnp.int32)[None, :]
    k = jnp.arange(N_FREQ, dtype=jnp.int32)[:, None]
    kn = (k * n) % N_FFT                       # integer mod keeps f32 trig accurate
    ang = (2.0 * jnp.pi / N_FFT) * kn.astype(jnp.float32)
    coef = jnp.where((k == 0) | (k == N_FFT // 2), 1.0, 2.0).astype(jnp.float32)
    Cb = coef * jnp.cos(ang) / N_FFT
    Sb = coef * jnp.sin(ang) / N_FFT           # k=0 row exactly 0 (imag ignored)

    t = jnp.arange(WIN_LEN, dtype=jnp.float32)
    win = 0.5 - 0.5 * jnp.cos(2.0 * jnp.pi * t / WIN_LEN)   # periodic hann
    wsq = jnp.square(win).reshape(R, HOP)
    env = jnp.zeros((N_BLOCKS, HOP), jnp.float32)
    for r in range(R):                          # overlap-added squared window
        env = env.at[r:r + T].add(wsq[r])
    env_inv = 1.0 / jnp.maximum(env, 1e-11)
    return {"C": Cb, "S": Sb, "win": win.reshape(1, N_FFT), "env_inv": env_inv}


def pack_operands(p, c):
    """Host-side packing of weights/constants into the fused-kernel operand layout."""
    def stack(name):
        return jnp.stack([bp[name] for bp in p["blocks"]])

    # im2col embed weight, padded 56 -> 64 rows with zeros (matches padded xcol lanes).
    wemb = p["w_embed"].reshape(XCOL, DIM)
    wemb = jnp.pad(wemb, ((0, XCOL_PAD - XCOL), (0, 0)))

    dww, dwb = stack("dw_w"), stack("dw_b")
    lng, lnb = stack("ln_g"), stack("ln_b")
    w1, b1 = stack("w1"), stack("b1")
    w2, b2 = stack("w2"), stack("b2")
    gam = stack("gamma")

    # Fused head weight for the 512 main bins: columns = [logmag(512) | phase(512)],
    # stored bf16 (MXU-native, halves its DMA); bias stays f32.
    whead = jnp.concatenate([p["w_mag"][:, :NF_MAIN], p["w_ph"][:, :NF_MAIN]],
                            axis=1).astype(jnp.bfloat16)
    bhead = jnp.concatenate([p["b_mag"][:, :NF_MAIN], p["b_ph"][:, :NF_MAIN]], axis=1)
    wnyq = jnp.stack([p["w_mag"][:, NF_MAIN], p["w_ph"][:, NF_MAIN]])     # (2, DIM)
    bnyq = jnp.stack([p["b_mag"][:, NF_MAIN], p["b_ph"][:, NF_MAIN]])     # (2, 1)

    # DFT basis with the hann window folded in; rows = [C_main*win ; -S_main*win].
    # bf16 halves the dominant HBM->VMEM transfer (f32 accumulation kept in-kernel).
    basis = (jnp.concatenate([c["C"][:NF_MAIN], -c["S"][:NF_MAIN]], axis=0)
             * c["win"]).astype(jnp.bfloat16)
    cnyq = c["C"][NF_MAIN:NF_MAIN + 1] * c["win"]              # Nyquist row * win (f32, tiny)

    # Envelope inverse padded 11 -> 16 rows (pad rows see zero OLA, so value is moot).
    envinv = jnp.concatenate(
        [c["env_inv"], jnp.ones((N_BLOCKS_PAD - N_BLOCKS, HOP), jnp.float32)], axis=0)

    return (wemb, p["b_embed"], p["ln0_g"], p["ln0_b"],
            dww, dwb, lng, lnb, w1, b1, w2, b2, gam,
            p["lnf_g"], p["lnf_b"], whead, bhead, wnyq, bnyq,
            basis, cnyq, envinv)


# ---------------- full forward ----------------
@jax.jit
def vocos_gen_forward(mels, operands):
    # mels: (B, N_MELS, T) — PyTorch NCT; transpose + pad + im2col (layout glue).
    x = jnp.transpose(mels, (0, 2, 1))
    xp = jnp.pad(x, ((0, 0), (PAD, PAD), (0, 0)))
    xcol = jnp.concatenate([xp[:, k:k + T, :] for k in range(KSIZE)],
                           axis=-1).reshape(BT, XCOL)
    xcol = jnp.pad(xcol, ((0, 0), (0, XCOL_PAD - XCOL)))       # 56 -> 64 lanes
    ola = run_vocos_fused((xcol,) + tuple(operands))           # (B*N_BLOCKS_PAD, HOP)
    ola = ola.reshape(B, N_BLOCKS_PAD, HOP)[:, :N_BLOCKS, :]
    # center=True trimming (n_fft//2 samples each side) + flatten hop blocks.
    audio = ola[:, TRIM_BLOCKS:N_BLOCKS - TRIM_BLOCKS, :].reshape(B, (T - 1) * HOP)
    # TODO(synk): exact semantics of ExportableISTFTModule's 5200 arg unknown; treated
    # as a max-length clamp (no-op at this size).
    audio = audio[:, :MAX_SAMPLES]
    return audio


if __name__ == "__main__":
    key = jax.random.PRNGKey(0)
    k_mels, k_params = jax.random.split(key)
    mels = jax.random.normal(k_mels, (B, N_MELS, T), jnp.float32)
    params = init_params(k_params)
    consts = istft_constants()
    operands = pack_operands(params, consts)

    audio = vocos_gen_forward(mels, operands)
    audio = jax.block_until_ready(audio)

    assert audio.shape == (B, (T - 1) * HOP), audio.shape
    assert bool(jnp.all(jnp.isfinite(audio)))
    print("KERNEL_OK")
</pallas_src>

<mosaic_0001>
module attributes {stable_mosaic.version = 11 : i64} {
  func.func @vocos_fused_kernel(%arg0: i32, %arg1: i32, %arg2: memref<8x64xf32, #tpu.memory_space<vmem>>, %arg3: memref<64x32xf32, #tpu.memory_space<vmem>>, %arg4: memref<1x32xf32, #tpu.memory_space<vmem>>, %arg5: memref<1x32xf32, #tpu.memory_space<vmem>>, %arg6: memref<1x32xf32, #tpu.memory_space<vmem>>, %arg7: memref<2x7x32xf32, #tpu.memory_space<vmem>>, %arg8: memref<2x1x32xf32, #tpu.memory_space<vmem>>, %arg9: memref<2x1x32xf32, #tpu.memory_space<vmem>>, %arg10: memref<2x1x32xf32, #tpu.memory_space<vmem>>, %arg11: memref<2x32x64xf32, #tpu.memory_space<vmem>>, %arg12: memref<2x1x64xf32, #tpu.memory_space<vmem>>, %arg13: memref<2x64x32xf32, #tpu.memory_space<vmem>>, %arg14: memref<2x1x32xf32, #tpu.memory_space<vmem>>, %arg15: memref<2x1x32xf32, #tpu.memory_space<vmem>>, %arg16: memref<1x32xf32, #tpu.memory_space<vmem>>, %arg17: memref<1x32xf32, #tpu.memory_space<vmem>>, %arg18: memref<32x1024xbf16, #tpu.memory_space<vmem>>, %arg19: memref<1x1024xf32, #tpu.memory_space<vmem>>, %arg20: memref<2x32xf32, #tpu.memory_space<vmem>>, %arg21: memref<2x1xf32, #tpu.memory_space<vmem>>, %arg22: memref<1024x256xbf16, #tpu.memory_space<vmem>>, %arg23: memref<1x256xf32, #tpu.memory_space<vmem>>, %arg24: memref<16x256xf32, #tpu.memory_space<vmem>>, %arg25: memref<16x256xf32, #tpu.memory_space<vmem>>, %arg26: memref<8x512xf32, #tpu.memory_space<vmem>>, %arg27: memref<8x512xf32, #tpu.memory_space<vmem>>, %arg28: memref<8x1xf32, #tpu.memory_space<vmem>>, %arg29: memref<16x256xf32, #tpu.memory_space<vmem>>) attributes {dimension_semantics = [#tpu.dimension_semantics<parallel>, #tpu.dimension_semantics<arbitrary>], iteration_bounds = array<i64: 2, 4>, scalar_prefetch = 0 : i64, scratch_operands = 4 : i64, tpu.core_type = #tpu.core_type<tc>, window_params = [{transform_indices = @transform_0, window_bounds = array<i64: 8, 64>}, {pipeline_mode = #tpu.pipeline_mode<synchronous>, transform_indices = @transform_1, window_bounds = array<i64: 64, 32>}, {pipeline_mode = #tpu.pipeline_mode<synchronous>, transform_indices = @transform_2, window_bounds = array<i64: 1, 32>}, {pipeline_mode = #tpu.pipeline_mode<synchronous>, transform_indices = @transform_3, window_bounds = array<i64: 1, 32>}, {pipeline_mode = #tpu.pipeline_mode<synchronous>, transform_indices = @transform_4, window_bounds = array<i64: 1, 32>}, {pipeline_mode = #tpu.pipeline_mode<synchronous>, transform_indices = @transform_5, window_bounds = array<i64: 2, 7, 32>}, {pipeline_mode = #tpu.pipeline_mode<synchronous>, transform_indices = @transform_6, window_bounds = array<i64: 2, 1, 32>}, {pipeline_mode = #tpu.pipeline_mode<synchronous>, transform_indices = @transform_7, window_bounds = array<i64: 2, 1, 32>}, {pipeline_mode = #tpu.pipeline_mode<synchronous>, transform_indices = @transform_8, window_bounds = array<i64: 2, 1, 32>}, {pipeline_mode = #tpu.pipeline_mode<synchronous>, transform_indices = @transform_9, window_bounds = array<i64: 2, 32, 64>}, {pipeline_mode = #tpu.pipeline_mode<synchronous>, transform_indices = @transform_10, window_bounds = array<i64: 2, 1, 64>}, {pipeline_mode = #tpu.pipeline_mode<synchronous>, transform_indices = @transform_11, window_bounds = array<i64: 2, 64, 32>}, {pipeline_mode = #tpu.pipeline_mode<synchronous>, transform_indices = @transform_12, window_bounds = array<i64: 2, 1, 32>}, {pipeline_mode = #tpu.pipeline_mode<synchronous>, transform_indices = @transform_13, window_bounds = array<i64: 2, 1, 32>}, {pipeline_mode = #tpu.pipeline_mode<synchronous>, transform_indices = @transform_14, window_bounds = array<i64: 1, 32>}, {pipeline_mode = #tpu.pipeline_mode<synchronous>, transform_indices = @transform_15, window_bounds = array<i64: 1, 32>}, {pipeline_mode = #tpu.pipeline_mode<synchronous>, transform_indices = @transform_16, window_bounds = array<i64: 32, 1024>}, {pipeline_mode = #tpu.pipeline_mode<synchronous>, transform_indices = @transform_17, window_bounds = array<i64: 1, 1024>}, {pipeline_mode = #tpu.pipeline_mode<synchronous>, transform_indices = @transform_18, window_bounds = array<i64: 2, 32>}, {pipeline_mode = #tpu.pipeline_mode<synchronous>, transform_indices = @transform_19, window_bounds = array<i64: 2, 1>}, {transform_indices = @transform_20, window_bounds = array<i64: 1024, 256>}, {transform_indices = @transform_21, window_bounds = array<i64: 1, 256>}, {pipeline_mode = #tpu.pipeline_mode<synchronous>, transform_indices = @transform_22, window_bounds = array<i64: 16, 256>}, {transform_indices = @transform_23, window_bounds = array<i64: 16, 256>}]} {
    %c0_i32 = arith.constant 0 : i32
    %0 = arith.cmpi eq, %arg1, %c0_i32 : i32
    %1 = arith.extui %0 : i1 to i32
    %c0_i32_0 = arith.constant 0 : i32
    %2 = arith.cmpi ne, %1, %c0_i32_0 : i32
    scf.if %2 {
      %c0_20 = arith.constant 0 : index
      %c0_21 = arith.constant 0 : index
      %35 = vector.load %arg2[%c0_20, %c0_21] : memref<8x64xf32, #tpu.memory_space<vmem>>, vector<8x64xf32>
      %c0_22 = arith.constant 0 : index
      %c0_23 = arith.constant 0 : index
      %36 = vector.load %arg3[%c0_22, %c0_23] : memref<64x32xf32, #tpu.memory_space<vmem>>, vector<64x32xf32>
      %cst_24 = arith.constant dense<0.000000e+00> : vector<8x32xf32>
      %37 = tpu.matmul %35, %36, %cst_24 {dimension_numbers = #tpu.dot_dimension_numbers<[1], [0], [0], [1], [0, 0, 1, 1], [], []>} : vector<8x64xf32>, vector<64x32xf32>, vector<8x32xf32> -> vector<8x32xf32>
      %c0_25 = arith.constant 0 : index
      %c0_26 = arith.constant 0 : index
      %38 = vector.load %arg4[%c0_25, %c0_26] : memref<1x32xf32, #tpu.memory_space<vmem>>, vector<1x32xf32>
      %39 = vector.broadcast %38 : vector<1x32xf32> to vector<8x32xf32>
      %40 = arith.addf %37, %39 : vector<8x32xf32>
      %c0_27 = arith.constant 0 : index
      %c0_28 = arith.constant 0 : index
      %41 = vector.load %arg5[%c0_27, %c0_28] : memref<1x32xf32, #tpu.memory_space<vmem>>, vector<1x32xf32>
      %c0_29 = arith.constant 0 : index
      %c0_30 = arith.constant 0 : index
      %42 = vector.load %arg6[%c0_29, %c0_30] : memref<1x32xf32, #tpu.memory_space<vmem>>, vector<1x32xf32>
      %cst_31 = arith.constant dense<0.000000e+00> : vector<8xf32>
      %43 = vector.multi_reduction <add>, %40, %cst_31 [1] : vector<8x32xf32> to vector<8xf32>
      %44 = vector.shape_cast %43 : vector<8xf32> to vector<8x1xf32>
      %cst_32 = arith.constant 3.200000e+01 : f32
      %45 = vector.broadcast %cst_32 : f32 to vector<8x1xf32>
      %46 = arith.divf %44, %45 : vector<8x1xf32>
      %47 = vector.broadcast %46 : vector<8x1xf32> to vector<8x32xf32>
      %48 = arith.subf %40, %47 : vector<8x32xf32>
      %49 = arith.mulf %48, %48 : vector<8x32xf32>
      %cst_33 = arith.constant dense<0.000000e+00> : vector<8xf32>
      %50 = vector.multi_reduction <add>, %49, %cst_33 [1] : vector<8x32xf32> to vector<8xf32>
      %51 = vector.shape_cast %50 : vector<8xf32> to vector<8x1xf32>
      %cst_34 = arith.constant 3.200000e+01 : f32
      %52 = vector.broadcast %cst_34 : f32 to vector<8x1xf32>
      %53 = arith.divf %51, %52 : vector<8x1xf32>
      %54 = vector.broadcast %46 : vector<8x1xf32> to vector<8x32xf32>
      %55 = arith.subf %40, %54 : vector<8x32xf32>
      %cst_35 = arith.constant 9.99999997E-7 : f32
      %56 = vector.broadcast %cst_35 : f32 to vector<8x1xf32>
      %57 = arith.addf %53, %56 : vector<8x1xf32>
      %58 = math.rsqrt %57 : vector<8x1xf32>
      %59 = vector.broadcast %58 : vector<8x1xf32> to vector<8x32xf32>
      %60 = arith.mulf %55, %59 : vector<8x32xf32>
      %61 = vector.broadcast %41 : vector<1x32xf32> to vector<8x32xf32>
      %62 = arith.mulf %60, %61 : vector<8x32xf32>
      %63 = vector.broadcast %42 : vector<1x32xf32> to vector<8x32xf32>
      %64 = arith.addf %62, %63 : vector<8x32xf32>
      %65 = tpu.iota {dimensions = array<i32: 0>} : vector<8x32xi32>
      %c0_36 = arith.constant 0 : index
      %c0_37 = arith.constant 0 : index
      %c0_38 = arith.constant 0 : index
      %66 = vector.load %arg7[%c0_36, %c0_37, %c0_38] : memref<2x7x32xf32, #tpu.memory_space<vmem>>, vector<1x7x32xf32>
      %67 = vector.shape_cast %66 : vector<1x7x32xf32> to vector<7x32xf32>
      %68 = vector.extract_strided_slice %67 {offsets = [3, 0], sizes = [1, 32], strides = [1, 1]} : vector<7x32xf32> to vector<1x32xf32>
      %69 = vector.broadcast %68 : vector<1x32xf32> to vector<8x32xf32>
      %70 = arith.mulf %64, %69 : vector<8x32xf32>
      %c3_i32_39 = arith.constant 3 : i32
      %71 = tpu.dynamic_rotate %64 by %c3_i32_39 dim 0 : vector<8x32xf32>, i32 -> vector<8x32xf32>
      %c3_i32_40 = arith.constant 3 : i32
      %72 = vector.broadcast %c3_i32_40 : i32 to vector<8x32xi32>
      %73 = arith.cmpi sge, %65, %72 : vector<8x32xi32>
      %cst_41 = arith.constant 0.000000e+00 : f32
      %74 = vector.broadcast %cst_41 : f32 to vector<8x32xf32>
      %75 = arith.select %73, %71, %74 : vector<8x32xi1>, vector<8x32xf32>
      %76 = vector.extract_strided_slice %67 {offsets = [0, 0], sizes = [1, 32], strides = [1, 1]} : vector<7x32xf32> to vector<1x32xf32>
      %77 = vector.broadcast %76 : vector<1x32xf32> to vector<8x32xf32>
      %78 = arith.mulf %75, %77 : vector<8x32xf32>
      %79 = arith.addf %70, %78 : vector<8x32xf32>
      %c2_i32_42 = arith.constant 2 : i32
      %80 = tpu.dynamic_rotate %64 by %c2_i32_42 dim 0 : vector<8x32xf32>, i32 -> vector<8x32xf32>
      %c2_i32_43 = arith.constant 2 : i32
      %81 = vector.broadcast %c2_i32_43 : i32 to vector<8x32xi32>
      %82 = arith.cmpi sge, %65, %81 : vector<8x32xi32>
      %cst_44 = arith.constant 0.000000e+00 : f32
      %83 = vector.broadcast %cst_44 : f32 to vector<8x32xf32>
      %84 = arith.select %82, %80, %83 : vector<8x32xi1>, vector<8x32xf32>
      %85 = vector.extract_strided_slice %67 {offsets = [1, 0], sizes = [1, 32], strides = [1, 1]} : vector<7x32xf32> to vector<1x32xf32>
      %86 = vector.broadcast %85 : vector<1x32xf32> to vector<8x32xf32>
      %87 = arith.mulf %84, %86 : vector<8x32xf32>
      %88 = arith.addf %79, %87 : vector<8x32xf32>
      %c1_i32_45 = arith.constant 1 : i32
      %89 = tpu.dynamic_rotate %64 by %c1_i32_45 dim 0 : vector<8x32xf32>, i32 -> vector<8x32xf32>
      %c1_i32_46 = arith.constant 1 : i32
      %90 = vector.broadcast %c1_i32_46 : i32 to vector<8x32xi32>
      %91 = arith.cmpi sge, %65, %90 : vector<8x32xi32>
      %cst_47 = arith.constant 0.000000e+00 : f32
      %92 = vector.broadcast %cst_47 : f32 to vector<8x32xf32>
      %93 = arith.select %91, %89, %92 : vector<8x32xi1>, vector<8x32xf32>
      %94 = vector.extract_strided_slice %67 {offsets = [2, 0], sizes = [1, 32], strides = [1, 1]} : vector<7x32xf32> to vector<1x32xf32>
      %95 = vector.broadcast %94 : vector<1x32xf32> to vector<8x32xf32>
      %96 = arith.mulf %93, %95 : vector<8x32xf32>
      %97 = arith.addf %88, %96 : vector<8x32xf32>
      %c7_i32 = arith.constant 7 : i32
      %98 = tpu.dynamic_rotate %64 by %c7_i32 dim 0 : vector<8x32xf32>, i32 -> vector<8x32xf32>
      %c7_i32_48 = arith.constant 7 : i32
      %99 = vector.broadcast %c7_i32_48 : i32 to vector<8x32xi32>
      %100 = arith.cmpi slt, %65, %99 : vector<8x32xi32>
      %cst_49 = arith.constant 0.000000e+00 : f32
      %101 = vector.broadcast %cst_49 : f32 to vector<8x32xf32>
      %102 = arith.select %100, %98, %101 : vector<8x32xi1>, vector<8x32xf32>
      %103 = vector.extract_strided_slice %67 {offsets = [4, 0], sizes = [1, 32], strides = [1, 1]} : vector<7x32xf32> to vector<1x32xf32>
      %104 = vector.broadcast %103 : vector<1x32xf32> to vector<8x32xf32>
      %105 = arith.mulf %102, %104 : vector<8x32xf32>
      %106 = arith.addf %97, %105 : vector<8x32xf32>
      %c6_i32 = arith.constant 6 : i32
      %107 = tpu.dynamic_rotate %64 by %c6_i32 dim 0 : vector<8x32xf32>, i32 -> vector<8x32xf32>
      %c6_i32_50 = arith.constant 6 : i32
      %108 = vector.broadcast %c6_i32_50 : i32 to vector<8x32xi32>
      %109 = arith.cmpi slt, %65, %108 : vector<8x32xi32>
      %cst_51 = arith.constant 0.000000e+00 : f32
      %110 = vector.broadcast %cst_51 : f32 to vector<8x32xf32>
      %111 = arith.select %109, %107, %110 : vector<8x32xi1>, vector<8x32xf32>
      %112 = vector.extract_strided_slice %67 {offsets = [5, 0], sizes = [1, 32], strides = [1, 1]} : vector<7x32xf32> to vector<1x32xf32>
      %113 = vector.broadcast %112 : vector<1x32xf32> to vector<8x32xf32>
      %114 = arith.mulf %111, %113 : vector<8x32xf32>
      %115 = arith.addf %106, %114 : vector<8x32xf32>
      %c5_i32 = arith.constant 5 : i32
      %116 = tpu.dynamic_rotate %64 by %c5_i32 dim 0 : vector<8x32xf32>, i32 -> vector<8x32xf32>
      %c5_i32_52 = arith.constant 5 : i32
      %117 = vector.broadcast %c5_i32_52 : i32 to vector<8x32xi32>
      %118 = arith.cmpi slt, %65, %117 : vector<8x32xi32>
      %cst_53 = arith.constant 0.000000e+00 : f32
      %119 = vector.broadcast %cst_53 : f32 to vector<8x32xf32>
      %120 = arith.select %118, %116, %119 : vector<8x32xi1>, vector<8x32xf32>
      %121 = vector.extract_strided_slice %67 {offsets = [6, 0], sizes = [1, 32], strides = [1, 1]} : vector<7x32xf32> to vector<1x32xf32>
      %122 = vector.broadcast %121 : vector<1x32xf32> to vector<8x32xf32>
      %123 = arith.mulf %120, %122 : vector<8x32xf32>
      %124 = arith.addf %115, %123 : vector<8x32xf32>
      %c0_54 = arith.constant 0 : index
      %c0_55 = arith.constant 0 : index
      %c0_56 = arith.constant 0 : index
      %125 = vector.load %arg8[%c0_54, %c0_55, %c0_56] : memref<2x1x32xf32, #tpu.memory_space<vmem>>, vector<1x1x32xf32>
      %126 = vector.shape_cast %125 : vector<1x1x32xf32> to vector<1x32xf32>
      %127 = vector.broadcast %126 : vector<1x32xf32> to vector<8x32xf32>
      %128 = arith.addf %124, %127 : vector<8x32xf32>
      %c0_57 = arith.constant 0 : index
      %c0_58 = arith.constant 0 : index
      %c0_59 = arith.constant 0 : index
      %129 = vector.load %arg9[%c0_57, %c0_58, %c0_59] : memref<2x1x32xf32, #tpu.memory_space<vmem>>, vector<1x1x32xf32>
      %130 = vector.shape_cast %129 : vector<1x1x32xf32> to vector<1x32xf32>
      %c0_60 = arith.constant 0 : index
      %c0_61 = arith.constant 0 : index
      %c0_62 = arith.constant 0 : index
      %131 = vector.load %arg10[%c0_60, %c0_61, %c0_62] : memref<2x1x32xf32, #tpu.memory_space<vmem>>, vector<1x1x32xf32>
      %132 = vector.shape_cast %131 : vector<1x1x32xf32> to vector<1x32xf32>
      %cst_63 = arith.constant dense<0.000000e+00> : vector<8xf32>
      %133 = vector.multi_reduction <add>, %128, %cst_63 [1] : vector<8x32xf32> to vector<8xf32>
      %134 = vector.shape_cast %133 : vector<8xf32> to vector<8x1xf32>
      %cst_64 = arith.constant 3.200000e+01 : f32
      %135 = vector.broadcast %cst_64 : f32 to vector<8x1xf32>
      %136 = arith.divf %134, %135 : vector<8x1xf32>
      %137 = vector.broadcast %136 : vector<8x1xf32> to vector<8x32xf32>
      %138 = arith.subf %128, %137 : vector<8x32xf32>
      %139 = arith.mulf %138, %138 : vector<8x32xf32>
      %cst_65 = arith.constant dense<0.000000e+00> : vector<8xf32>
      %140 = vector.multi_reduction <add>, %139, %cst_65 [1] : vector<8x32xf32> to vector<8xf32>
      %141 = vector.shape_cast %140 : vector<8xf32> to vector<8x1xf32>
      %cst_66 = arith.constant 3.200000e+01 : f32
      %142 = vector.broadcast %cst_66 : f32 to vector<8x1xf32>
      %143 = arith.divf %141, %142 : vector<8x1xf32>
      %144 = vector.broadcast %136 : vector<8x1xf32> to vector<8x32xf32>
      %145 = arith.subf %128, %144 : vector<8x32xf32>
      %cst_67 = arith.constant 9.99999997E-7 : f32
      %146 = vector.broadcast %cst_67 : f32 to vector<8x1xf32>
      %147 = arith.addf %143, %146 : vector<8x1xf32>
      %148 = math.rsqrt %147 : vector<8x1xf32>
      %149 = vector.broadcast %148 : vector<8x1xf32> to vector<8x32xf32>
      %150 = arith.mulf %145, %149 : vector<8x32xf32>
      %151 = vector.broadcast %130 : vector<1x32xf32> to vector<8x32xf32>
      %152 = arith.mulf %150, %151 : vector<8x32xf32>
      %153 = vector.broadcast %132 : vector<1x32xf32> to vector<8x32xf32>
      %154 = arith.addf %152, %153 : vector<8x32xf32>
      %c0_68 = arith.constant 0 : index
      %c0_69 = arith.constant 0 : index
      %c0_70 = arith.constant 0 : index
      %155 = vector.load %arg11[%c0_68, %c0_69, %c0_70] : memref<2x32x64xf32, #tpu.memory_space<vmem>>, vector<1x32x64xf32>
      %156 = vector.shape_cast %155 : vector<1x32x64xf32> to vector<32x64xf32>
      %cst_71 = arith.constant dense<0.000000e+00> : vector<8x64xf32>
      %157 = tpu.matmul %154, %156, %cst_71 {dimension_numbers = #tpu.dot_dimension_numbers<[1], [0], [0], [1], [0, 0, 1, 1], [], []>} : vector<8x32xf32>, vector<32x64xf32>, vector<8x64xf32> -> vector<8x64xf32>
      %c0_72 = arith.constant 0 : index
      %c0_73 = arith.constant 0 : index
      %c0_74 = arith.constant 0 : index
      %158 = vector.load %arg12[%c0_72, %c0_73, %c0_74] : memref<2x1x64xf32, #tpu.memory_space<vmem>>, vector<1x1x64xf32>
      %159 = vector.shape_cast %158 : vector<1x1x64xf32> to vector<1x64xf32>
      %160 = vector.broadcast %159 : vector<1x64xf32> to vector<8x64xf32>
      %161 = arith.addf %157, %160 : vector<8x64xf32>
      %cst_75 = arith.constant 5.000000e-01 : f32
      %162 = vector.broadcast %cst_75 : f32 to vector<8x64xf32>
      %163 = arith.mulf %162, %161 : vector<8x64xf32>
      %cst_76 = arith.constant 4.471500e-02 : f32
      %164 = vector.broadcast %cst_76 : f32 to vector<8x64xf32>
      %165 = arith.mulf %164, %161 : vector<8x64xf32>
      %166 = arith.mulf %165, %161 : vector<8x64xf32>
      %167 = arith.mulf %166, %161 : vector<8x64xf32>
      %168 = arith.addf %161, %167 : vector<8x64xf32>
      %cst_77 = arith.constant 0.797884583 : f32
      %169 = vector.broadcast %cst_77 : f32 to vector<8x64xf32>
      %170 = arith.mulf %169, %168 : vector<8x64xf32>
      %171 = math.tanh %170 : vector<8x64xf32>
      %cst_78 = arith.constant 1.000000e+00 : f32
      %172 = vector.broadcast %cst_78 : f32 to vector<8x64xf32>
      %173 = arith.addf %172, %171 : vector<8x64xf32>
      %174 = arith.mulf %163, %173 : vector<8x64xf32>
      %c0_79 = arith.constant 0 : index
      %c0_80 = arith.constant 0 : index
      %c0_81 = arith.constant 0 : index
      %175 = vector.load %arg13[%c0_79, %c0_80, %c0_81] : memref<2x64x32xf32, #tpu.memory_space<vmem>>, vector<1x64x32xf32>
      %176 = vector.shape_cast %175 : vector<1x64x32xf32> to vector<64x32xf32>
      %cst_82 = arith.constant dense<0.000000e+00> : vector<8x32xf32>
      %177 = tpu.matmul %174, %176, %cst_82 {dimension_numbers = #tpu.dot_dimension_numbers<[1], [0], [0], [1], [0, 0, 1, 1], [], []>} : vector<8x64xf32>, vector<64x32xf32>, vector<8x32xf32> -> vector<8x32xf32>
      %c0_83 = arith.constant 0 : index
      %c0_84 = arith.constant 0 : index
      %c0_85 = arith.constant 0 : index
      %178 = vector.load %arg14[%c0_83, %c0_84, %c0_85] : memref<2x1x32xf32, #tpu.memory_space<vmem>>, vector<1x1x32xf32>
      %179 = vector.shape_cast %178 : vector<1x1x32xf32> to vector<1x32xf32>
      %180 = vector.broadcast %179 : vector<1x32xf32> to vector<8x32xf32>
      %181 = arith.addf %177, %180 : vector<8x32xf32>
      %c0_86 = arith.constant 0 : index
      %c0_87 = arith.constant 0 : index
      %c0_88 = arith.constant 0 : index
      %182 = vector.load %arg15[%c0_86, %c0_87, %c0_88] : memref<2x1x32xf32, #tpu.memory_space<vmem>>, vector<1x1x32xf32>
      %183 = vector.shape_cast %182 : vector<1x1x32xf32> to vector<1x32xf32>
      %184 = vector.broadcast %183 : vector<1x32xf32> to vector<8x32xf32>
      %185 = arith.mulf %184, %181 : vector<8x32xf32>
      %186 = arith.addf %64, %185 : vector<8x32xf32>
      %c1 = arith.constant 1 : index
      %c0_89 = arith.constant 0 : index
      %c0_90 = arith.constant 0 : index
      %187 = vector.load %arg7[%c1, %c0_89, %c0_90] : memref<2x7x32xf32, #tpu.memory_space<vmem>>, vector<1x7x32xf32>
      %188 = vector.shape_cast %187 : vector<1x7x32xf32> to vector<7x32xf32>
      %189 = vector.extract_strided_slice %188 {offsets = [3, 0], sizes = [1, 32], strides = [1, 1]} : vector<7x32xf32> to vector<1x32xf32>
      %190 = vector.broadcast %189 : vector<1x32xf32> to vector<8x32xf32>
      %191 = arith.mulf %186, %190 : vector<8x32xf32>
      %c3_i32_91 = arith.constant 3 : i32
      %192 = tpu.dynamic_rotate %186 by %c3_i32_91 dim 0 : vector<8x32xf32>, i32 -> vector<8x32xf32>
      %c3_i32_92 = arith.constant 3 : i32
      %193 = vector.broadcast %c3_i32_92 : i32 to vector<8x32xi32>
      %194 = arith.cmpi sge, %65, %193 : vector<8x32xi32>
      %cst_93 = arith.constant 0.000000e+00 : f32
      %195 = vector.broadcast %cst_93 : f32 to vector<8x32xf32>
      %196 = arith.select %194, %192, %195 : vector<8x32xi1>, vector<8x32xf32>
      %197 = vector.extract_strided_slice %188 {offsets = [0, 0], sizes = [1, 32], strides = [1, 1]} : vector<7x32xf32> to vector<1x32xf32>
      %198 = vector.broadcast %197 : vector<1x32xf32> to vector<8x32xf32>
      %199 = arith.mulf %196, %198 : vector<8x32xf32>
      %200 = arith.addf %191, %199 : vector<8x32xf32>
      %c2_i32_94 = arith.constant 2 : i32
      %201 = tpu.dynamic_rotate %186 by %c2_i32_94 dim 0 : vector<8x32xf32>, i32 -> vector<8x32xf32>
      %c2_i32_95 = arith.constant 2 : i32
      %202 = vector.broadcast %c2_i32_95 : i32 to vector<8x32xi32>
      %203 = arith.cmpi sge, %65, %202 : vector<8x32xi32>
      %cst_96 = arith.constant 0.000000e+00 : f32
      %204 = vector.broadcast %cst_96 : f32 to vector<8x32xf32>
      %205 = arith.select %203, %201, %204 : vector<8x32xi1>, vector<8x32xf32>
      %206 = vector.extract_strided_slice %188 {offsets = [1, 0], sizes = [1, 32], strides = [1, 1]} : vector<7x32xf32> to vector<1x32xf32>
      %207 = vector.broadcast %206 : vector<1x32xf32> to vector<8x32xf32>
      %208 = arith.mulf %205, %207 : vector<8x32xf32>
      %209 = arith.addf %200, %208 : vector<8x32xf32>
      %c1_i32_97 = arith.constant 1 : i32
      %210 = tpu.dynamic_rotate %186 by %c1_i32_97 dim 0 : vector<8x32xf32>, i32 -> vector<8x32xf32>
      %c1_i32_98 = arith.constant 1 : i32
      %211 = vector.broadcast %c1_i32_98 : i32 to vector<8x32xi32>
      %212 = arith.cmpi sge, %65, %211 : vector<8x32xi32>
      %cst_99 = arith.constant 0.000000e+00 : f32
      %213 = vector.broadcast %cst_99 : f32 to vector<8x32xf32>
      %214 = arith.select %212, %210, %213 : vector<8x32xi1>, vector<8x32xf32>
      %215 = vector.extract_strided_slice %188 {offsets = [2, 0], sizes = [1, 32], strides = [1, 1]} : vector<7x32xf32> to vector<1x32xf32>
      %216 = vector.broadcast %215 : vector<1x32xf32> to vector<8x32xf32>
      %217 = arith.mulf %214, %216 : vector<8x32xf32>
      %218 = arith.addf %209, %217 : vector<8x32xf32>
      %c7_i32_100 = arith.constant 7 : i32
      %219 = tpu.dynamic_rotate %186 by %c7_i32_100 dim 0 : vector<8x32xf32>, i32 -> vector<8x32xf32>
      %c7_i32_101 = arith.constant 7 : i32
      %220 = vector.broadcast %c7_i32_101 : i32 to vector<8x32xi32>
      %221 = arith.cmpi slt, %65, %220 : vector<8x32xi32>
      %cst_102 = arith.constant 0.000000e+00 : f32
      %222 = vector.broadcast %cst_102 : f32 to vector<8x32xf32>
      %223 = arith.select %221, %219, %222 : vector<8x32xi1>, vector<8x32xf32>
      %224 = vector.extract_strided_slice %188 {offsets = [4, 0], sizes = [1, 32], strides = [1, 1]} : vector<7x32xf32> to vector<1x32xf32>
      %225 = vector.broadcast %224 : vector<1x32xf32> to vector<8x32xf32>
      %226 = arith.mulf %223, %225 : vector<8x32xf32>
      %227 = arith.addf %218, %226 : vector<8x32xf32>
      %c6_i32_103 = arith.constant 6 : i32
      %228 = tpu.dynamic_rotate %186 by %c6_i32_103 dim 0 : vector<8x32xf32>, i32 -> vector<8x32xf32>
      %c6_i32_104 = arith.constant 6 : i32
      %229 = vector.broadcast %c6_i32_104 : i32 to vector<8x32xi32>
      %230 = arith.cmpi slt, %65, %229 : vector<8x32xi32>
      %cst_105 = arith.constant 0.000000e+00 : f32
      %231 = vector.broadcast %cst_105 : f32 to vector<8x32xf32>
      %232 = arith.select %230, %228, %231 : vector<8x32xi1>, vector<8x32xf32>
      %233 = vector.extract_strided_slice %188 {offsets = [5, 0], sizes = [1, 32], strides = [1, 1]} : vector<7x32xf32> to vector<1x32xf32>
      %234 = vector.broadcast %233 : vector<1x32xf32> to vector<8x32xf32>
      %235 = arith.mulf %232, %234 : vector<8x32xf32>
      %236 = arith.addf %227, %235 : vector<8x32xf32>
      %c5_i32_106 = arith.constant 5 : i32
      %237 = tpu.dynamic_rotate %186 by %c5_i32_106 dim 0 : vector<8x32xf32>, i32 -> vector<8x32xf32>
      %c5_i32_107 = arith.constant 5 : i32
      %238 = vector.broadcast %c5_i32_107 : i32 to vector<8x32xi32>
      %239 = arith.cmpi slt, %65, %238 : vector<8x32xi32>
      %cst_108 = arith.constant 0.000000e+00 : f32
      %240 = vector.broadcast %cst_108 : f32 to vector<8x32xf32>
      %241 = arith.select %239, %237, %240 : vector<8x32xi1>, vector<8x32xf32>
      %242 = vector.extract_strided_slice %188 {offsets = [6, 0], sizes = [1, 32], strides = [1, 1]} : vector<7x32xf32> to vector<1x32xf32>
      %243 = vector.broadcast %242 : vector<1x32xf32> to vector<8x32xf32>
      %244 = arith.mulf %241, %243 : vector<8x32xf32>
      %245 = arith.addf %236, %244 : vector<8x32xf32>
      %c1_109 = arith.constant 1 : index
      %c0_110 = arith.constant 0 : index
      %c0_111 = arith.constant 0 : index
      %246 = vector.load %arg8[%c1_109, %c0_110, %c0_111] : memref<2x1x32xf32, #tpu.memory_space<vmem>>, vector<1x1x32xf32>
      %247 = vector.shape_cast %246 : vector<1x1x32xf32> to vector<1x32xf32>
      %248 = vector.broadcast %247 : vector<1x32xf32> to vector<8x32xf32>
      %249 = arith.addf %245, %248 : vector<8x32xf32>
      %c1_112 = arith.constant 1 : index
      %c0_113 = arith.constant 0 : index
      %c0_114 = arith.constant 0 : index
      %250 = vector.load %arg9[%c1_112, %c0_113, %c0_114] : memref<2x1x32xf32, #tpu.memory_space<vmem>>, vector<1x1x32xf32>
      %251 = vector.shape_cast %250 : vector<1x1x32xf32> to vector<1x32xf32>
      %c1_115 = arith.constant 1 : index
      %c0_116 = arith.constant 0 : index
      %c0_117 = arith.constant 0 : index
      %252 = vector.load %arg10[%c1_115, %c0_116, %c0_117] : memref<2x1x32xf32, #tpu.memory_space<vmem>>, vector<1x1x32xf32>
      %253 = vector.shape_cast %252 : vector<1x1x32xf32> to vector<1x32xf32>
      %cst_118 = arith.constant dense<0.000000e+00> : vector<8xf32>
      %254 = vector.multi_reduction <add>, %249, %cst_118 [1] : vector<8x32xf32> to vector<8xf32>
      %255 = vector.shape_cast %254 : vector<8xf32> to vector<8x1xf32>
      %cst_119 = arith.constant 3.200000e+01 : f32
      %256 = vector.broadcast %cst_119 : f32 to vector<8x1xf32>
      %257 = arith.divf %255, %256 : vector<8x1xf32>
      %258 = vector.broadcast %257 : vector<8x1xf32> to vector<8x32xf32>
      %259 = arith.subf %249, %258 : vector<8x32xf32>
      %260 = arith.mulf %259, %259 : vector<8x32xf32>
      %cst_120 = arith.constant dense<0.000000e+00> : vector<8xf32>
      %261 = vector.multi_reduction <add>, %260, %cst_120 [1] : vector<8x32xf32> to vector<8xf32>
      %262 = vector.shape_cast %261 : vector<8xf32> to vector<8x1xf32>
      %cst_121 = arith.constant 3.200000e+01 : f32
      %263 = vector.broadcast %cst_121 : f32 to vector<8x1xf32>
      %264 = arith.divf %262, %263 : vector<8x1xf32>
      %265 = vector.broadcast %257 : vector<8x1xf32> to vector<8x32xf32>
      %266 = arith.subf %249, %265 : vector<8x32xf32>
      %cst_122 = arith.constant 9.99999997E-7 : f32
      %267 = vector.broadcast %cst_122 : f32 to vector<8x1xf32>
      %268 = arith.addf %264, %267 : vector<8x1xf32>
      %269 = math.rsqrt %268 : vector<8x1xf32>
      %270 = vector.broadcast %269 : vector<8x1xf32> to vector<8x32xf32>
      %271 = arith.mulf %266, %270 : vector<8x32xf32>
      %272 = vector.broadcast %251 : vector<1x32xf32> to vector<8x32xf32>
      %273 = arith.mulf %271, %272 : vector<8x32xf32>
      %274 = vector.broadcast %253 : vector<1x32xf32> to vector<8x32xf32>
      %275 = arith.addf %273, %274 : vector<8x32xf32>
      %c1_123 = arith.constant 1 : index
      %c0_124 = arith.constant 0 : index
      %c0_125 = arith.constant 0 : index
      %276 = vector.load %arg11[%c1_123, %c0_124, %c0_125] : memref<2x32x64xf32, #tpu.memory_space<vmem>>, vector<1x32x64xf32>
      %277 = vector.shape_cast %276 : vector<1x32x64xf32> to vector<32x64xf32>
      %cst_126 = arith.constant dense<0.000000e+00> : vector<8x64xf32>
      %278 = tpu.matmul %275, %277, %cst_126 {dimension_numbers = #tpu.dot_dimension_numbers<[1], [0], [0], [1], [0, 0, 1, 1], [], []>} : vector<8x32xf32>, vector<32x64xf32>, vector<8x64xf32> -> vector<8x64xf32>
      %c1_127 = arith.constant 1 : index
      %c0_128 = arith.constant 0 : index
      %c0_129 = arith.constant 0 : index
      %279 = vector.load %arg12[%c1_127, %c0_128, %c0_129] : memref<2x1x64xf32, #tpu.memory_space<vmem>>, vector<1x1x64xf32>
      %280 = vector.shape_cast %279 : vector<1x1x64xf32> to vector<1x64xf32>
      %281 = vector.broadcast %280 : vector<1x64xf32> to vector<8x64xf32>
      %282 = arith.addf %278, %281 : vector<8x64xf32>
      %cst_130 = arith.constant 5.000000e-01 : f32
      %283 = vector.broadcast %cst_130 : f32 to vector<8x64xf32>
      %284 = arith.mulf %283, %282 : vector<8x64xf32>
      %cst_131 = arith.constant 4.471500e-02 : f32
      %285 = vector.broadcast %cst_131 : f32 to vector<8x64xf32>
      %286 = arith.mulf %285, %282 : vector<8x64xf32>
      %287 = arith.mulf %286, %282 : vector<8x64xf32>
      %288 = arith.mulf %287, %282 : vector<8x64xf32>
      %289 = arith.addf %282, %288 : vector<8x64xf32>
      %cst_132 = arith.constant 0.797884583 : f32
      %290 = vector.broadcast %cst_132 : f32 to vector<8x64xf32>
      %291 = arith.mulf %290, %289 : vector<8x64xf32>
      %292 = math.tanh %291 : vector<8x64xf32>
      %cst_133 = arith.constant 1.000000e+00 : f32
      %293 = vector.broadcast %cst_133 : f32 to vector<8x64xf32>
      %294 = arith.addf %293, %292 : vector<8x64xf32>
      %295 = arith.mulf %284, %294 : vector<8x64xf32>
      %c1_134 = arith.constant 1 : index
      %c0_135 = arith.constant 0 : index
      %c0_136 = arith.constant 0 : index
      %296 = vector.load %arg13[%c1_134, %c0_135, %c0_136] : memref<2x64x32xf32, #tpu.memory_space<vmem>>, vector<1x64x32xf32>
      %297 = vector.shape_cast %296 : vector<1x64x32xf32> to vector<64x32xf32>
      %cst_137 = arith.constant dense<0.000000e+00> : vector<8x32xf32>
      %298 = tpu.matmul %295, %297, %cst_137 {dimension_numbers = #tpu.dot_dimension_numbers<[1], [0], [0], [1], [0, 0, 1, 1], [], []>} : vector<8x64xf32>, vector<64x32xf32>, vector<8x32xf32> -> vector<8x32xf32>
      %c1_138 = arith.constant 1 : index
      %c0_139 = arith.constant 0 : index
      %c0_140 = arith.constant 0 : index
      %299 = vector.load %arg14[%c1_138, %c0_139, %c0_140] : memref<2x1x32xf32, #tpu.memory_space<vmem>>, vector<1x1x32xf32>
      %300 = vector.shape_cast %299 : vector<1x1x32xf32> to vector<1x32xf32>
      %301 = vector.broadcast %300 : vector<1x32xf32> to vector<8x32xf32>
      %302 = arith.addf %298, %301 : vector<8x32xf32>
      %c1_141 = arith.constant 1 : index
      %c0_142 = arith.constant 0 : index
      %c0_143 = arith.constant 0 : index
      %303 = vector.load %arg15[%c1_141, %c0_142, %c0_143] : memref<2x1x32xf32, #tpu.memory_space<vmem>>, vector<1x1x32xf32>
      %304 = vector.shape_cast %303 : vector<1x1x32xf32> to vector<1x32xf32>
      %305 = vector.broadcast %304 : vector<1x32xf32> to vector<8x32xf32>
      %306 = arith.mulf %305, %302 : vector<8x32xf32>
      %307 = arith.addf %186, %306 : vector<8x32xf32>
      %c0_144 = arith.constant 0 : index
      %c0_145 = arith.constant 0 : index
      %308 = vector.load %arg16[%c0_144, %c0_145] : memref<1x32xf32, #tpu.memory_space<vmem>>, vector<1x32xf32>
      %c0_146 = arith.constant 0 : index
      %c0_147 = arith.constant 0 : index
      %309 = vector.load %arg17[%c0_146, %c0_147] : memref<1x32xf32, #tpu.memory_space<vmem>>, vector<1x32xf32>
      %cst_148 = arith.constant dense<0.000000e+00> : vector<8xf32>
      %310 = vector.multi_reduction <add>, %307, %cst_148 [1] : vector<8x32xf32> to vector<8xf32>
      %311 = vector.shape_cast %310 : vector<8xf32> to vector<8x1xf32>
      %cst_149 = arith.constant 3.200000e+01 : f32
      %312 = vector.broadcast %cst_149 : f32 to vector<8x1xf32>
      %313 = arith.divf %311, %312 : vector<8x1xf32>
      %314 = vector.broadcast %313 : vector<8x1xf32> to vector<8x32xf32>
      %315 = arith.subf %307, %314 : vector<8x32xf32>
      %316 = arith.mulf %315, %315 : vector<8x32xf32>
      %cst_150 = arith.constant dense<0.000000e+00> : vector<8xf32>
      %317 = vector.multi_reduction <add>, %316, %cst_150 [1] : vector<8x32xf32> to vector<8xf32>
      %318 = vector.shape_cast %317 : vector<8xf32> to vector<8x1xf32>
      %cst_151 = arith.constant 3.200000e+01 : f32
      %319 = vector.broadcast %cst_151 : f32 to vector<8x1xf32>
      %320 = arith.divf %318, %319 : vector<8x1xf32>
      %321 = vector.broadcast %313 : vector<8x1xf32> to vector<8x32xf32>
      %322 = arith.subf %307, %321 : vector<8x32xf32>
      %cst_152 = arith.constant 9.99999997E-7 : f32
      %323 = vector.broadcast %cst_152 : f32 to vector<8x1xf32>
      %324 = arith.addf %320, %323 : vector<8x1xf32>
      %325 = math.rsqrt %324 : vector<8x1xf32>
      %326 = vector.broadcast %325 : vector<8x1xf32> to vector<8x32xf32>
      %327 = arith.mulf %322, %326 : vector<8x32xf32>
      %328 = vector.broadcast %308 : vector<1x32xf32> to vector<8x32xf32>
      %329 = arith.mulf %327, %328 : vector<8x32xf32>
      %330 = vector.broadcast %309 : vector<1x32xf32> to vector<8x32xf32>
      %331 = arith.addf %329, %330 : vector<8x32xf32>
      %332 = arith.truncf %331 : vector<8x32xf32> to vector<8x32xbf16>
      %c0_153 = arith.constant 0 : index
      %c0_154 = arith.constant 0 : index
      %333 = vector.load %arg18[%c0_153, %c0_154] : memref<32x1024xbf16, #tpu.memory_space<vmem>>, vector<32x1024xbf16>
      %cst_155 = arith.constant dense<0.000000e+00> : vector<8x1024xf32>
      %334 = tpu.matmul %332, %333, %cst_155 {dimension_numbers = #tpu.dot_dimension_numbers<[1], [0], [0], [1], [0, 0, 1, 1], [], []>} : vector<8x32xbf16>, vector<32x1024xbf16>, vector<8x1024xf32> -> vector<8x1024xf32>
      %c0_156 = arith.constant 0 : index
      %c0_157 = arith.constant 0 : index
      %335 = vector.load %arg19[%c0_156, %c0_157] : memref<1x1024xf32, #tpu.memory_space<vmem>>, vector<1x1024xf32>
      %336 = vector.broadcast %335 : vector<1x1024xf32> to vector<8x1024xf32>
      %337 = arith.addf %334, %336 : vector<8x1024xf32>
      %338 = vector.extract_strided_slice %337 {offsets = [0, 0], sizes = [8, 512], strides = [1, 1]} : vector<8x1024xf32> to vector<8x512xf32>
      %339 = math.exp %338 : vector<8x512xf32>
      %cst_158 = arith.constant 1.000000e+02 : f32
      %340 = vector.broadcast %cst_158 : f32 to vector<8x512xf32>
      %341 = arith.minimumf %339, %340 : vector<8x512xf32>
      %342 = vector.extract_strided_slice %337 {offsets = [0, 512], sizes = [8, 512], strides = [1, 1]} : vector<8x1024xf32> to vector<8x512xf32>
      %343 = math.cos %342 : vector<8x512xf32>
      %344 = arith.mulf %341, %343 : vector<8x512xf32>
      %c0_159 = arith.constant 0 : index
      %c0_160 = arith.constant 0 : index
      %345 = vector.load %arg26[%c0_159, %c0_160] : memref<8x512xf32, #tpu.memory_space<vmem>>, vector<8x512xf32>
      tpu.vector_store %arg26[%c0_159, %c0_160], %344 {strides = array<i32>} : memref<8x512xf32, #tpu.memory_space<vmem>>, vector<8x512xf32>,
      %346 = math.sin %342 : vector<8x512xf32>
      %347 = arith.mulf %341, %346 : vector<8x512xf32>
      %c0_161 = arith.constant 0 : index
      %c0_162 = arith.constant 0 : index
      %348 = vector.load %arg27[%c0_161, %c0_162] : memref<8x512xf32, #tpu.memory_space<vmem>>, vector<8x512xf32>
      tpu.vector_store %arg27[%c0_161, %c0_162], %347 {strides = array<i32>} : memref<8x512xf32, #tpu.memory_space<vmem>>, vector<8x512xf32>,
      %c0_163 = arith.constant 0 : index
      %c0_164 = arith.constant 0 : index
      %349 = vector.load %arg20[%c0_163, %c0_164] : memref<2x32xf32, #tpu.memory_space<vmem>>, vector<2x32xf32>
      %c0_165 = arith.constant 0 : index
      %c0_166 = arith.constant 0 : index
      %350 = vector.load %arg21[%c0_165, %c0_166] : memref<2x1xf32, #tpu.memory_space<vmem>>, vector<2x1xf32>
      %351 = vector.extract_strided_slice %349 {offsets = [0, 0], sizes = [1, 32], strides = [1, 1]} : vector<2x32xf32> to vector<1x32xf32>
      %352 = vector.broadcast %351 : vector<1x32xf32> to vector<8x32xf32>
      %353 = arith.mulf %331, %352 : vector<8x32xf32>
      %cst_167 = arith.constant dense<0.000000e+00> : vector<8xf32>
      %354 = vector.multi_reduction <add>, %353, %cst_167 [1] : vector<8x32xf32> to vector<8xf32>
      %355 = vector.shape_cast %354 : vector<8xf32> to vector<8x1xf32>
      %356 = vector.extract_strided_slice %350 {offsets = [0, 0], sizes = [1, 1], strides = [1, 1]} : vector<2x1xf32> to vector<1x1xf32>
      %357 = vector.broadcast %356 : vector<1x1xf32> to vector<8x1xf32>
      %358 = arith.addf %355, %357 : vector<8x1xf32>
      %359 = vector.extract_strided_slice %349 {offsets = [1, 0], sizes = [1, 32], strides = [1, 1]} : vector<2x32xf32> to vector<1x32xf32>
      %360 = vector.broadcast %359 : vector<1x32xf32> to vector<8x32xf32>
      %361 = arith.mulf %331, %360 : vector<8x32xf32>
      %cst_168 = arith.constant dense<0.000000e+00> : vector<8xf32>
      %362 = vector.multi_reduction <add>, %361, %cst_168 [1] : vector<8x32xf32> to vector<8xf32>
      %363 = vector.shape_cast %362 : vector<8xf32> to vector<8x1xf32>
      %364 = vector.extract_strided_slice %350 {offsets = [1, 0], sizes = [1, 1], strides = [1, 1]} : vector<2x1xf32> to vector<1x1xf32>
      %365 = vector.broadcast %364 : vector<1x1xf32> to vector<8x1xf32>
      %366 = arith.addf %363, %365 : vector<8x1xf32>
      %367 = math.exp %358 : vector<8x1xf32>
      %cst_169 = arith.constant 1.000000e+02 : f32
      %368 = vector.broadcast %cst_169 : f32 to vector<8x1xf32>
      %369 = arith.minimumf %367, %368 : vector<8x1xf32>
      %370 = math.cos %366 : vector<8x1xf32>
      %371 = arith.mulf %369, %370 : vector<8x1xf32>
      %c0_170 = arith.constant 0 : index
      %c0_171 = arith.constant 0 : index
      %372 = vector.load %arg28[%c0_170, %c0_171] : memref<8x1xf32, #tpu.memory_space<vmem>>, vector<8x1xf32>
      tpu.vector_store %arg28[%c0_170, %c0_171], %371 {strides = array<i32>} : memref<8x1xf32, #tpu.memory_space<vmem>>, vector<8x1xf32>,
      %cst_172 = arith.constant 0.000000e+00 : f32
      %373 = vector.broadcast %cst_172 : f32 to vector<16x256xf32>
      %c0_173 = arith.constant 0 : index
      %c0_174 = arith.constant 0 : index
      %374 = vector.load %arg29[%c0_173, %c0_174] : memref<16x256xf32, #tpu.memory_space<vmem>>, vector<16x256xf32>
      tpu.vector_store %arg29[%c0_173, %c0_174], %373 {strides = array<i32>} : memref<16x256xf32, #tpu.memory_space<vmem>>, vector<16x256xf32>,
    } else {
    }
    %c0 = arith.constant 0 : index
    %c0_1 = arith.constant 0 : index
    %3 = vector.load %arg26[%c0, %c0_1] : memref<8x512xf32, #tpu.memory_space<vmem>>, vector<8x512xf32>
    %4 = arith.truncf %3 : vector<8x512xf32> to vector<8x512xbf16>
    %c0_2 = arith.constant 0 : index
    %c0_3 = arith.constant 0 : index
    %5 = vector.load %arg22[%c0_2, %c0_3] : memref<1024x256xbf16, #tpu.memory_space<vmem>>, vector<512x256xbf16>
    %cst = arith.constant dense<0.000000e+00> : vector<8x256xf32>
    %6 = tpu.matmul %4, %5, %cst {dimension_numbers = #tpu.dot_dimension_numbers<[1], [0], [0], [1], [0, 0, 1, 1], [], []>} : vector<8x512xbf16>, vector<512x256xbf16>, vector<8x256xf32> -> vector<8x256xf32>
    %c0_4 = arith.constant 0 : index
    %c0_5 = arith.constant 0 : index
    %7 = vector.load %arg27[%c0_4, %c0_5] : memref<8x512xf32, #tpu.memory_space<vmem>>, vector<8x512xf32>
    %8 = arith.truncf %7 : vector<8x512xf32> to vector<8x512xbf16>
    %c512 = arith.constant 512 : index
    %c0_6 = arith.constant 0 : index
    %9 = vector.load %arg22[%c512, %c0_6] : memref<1024x256xbf16, #tpu.memory_space<vmem>>, vector<512x256xbf16>
    %cst_7 = arith.constant dense<0.000000e+00> : vector<8x256xf32>
    %10 = tpu.matmul %8, %9, %cst_7 {dimension_numbers = #tpu.dot_dimension_numbers<[1], [0], [0], [1], [0, 0, 1, 1], [], []>} : vector<8x512xbf16>, vector<512x256xbf16>, vector<8x256xf32> -> vector<8x256xf32>
    %11 = arith.addf %6, %10 : vector<8x256xf32>
    %c0_8 = arith.constant 0 : index
    %c0_9 = arith.constant 0 : index
    %12 = vector.load %arg28[%c0_8, %c0_9] : memref<8x1xf32, #tpu.memory_space<vmem>>, vector<8x1xf32>
    %c0_10 = arith.constant 0 : index
    %c0_11 = arith.constant 0 : index
    %13 = vector.load %arg23[%c0_10, %c0_11] : memref<1x256xf32, #tpu.memory_space<vmem>>, vector<1x256xf32>
    %14 = vector.broadcast %12 : vector<8x1xf32> to vector<8x256xf32>
    %15 = vector.broadcast %13 : vector<1x256xf32> to vector<8x256xf32>
    %16 = arith.mulf %14, %15 : vector<8x256xf32>
    %17 = arith.addf %11, %16 : vector<8x256xf32>
    %cst_12 = arith.constant 0.000000e+00 : f32
    %18 = vector.broadcast %cst_12 : f32 to vector<8x256xf32>
    %19 = tpu.concatenate %17, %18 in 0 : vector<8x256xf32>, vector<8x256xf32> -> vector<16x256xf32>
    %c0_i32_13 = arith.constant 0 : i32
    %20 = arith.cmpi eq, %arg1, %c0_i32_13 : i32
    %21 = arith.extui %20 : i1 to i32
    %c0_i32_14 = arith.constant 0 : i32
    %22 = arith.cmpi ne, %21, %c0_i32_14 : i32
    scf.if %22 {
      %c0_20 = arith.constant 0 : index
      %c0_21 = arith.constant 0 : index
      %35 = vector.load %arg29[%c0_20, %c0_21] : memref<16x256xf32, #tpu.memory_space<vmem>>, vector<16x256xf32>
      %36 = arith.addf %35, %19 : vector<16x256xf32>
      %c0_22 = arith.constant 0 : index
      %c0_23 = arith.constant 0 : index
      %37 = vector.load %arg29[%c0_22, %c0_23] : memref<16x256xf32, #tpu.memory_space<vmem>>, vector<16x256xf32>
      tpu.vector_store %arg29[%c0_22, %c0_23], %36 {strides = array<i32>} : memref<16x256xf32, #tpu.memory_space<vmem>>, vector<16x256xf32>,
    } else {
    }
    %c1_i32 = arith.constant 1 : i32
    %23 = arith.cmpi eq, %arg1, %c1_i32 : i32
    %24 = arith.extui %23 : i1 to i32
    %c0_i32_15 = arith.constant 0 : i32
    %25 = arith.cmpi ne, %24, %c0_i32_15 : i32
    scf.if %25 {
      %c1_i32_20 = arith.constant 1 : i32
      %35 = tpu.dynamic_rotate %19 by %c1_i32_20 dim 0 : vector<16x256xf32>, i32 -> vector<16x256xf32>
      %c0_21 = arith.constant 0 : index
      %c0_22 = arith.constant 0 : index
      %36 = vector.load %arg29[%c0_21, %c0_22] : memref<16x256xf32, #tpu.memory_space<vmem>>, vector<16x256xf32>
      %37 = arith.addf %36, %35 : vector<16x256xf32>
      %c0_23 = arith.constant 0 : index
      %c0_24 = arith.constant 0 : index
      %38 = vector.load %arg29[%c0_23, %c0_24] : memref<16x256xf32, #tpu.memory_space<vmem>>, vector<16x256xf32>
      tpu.vector_store %arg29[%c0_23, %c0_24], %37 {strides = array<i32>} : memref<16x256xf32, #tpu.memory_space<vmem>>, vector<16x256xf32>,
    } else {
    }
    %c2_i32 = arith.constant 2 : i32
    %26 = arith.cmpi eq, %arg1, %c2_i32 : i32
    %27 = arith.extui %26 : i1 to i32
    %c0_i32_16 = arith.constant 0 : i32
    %28 = arith.cmpi ne, %27, %c0_i32_16 : i32
    scf.if %28 {
      %c2_i32_20 = arith.constant 2 : i32
      %35 = tpu.dynamic_rotate %19 by %c2_i32_20 dim 0 : vector<16x256xf32>, i32 -> vector<16x256xf32>
      %c0_21 = arith.constant 0 : index
      %c0_22 = arith.constant 0 : index
      %36 = vector.load %arg29[%c0_21, %c0_22] : memref<16x256xf32, #tpu.memory_space<vmem>>, vector<16x256xf32>
      %37 = arith.addf %36, %35 : vector<16x256xf32>
      %c0_23 = arith.constant 0 : index
      %c0_24 = arith.constant 0 : index
      %38 = vector.load %arg29[%c0_23, %c0_24] : memref<16x256xf32, #tpu.memory_space<vmem>>, vector<16x256xf32>
      tpu.vector_store %arg29[%c0_23, %c0_24], %37 {strides = array<i32>} : memref<16x256xf32, #tpu.memory_space<vmem>>, vector<16x256xf32>,
    } else {
    }
    %c3_i32 = arith.constant 3 : i32
    %29 = arith.cmpi eq, %arg1, %c3_i32 : i32
    %30 = arith.extui %29 : i1 to i32
    %c0_i32_17 = arith.constant 0 : i32
    %31 = arith.cmpi ne, %30, %c0_i32_17 : i32
    scf.if %31 {
      %c3_i32_20 = arith.constant 3 : i32
      %35 = tpu.dynamic_rotate %19 by %c3_i32_20 dim 0 : vector<16x256xf32>, i32 -> vector<16x256xf32>
      %c0_21 = arith.constant 0 : index
      %c0_22 = arith.constant 0 : index
      %36 = vector.load %arg29[%c0_21, %c0_22] : memref<16x256xf32, #tpu.memory_space<vmem>>, vector<16x256xf32>
      %37 = arith.addf %36, %35 : vector<16x256xf32>
      %c0_23 = arith.constant 0 : index
      %c0_24 = arith.constant 0 : index
      %38 = vector.load %arg29[%c0_23, %c0_24] : memref<16x256xf32, #tpu.memory_space<vmem>>, vector<16x256xf32>
      tpu.vector_store %arg29[%c0_23, %c0_24], %37 {strides = array<i32>} : memref<16x256xf32, #tpu.memory_space<vmem>>, vector<16x256xf32>,
    } else {
    }
    %c3_i32_18 = arith.constant 3 : i32
    %32 = arith.cmpi eq, %arg1, %c3_i32_18 : i32
    %33 = arith.extui %32 : i1 to i32
    %c0_i32_19 = arith.constant 0 : i32
    %34 = arith.cmpi ne, %33, %c0_i32_19 : i32
    scf.if %34 {
      %c0_20 = arith.constant 0 : index
      %c0_21 = arith.constant 0 : index
      %35 = vector.load %arg29[%c0_20, %c0_21] : memref<16x256xf32, #tpu.memory_space<vmem>>, vector<16x256xf32>
      %c0_22 = arith.constant 0 : index
      %c0_23 = arith.constant 0 : index
      %36 = vector.load %arg24[%c0_22, %c0_23] : memref<16x256xf32, #tpu.memory_space<vmem>>, vector<16x256xf32>
      %37 = arith.mulf %35, %36 : vector<16x256xf32>
      %c0_24 = arith.constant 0 : index
      %c0_25 = arith.constant 0 : index
      %38 = vector.load %arg25[%c0_24, %c0_25] : memref<16x256xf32, #tpu.memory_space<vmem>>, vector<16x256xf32>
      tpu.vector_store %arg25[%c0_24, %c0_25], %37 {strides = array<i32>} : memref<16x256xf32, #tpu.memory_space<vmem>>, vector<16x256xf32>,
    } else {
    }
    return
  }
  func.func @transform_0(%arg0: i32, %arg1: i32) -> (i32, i32) {
    %c0_i32 = arith.constant 0 : i32
    %c0_i32_0 = arith.constant 0 : i32
    return %arg0, %c0_i32 : i32, i32
  }
  func.func @transform_1(%arg0: i32, %arg1: i32) -> (i32, i32) {
    %c0_i32 = arith.constant 0 : i32
    %c0_i32_0 = arith.constant 0 : i32
    %c0_i32_1 = arith.constant 0 : i32
    return %c0_i32, %c0_i32_0 : i32, i32
  }
  func.func @transform_2(%arg0: i32, %arg1: i32) -> (i32, i32) {
    %c0_i32 = arith.constant 0 : i32
    %c0_i32_0 = arith.constant 0 : i32
    %c0_i32_1 = arith.constant 0 : i32
    return %c0_i32, %c0_i32_0 : i32, i32
  }
  func.func @transform_3(%arg0: i32, %arg1: i32) -> (i32, i32) {
    %c0_i32 = arith.constant 0 : i32
    %c0_i32_0 = arith.constant 0 : i32
    %c0_i32_1 = arith.constant 0 : i32
    return %c0_i32, %c0_i32_0 : i32, i32
  }
  func.func @transform_4(%arg0: i32, %arg1: i32) -> (i32, i32) {
    %c0_i32 = arith.constant 0 : i32
    %c0_i32_0 = arith.constant 0 : i32
    %c0_i32_1 = arith.constant 0 : i32
    return %c0_i32, %c0_i32_0 : i32, i32
  }
  func.func @transform_5(%arg0: i32, %arg1: i32) -> (i32, i32, i32) {
    %c0_i32 = arith.constant 0 : i32
    %c0_i32_0 = arith.constant 0 : i32
    %c0_i32_1 = arith.constant 0 : i32
    %c0_i32_2 = arith.constant 0 : i32
    return %c0_i32, %c0_i32_0, %c0_i32_1 : i32, i32, i32
  }
  func.func @transform_6(%arg0: i32, %arg1: i32) -> (i32, i32, i32) {
    %c0_i32 = arith.constant 0 : i32
    %c0_i32_0 = arith.constant 0 : i32
    %c0_i32_1 = arith.constant 0 : i32
    %c0_i32_2 = arith.constant 0 : i32
    return %c0_i32, %c0_i32_0, %c0_i32_1 : i32, i32, i32
  }
  func.func @transform_7(%arg0: i32, %arg1: i32) -> (i32, i32, i32) {
    %c0_i32 = arith.constant 0 : i32
    %c0_i32_0 = arith.constant 0 : i32
    %c0_i32_1 = arith.constant 0 : i32
    %c0_i32_2 = arith.constant 0 : i32
    return %c0_i32, %c0_i32_0, %c0_i32_1 : i32, i32, i32
  }
  func.func @transform_8(%arg0: i32, %arg1: i32) -> (i32, i32, i32) {
    %c0_i32 = arith.constant 0 : i32
    %c0_i32_0 = arith.constant 0 : i32
    %c0_i32_1 = arith.constant 0 : i32
    %c0_i32_2 = arith.constant 0 : i32
    return %c0_i32, %c0_i32_0, %c0_i32_1 : i32, i32, i32
  }
  func.func @transform_9(%arg0: i32, %arg1: i32) -> (i32, i32, i32) {
    %c0_i32 = arith.constant 0 : i32
    %c0_i32_0 = arith.constant 0 : i32
    %c0_i32_1 = arith.constant 0 : i32
    %c0_i32_2 = arith.constant 0 : i32
    return %c0_i32, %c0_i32_0, %c0_i32_1 : i32, i32, i32
  }
  func.func @transform_10(%arg0: i32, %arg1: i32) -> (i32, i32, i32) {
    %c0_i32 = arith.constant 0 : i32
    %c0_i32_0 = arith.constant 0 : i32
    %c0_i32_1 = arith.constant 0 : i32
    %c0_i32_2 = arith.constant 0 : i32
    return %c0_i32, %c0_i32_0, %c0_i32_1 : i32, i32, i32
  }
  func.func @transform_11(%arg0: i32, %arg1: i32) -> (i32, i32, i32) {
    %c0_i32 = arith.constant 0 : i32
    %c0_i32_0 = arith.constant 0 : i32
    %c0_i32_1 = arith.constant 0 : i32
    %c0_i32_2 = arith.constant 0 : i32
    return %c0_i32, %c0_i32_0, %c0_i32_1 : i32, i32, i32
  }
  func.func @transform_12(%arg0: i32, %arg1: i32) -> (i32, i32, i32) {
    %c0_i32 = arith.constant 0 : i32
    %c0_i32_0 = arith.constant 0 : i32
    %c0_i32_1 = arith.constant 0 : i32
    %c0_i32_2 = arith.constant 0 : i32
    return %c0_i32, %c0_i32_0, %c0_i32_1 : i32, i32, i32
  }
  func.func @transform_13(%arg0: i32, %arg1: i32) -> (i32, i32, i32) {
    %c0_i32 = arith.constant 0 : i32
    %c0_i32_0 = arith.constant 0 : i32
    %c0_i32_1 = arith.constant 0 : i32
    %c0_i32_2 = arith.constant 0 : i32
    return %c0_i32, %c0_i32_0, %c0_i32_1 : i32, i32, i32
  }
  func.func @transform_14(%arg0: i32, %arg1: i32) -> (i32, i32) {
    %c0_i32 = arith.constant 0 : i32
    %c0_i32_0 = arith.constant 0 : i32
    %c0_i32_1 = arith.constant 0 : i32
    return %c0_i32, %c0_i32_0 : i32, i32
  }
  func.func @transform_15(%arg0: i32, %arg1: i32) -> (i32, i32) {
    %c0_i32 = arith.constant 0 : i32
    %c0_i32_0 = arith.constant 0 : i32
    %c0_i32_1 = arith.constant 0 : i32
    return %c0_i32, %c0_i32_0 : i32, i32
  }
  func.func @transform_16(%arg0: i32, %arg1: i32) -> (i32, i32) {
    %c0_i32 = arith.constant 0 : i32
    %c0_i32_0 = arith.constant 0 : i32
    %c0_i32_1 = arith.constant 0 : i32
    return %c0_i32, %c0_i32_0 : i32, i32
  }
  func.func @transform_17(%arg0: i32, %arg1: i32) -> (i32, i32) {
    %c0_i32 = arith.constant 0 : i32
    %c0_i32_0 = arith.constant 0 : i32
    %c0_i32_1 = arith.constant 0 : i32
    return %c0_i32, %c0_i32_0 : i32, i32
  }
  func.func @transform_18(%arg0: i32, %arg1: i32) -> (i32, i32) {
    %c0_i32 = arith.constant 0 : i32
    %c0_i32_0 = arith.constant 0 : i32
    %c0_i32_1 = arith.constant 0 : i32
    return %c0_i32, %c0_i32_0 : i32, i32
  }
  func.func @transform_19(%arg0: i32, %arg1: i32) -> (i32, i32) {
    %c0_i32 = arith.constant 0 : i32
    %c0_i32_0 = arith.constant 0 : i32
    %c0_i32_1 = arith.constant 0 : i32
    return %c0_i32, %c0_i32_0 : i32, i32
  }
  func.func @transform_20(%arg0: i32, %arg1: i32) -> (i32, i32) {
    %c0_i32 = arith.constant 0 : i32
    %c0_i32_0 = arith.constant 0 : i32
    return %c0_i32, %arg1 : i32, i32
  }
  func.func @transform_21(%arg0: i32, %arg1: i32) -> (i32, i32) {
    %c0_i32 = arith.constant 0 : i32
    %c0_i32_0 = arith.constant 0 : i32
    return %c0_i32, %arg1 : i32, i32
  }
  func.func @transform_22(%arg0: i32, %arg1: i32) -> (i32, i32) {
    %c0_i32 = arith.constant 0 : i32
    %c0_i32_0 = arith.constant 0 : i32
    %c0_i32_1 = arith.constant 0 : i32
    return %c0_i32, %c0_i32_0 : i32, i32
  }
  func.func @transform_23(%arg0: i32, %arg1: i32) -> (i32, i32) {
    %c0_i32 = arith.constant 0 : i32
    %c0_i32_0 = arith.constant 0 : i32
    return %arg0, %c0_i32 : i32, i32
  }
}

</mosaic_0001>

<llo_original>
// kernel: vocos_gen_forward.1
$region0: #{vocos_gen_forward.1}
  #allocation0 [shape = 'u32[]', space=smem, size = 0x4, offset = 0x4, fixed_abs, tag = 'smem constant byte address 0x4 - core index']
  #allocation1 [shape = 'u32[144,128]{1,0:T(1,128)}', space=vmem, size = 0x12000, scoped, tag = 'internal scratch']
  #allocation2 [shape = 'f32[8,512]{1,0:T(8,128)}', space=vmem, size = 0x4000, scoped, tag = 'scratch operand']
  #allocation3 [shape = 'f32[8,512]{1,0:T(8,128)}', space=vmem, size = 0x4000, scoped, tag = 'scratch operand']
  #allocation4 [shape = 'f32[8,1]{1,0:T(8,128)}', space=vmem, size = 0x1000, scoped, tag = 'scratch operand']
  #allocation5 [shape = 'f32[16,256]{1,0:T(8,128)}', space=vmem, size = 0x4000, scoped, tag = 'scratch operand']
  %s0 = inlined_call_operand.vmem [shape: f32[16,64], index: 0, kind: input, shape index: {}]
  %s1 = inlined_call_operand.vmem [shape: f32[64,32], index: 1, kind: input, shape index: {}]
  %s2 = inlined_call_operand.hbm [shape: f32[1,32], index: 2, kind: input, shape index: {}]
  %s3 = inlined_call_operand.hbm [shape: f32[1,32], index: 3, kind: input, shape index: {}]
  %s4 = inlined_call_operand.hbm [shape: f32[1,32], index: 4, kind: input, shape index: {}]
  %s5 = inlined_call_operand.vmem [shape: f32[2,7,32], index: 5, kind: input, shape index: {}]
  %s6 = inlined_call_operand.hbm [shape: f32[2,1,32], index: 6, kind: input, shape index: {}]
  %s7 = inlined_call_operand.hbm [shape: f32[2,1,32], index: 7, kind: input, shape index: {}]
  %s8 = inlined_call_operand.hbm [shape: f32[2,1,32], index: 8, kind: input, shape index: {}]
  %s9 = inlined_call_operand.hbm [shape: f32[2,32,64], index: 9, kind: input, shape index: {}]
  %s10 = inlined_call_operand.hbm [shape: f32[2,1,64], index: 10, kind: input, shape index: {}]
  %s11 = inlined_call_operand.vmem [shape: f32[2,64,32], index: 11, kind: input, shape index: {}]
  %s12 = inlined_call_operand.hbm [shape: f32[2,1,32], index: 12, kind: input, shape index: {}]
  %s13 = inlined_call_operand.hbm [shape: f32[2,1,32], index: 13, kind: input, shape index: {}]
  %s14 = inlined_call_operand.hbm [shape: f32[1,32], index: 14, kind: input, shape index: {}]
  %s15 = inlined_call_operand.hbm [shape: f32[1,32], index: 15, kind: input, shape index: {}]
  %s16 = inlined_call_operand.hbm [shape: bf16[32,1024], index: 16, kind: input, shape index: {}]
  %s17 = inlined_call_operand.hbm [shape: f32[1,1024], index: 17, kind: input, shape index: {}]
  %s18 = inlined_call_operand.hbm [shape: f32[2,32], index: 18, kind: input, shape index: {}]
  %s19 = inlined_call_operand.vmem [shape: f32[2,1], index: 19, kind: input, shape index: {}]
  %s20 = inlined_call_operand.hbm [shape: bf16[1024,1024], index: 20, kind: input, shape index: {}]
  %s21 = inlined_call_operand.hbm [shape: f32[1,1024], index: 21, kind: input, shape index: {}]
  %s22 = inlined_call_operand.hbm [shape: f32[16,256], index: 22, kind: input, shape index: {}]
  %s23 = inlined_call_operand.vmem [shape: f32[32,256], index: 23, kind: output, shape index: {}]
  %s24 = sld [smem:[#allocation0]]
  $region217: #{vocos_gen_forward.1} parent=0
    _
  %s26 = ssub.s32 1, %s24
  %s27 = scalar_select 0, %s26, %s24
  $region1: #{vocos_gen_forward.1} parent=0
    #allocation6 [shape = 'u8[512]{0}', space=vmem, size = 0x400, scoped, tag = 'input window, operand 2, single buffered']
    #allocation7 [shape = 's32[2]{0}', space=sflag, size = 0x8, scoped, tag = 'scoped memory for vocos_gen_forward.1']
    #allocation8 [shape = 'u8[512]{0}', space=vmem, size = 0x400, scoped, tag = 'input window, operand 3, single buffered']
    #allocation9 [shape = 's32[1]{0}', space=sflag, size = 0x4, scoped, tag = 'scoped memory for vocos_gen_forward.1']
    #allocation10 [shape = 'u8[512]{0}', space=vmem, size = 0x400, scoped, tag = 'input window, operand 4, single buffered']
    #allocation11 [shape = 'u8[1024]{0}', space=vmem, size = 0x400, scoped, tag = 'input window, operand 6, single buffered']
    #allocation12 [shape = 's32[1]{0}', space=sflag, size = 0x4, scoped, tag = 'scoped memory for vocos_gen_forward.1']
    #allocation13 [shape = 'u8[1024]{0}', space=vmem, size = 0x400, scoped, tag = 'input window, operand 7, single buffered']
    #allocation14 [shape = 'u8[1024]{0}', space=vmem, size = 0x400, scoped, tag = 'input window, operand 8, single buffered']
    #allocation15 [shape = 's32[1]{0}', space=sflag, size = 0x4, scoped, tag = 'scoped memory for vocos_gen_forward.1']
    #allocation16 [shape = 'u8[32768]{0}', space=vmem, size = 0x8000, scoped, tag = 'input window, operand 9, single buffered']
    #allocation17 [shape = 'u8[1024]{0}', space=vmem, size = 0x400, scoped, tag = 'input window, operand 10, single buffered']
    #allocation18 [shape = 's32[1]{0}', space=sflag, size = 0x4, scoped, tag = 'scoped memory for vocos_gen_forward.1']
    #allocation19 [shape = 'u8[1024]{0}', space=vmem, size = 0x400, scoped, tag = 'input window, operand 12, single buffered']
    #allocation20 [shape = 'u8[1024]{0}', space=vmem, size = 0x400, scoped, tag = 'input window, operand 13, single buffered']
    #allocation21 [shape = 's32[1]{0}', space=sflag, size = 0x4, scoped, tag = 'scoped memory for vocos_gen_forward.1']
    #allocation22 [shape = 'u8[512]{0}', space=vmem, size = 0x400, scoped, tag = 'input window, operand 14, single buffered']
    #allocation23 [shape = 'u8[512]{0}', space=vmem, size = 0x400, scoped, tag = 'input window, operand 15, single buffered']
    #allocation24 [shape = 's32[1]{0}', space=sflag, size = 0x4, scoped, tag = 'scoped memory for vocos_gen_forward.1']
    #allocation25 [shape = 'u8[65536]{0}', space=vmem, size = 0x10000, scoped, tag = 'input window, operand 16, single buffered']
    #allocation26 [shape = 'u8[4096]{0}', space=vmem, size = 0x1000, scoped, tag = 'input window, operand 17, single buffered']
    #allocation27 [shape = 's32[1]{0}', space=sflag, size = 0x4, scoped, tag = 'scoped memory for vocos_gen_forward.1']
    #allocation28 [shape = 'u8[1024]{0}', space=vmem, size = 0x400, scoped, tag = 'input window, operand 18, single buffered']
    #allocation29 [shape = 'u8[1048576]{0}', space=vmem, size = 0x100000, scoped, tag = 'input window, operand 20']
    #allocation30 [shape = 's32[2]{0}', space=sflag, size = 0x8, scoped, tag = 'scoped memory for vocos_gen_forward.1']
    #allocation31 [shape = 'u8[2048]{0}', space=vmem, size = 0x800, scoped, tag = 'input window, operand 21']
    #allocation32 [shape = 'u8[16384]{0}', space=vmem, size = 0x4000, scoped, tag = 'input window, operand 22, single buffered']
    #allocation33 [shape = 's32[1]{0}', space=sflag, size = 0x4, scoped, tag = 'scoped memory for vocos_gen_forward.1']
    %28 = vsyncpa [#allocation7], 0
    %29 = vsyncpa [#allocation9], 0
    %30 = vsyncpa [#allocation12], 0
    %31 = vsyncpa [#allocation15], 0
    %32 = vsyncpa [#allocation18], 0
    %33 = vsyncpa [#allocation21], 0
    %34 = vsyncpa [#allocation24], 0
    %35 = vsyncpa [#allocation27], 0
    %36 = vsyncpa [#allocation30], 0
    %s37 = scalar_lea.sflag [#allocation30], 1
    %38 = vsyncpa %s37, 0
    %39 = vsyncpa [#allocation33], 0
    loop: start=0, step=1, limit=10
    $region2: #{vocos_gen_forward.1} parent=1 // loop_pre_header
      _
    $region3: #{vocos_gen_forward.1} parent=1 // loop_header
      %s41 = sphi 0, %s45
      %p42 = scmp.ge.s32.totalorder %s41, 10
      %s48 = sphi 0, %s60
      %s49 = sphi 0, %s56
      %s50 = sphi 0, %s48
      %s51 = sphi 0, %s49
      %s52 = sphi 0, %s50
      %s53 = sphi 0, %s51
      %s63 = sphi 0, %s65
      %s66 = sphi 0, %s63
      %s67 = sphi 0, %s66
      %s83 = sphi 0, %s67
      %s87 = sphi 0, %s87
      %s89 = sphi 0, %s87
      %s90 = sphi 0, %s89
      %s104 = sphi 0, %s90
      %s108 = sphi 0, %s108
      %s110 = sphi 0, %s108
      %s111 = sphi 0, %s110
      %s125 = sphi 0, %s111
      %s129 = sphi 0, %s129
      %s131 = sphi 0, %s129
      %s132 = sphi 0, %s131
      %s146 = sphi 0, %s132
      %s150 = sphi 0, %s150
      %s152 = sphi 0, %s150
      %s153 = sphi 0, %s152
      %s167 = sphi 0, %s153
      %s171 = sphi 0, %s171
      %s173 = sphi 0, %s171
      %s174 = sphi 0, %s173
      %s188 = sphi 0, %s174
      %s192 = sphi 0, %s192
      %s194 = sphi 0, %s192
      %s195 = sphi 0, %s194
      %s209 = sphi 0, %s195
      %s213 = sphi 0, %s213
      %s215 = sphi 0, %s213
      %s216 = sphi 0, %s215
      %s230 = sphi 0, %s216
      %s234 = sphi 0, %s234
      %s236 = sphi 0, %s234
      %s237 = sphi 0, %s236
      %s251 = sphi 0, %s237
      %s255 = sphi 0, %s255
      %s257 = sphi 0, %s255
      %s258 = sphi 0, %s257
      %s272 = sphi 0, %s258
      %s276 = sphi 0, %s276
      %s278 = sphi 0, %s276
      %s279 = sphi 0, %s278
      %s293 = sphi 0, %s279
      %s297 = sphi 0, %s297
      %s299 = sphi 0, %s297
      %s300 = sphi 0, %s299
      %s314 = sphi 0, %s300
      %s318 = sphi 0, %s318
      %s320 = sphi 0, %s318
      %s321 = sphi 0, %s320
      %s335 = sphi 0, %s321
      %s339 = sphi 0, %s339
      %s341 = sphi 0, %s339
      %s342 = sphi 0, %s341
      %s356 = sphi 0, %s342
      %s360 = sphi 0, %s360
      %s362 = sphi 0, %s360
      %s363 = sphi 0, %s362
      %s377 = sphi 0, %s363
      %s381 = sphi 0, %s381
      %s383 = sphi 0, %s381
      %s384 = sphi 0, %s383
      %s398 = sphi 0, %s384
      %s402 = sphi 0, %s402
      %s404 = sphi 0, %s402
      %s405 = sphi 0, %s404
      %s419 = sphi 0, %s405
      %s423 = sphi 0, %s423
      %s425 = sphi 0, %s423
      %s426 = sphi 0, %s425
      %s440 = sphi 0, %s426
      %s444 = sphi 0, %s444
      %s446 = sphi 0, %s444
      %s447 = sphi 0, %s446
      %s461 = sphi 0, %s447
      %s465 = sphi 0, %s465
      %s467 = sphi 0, %s465
      %s468 = sphi 0, %s467
      %s482 = sphi 0, %s468
      %s488 = sphi 0, %s490
      %s491 = sphi 0, %s488
      %s492 = sphi 0, %s491
      %s508 = sphi 0, %s492
      %s514 = sphi 0, %s516
      %s517 = sphi 0, %s514
      %s518 = sphi 0, %s517
      %s534 = sphi 0, %s518
      %s538 = sphi 0, %s538
      %s540 = sphi 0, %s538
      %s541 = sphi 0, %s540
      %s555 = sphi 0, %s541
      %s561 = sphi 0, %s563
      %s564 = sphi 0, %s561
      %s565 = sphi 0, %s564
      %s581 = sphi 0, %s565
    $region4: #{vocos_gen_forward.1} parent=1 // loop_header_branch
      %44 = sbr.rel (%p42) target = $region8
    $region5: #{vocos_gen_forward.1} parent=1 // loop_body
      %s46 = ssub.s32 %s41, 1
      %s47 = ssub.s32 %s41, 2
      %s54 = sadd.s32 1, %s49
      %p55 = scmp.ge.s32.totalorder %s54, 4
      %s56 = scalar_select %p55, 0, %s54
      %s57 = sadd.s32 1, %s48
      %s58 = scalar_select %p55, %s57, %s48
      %p59 = scmp.ge.s32.totalorder %s58, 2
      %s60 = scalar_select %p59, 0, %s58
      %s61 = ssub.s32 %s48, %s60
      %p62 = scmp.eq.s32.totalorder %s61, 0
      %s64 = sadd.s32 %s63, 1
      %s65 = scalar_select %p62, %s63, %s64
      %p68 = pneg %p62
      %p69 = scmp.eq.s32.totalorder %s41, 7
      %p70 = por %p68, %p69
      %p71 = scmp.ne.s32.totalorder %s63, %s66
      %p72 = scmp.eq.s32.totalorder %s41, 0
      %p73 = por %p71, %p72
      %p74 = scmp.ne.s32.totalorder %s63, %s66
      %p75 = scmp.eq.s32.totalorder %s46, 7
      %p76 = por %p74, %p75
      %p77 = scmp.ne.s32.totalorder %s66, %s67
      %p78 = scmp.eq.s32.totalorder %s46, 0
      %p79 = por %p77, %p78
      %p80 = scmp.ne.s32.totalorder %s66, %s67
      %p81 = scmp.eq.s32.totalorder %s47, 7
      %p82 = por %p80, %p81
      %p84 = scmp.ne.s32.totalorder %s67, %s83
      %p85 = scmp.eq.s32.totalorder %s47, 0
      %p86 = por %p84, %p85
      %s88 = sadd.s32 %s87, 1
      %p91 = scmp.eq.s32.totalorder %s41, 7
      %p92 = scmp.ne.s32.totalorder %s87, %s89
      %p93 = scmp.eq.s32.totalorder %s41, 0
      %p94 = por %p92, %p93
      %p95 = scmp.ne.s32.totalorder %s87, %s89
      %p96 = scmp.eq.s32.totalorder %s46, 7
      %p97 = por %p95, %p96
      %p98 = scmp.ne.s32.totalorder %s89, %s90
      %p99 = scmp.eq.s32.totalorder %s46, 0
      %p100 = por %p98, %p99
      %p101 = scmp.ne.s32.totalorder %s89, %s90
      %p102 = scmp.eq.s32.totalorder %s47, 7
      %p103 = por %p101, %p102
      %p105 = scmp.ne.s32.totalorder %s90, %s104
      %p106 = scmp.eq.s32.totalorder %s47, 0
      %p107 = por %p105, %p106
      %s109 = sadd.s32 %s108, 1
      %p112 = scmp.eq.s32.totalorder %s41, 7
      %p113 = scmp.ne.s32.totalorder %s108, %s110
      %p114 = scmp.eq.s32.totalorder %s41, 0
      %p115 = por %p113, %p114
      %p116 = scmp.ne.s32.totalorder %s108, %s110
      %p117 = scmp.eq.s32.totalorder %s46, 7
      %p118 = por %p116, %p117
      %p119 = scmp.ne.s32.totalorder %s110, %s111
      %p120 = scmp.eq.s32.totalorder %s46, 0
      %p121 = por %p119, %p120
      %p122 = scmp.ne.s32.totalorder %s110, %s111
      %p123 = scmp.eq.s32.totalorder %s47, 7
      %p124 = por %p122, %p123
      %p126 = scmp.ne.s32.totalorder %s111, %s125
      %p127 = scmp.eq.s32.totalorder %s47, 0
      %p128 = por %p126, %p127
      %s130 = sadd.s32 %s129, 1
      %p133 = scmp.eq.s32.totalorder %s41, 7
      %p134 = scmp.ne.s32.totalorder %s129, %s131
      %p135 = scmp.eq.s32.totalorder %s41, 0
      %p136 = por %p134, %p135
      %p137 = scmp.ne.s32.totalorder %s129, %s131
      %p138 = scmp.eq.s32.totalorder %s46, 7
      %p139 = por %p137, %p138
      %p140 = scmp.ne.s32.totalorder %s131, %s132
      %p141 = scmp.eq.s32.totalorder %s46, 0
      %p142 = por %p140, %p141
      %p143 = scmp.ne.s32.totalorder %s131, %s132
      %p144 = scmp.eq.s32.totalorder %s47, 7
      %p145 = por %p143, %p144
      %p147 = scmp.ne.s32.totalorder %s132, %s146
      %p148 = scmp.eq.s32.totalorder %s47, 0
      %p149 = por %p147, %p148
      %s151 = sadd.s32 %s150, 1
      %p154 = scmp.eq.s32.totalorder %s41, 7
      %p155 = scmp.ne.s32.totalorder %s150, %s152
      %p156 = scmp.eq.s32.totalorder %s41, 0
      %p157 = por %p155, %p156
      %p158 = scmp.ne.s32.totalorder %s150, %s152
      %p159 = scmp.eq.s32.totalorder %s46, 7
      %p160 = por %p158, %p159
      %p161 = scmp.ne.s32.totalorder %s152, %s153
      %p162 = scmp.eq.s32.totalorder %s46, 0
      %p163 = por %p161, %p162
      %p164 = scmp.ne.s32.totalorder %s152, %s153
      %p165 = scmp.eq.s32.totalorder %s47, 7
      %p166 = por %p164, %p165
      %p168 = scmp.ne.s32.totalorder %s153, %s167
      %p169 = scmp.eq.s32.totalorder %s47, 0
      %p170 = por %p168, %p169
      %s172 = sadd.s32 %s171, 1
      %p175 = scmp.eq.s32.totalorder %s41, 7
      %p176 = scmp.ne.s32.totalorder %s171, %s173
      %p177 = scmp.eq.s32.totalorder %s41, 0
      %p178 = por %p176, %p177
      %p179 = scmp.ne.s32.totalorder %s171, %s173
      %p180 = scmp.eq.s32.totalorder %s46, 7
      %p181 = por %p179, %p180
      %p182 = scmp.ne.s32.totalorder %s173, %s174
      %p183 = scmp.eq.s32.totalorder %s46, 0
      %p184 = por %p182, %p183
      %p185 = scmp.ne.s32.totalorder %s173, %s174
      %p186 = scmp.eq.s32.totalorder %s47, 7
      %p187 = por %p185, %p186
      %p189 = scmp.ne.s32.totalorder %s174, %s188
      %p190 = scmp.eq.s32.totalorder %s47, 0
      %p191 = por %p189, %p190
      %s193 = sadd.s32 %s192, 1
      %p196 = scmp.eq.s32.totalorder %s41, 7
      %p197 = scmp.ne.s32.totalorder %s192, %s194
      %p198 = scmp.eq.s32.totalorder %s41, 0
      %p199 = por %p197, %p198
      %p200 = scmp.ne.s32.totalorder %s192, %s194
      %p201 = scmp.eq.s32.totalorder %s46, 7
      %p202 = por %p200, %p201
      %p203 = scmp.ne.s32.totalorder %s194, %s195
      %p204 = scmp.eq.s32.totalorder %s46, 0
      %p205 = por %p203, %p204
      %p206 = scmp.ne.s32.totalorder %s194, %s195
      %p207 = scmp.eq.s32.totalorder %s47, 7
      %p208 = por %p206, %p207
      %p210 = scmp.ne.s32.totalorder %s195, %s209
      %p211 = scmp.eq.s32.totalorder %s47, 0
      %p212 = por %p210, %p211
      %s214 = sadd.s32 %s213, 1
      %p217 = scmp.eq.s32.totalorder %s41, 7
      %p218 = scmp.ne.s32.totalorder %s213, %s215
      %p219 = scmp.eq.s32.totalorder %s41, 0
      %p220 = por %p218, %p219
      %p221 = scmp.ne.s32.totalorder %s213, %s215
      %p222 = scmp.eq.s32.totalorder %s46, 7
      %p223 = por %p221, %p222
      %p224 = scmp.ne.s32.totalorder %s215, %s216
      %p225 = scmp.eq.s32.totalorder %s46, 0
      %p226 = por %p224, %p225
      %p227 = scmp.ne.s32.totalorder %s215, %s216
      %p228 = scmp.eq.s32.totalorder %s47, 7
      %p229 = por %p227, %p228
      %p231 = scmp.ne.s32.totalorder %s216, %s230
      %p232 = scmp.eq.s32.totalorder %s47, 0
      %p233 = por %p231, %p232
      %s235 = sadd.s32 %s234, 1
      %p238 = scmp.eq.s32.totalorder %s41, 7
      %p239 = scmp.ne.s32.totalorder %s234, %s236
      %p240 = scmp.eq.s32.totalorder %s41, 0
      %p241 = por %p239, %p240
      %p242 = scmp.ne.s32.totalorder %s234, %s236
      %p243 = scmp.eq.s32.totalorder %s46, 7
      %p244 = por %p242, %p243
      %p245 = scmp.ne.s32.totalorder %s236, %s237
      %p246 = scmp.eq.s32.totalorder %s46, 0
      %p247 = por %p245, %p246
      %p248 = scmp.ne.s32.totalorder %s236, %s237
      %p249 = scmp.eq.s32.totalorder %s47, 7
      %p250 = por %p248, %p249
      %p252 = scmp.ne.s32.totalorder %s237, %s251
      %p253 = scmp.eq.s32.totalorder %s47, 0
      %p254 = por %p252, %p253
      %s256 = sadd.s32 %s255, 1
      %p259 = scmp.eq.s32.totalorder %s41, 7
      %p260 = scmp.ne.s32.totalorder %s255, %s257
      %p261 = scmp.eq.s32.totalorder %s41, 0
      %p262 = por %p260, %p261
      %p263 = scmp.ne.s32.totalorder %s255, %s257
      %p264 = scmp.eq.s32.totalorder %s46, 7
      %p265 = por %p263, %p264
      %p266 = scmp.ne.s32.totalorder %s257, %s258
      %p267 = scmp.eq.s32.totalorder %s46, 0
      %p268 = por %p266, %p267
      %p269 = scmp.ne.s32.totalorder %s257, %s258
      %p270 = scmp.eq.s32.totalorder %s47, 7
      %p271 = por %p269, %p270
      %p273 = scmp.ne.s32.totalorder %s258, %s272
      %p274 = scmp.eq.s32.totalorder %s47, 0
      %p275 = por %p273, %p274
      %s277 = sadd.s32 %s276, 1
      %p280 = scmp.eq.s32.totalorder %s41, 7
      %p281 = scmp.ne.s32.totalorder %s276, %s278
      %p282 = scmp.eq.s32.totalorder %s41, 0
      %p283 = por %p281, %p282
      %p284 = scmp.ne.s32.totalorder %s276, %s278
      %p285 = scmp.eq.s32.totalorder %s46, 7
      %p286 = por %p284, %p285
      %p287 = scmp.ne.s32.totalorder %s278, %s279
      %p288 = scmp.eq.s32.totalorder %s46, 0
      %p289 = por %p287, %p288
      %p290 = scmp.ne.s32.totalorder %s278, %s279
      %p291 = scmp.eq.s32.totalorder %s47, 7
      %p292 = por %p290, %p291
      %p294 = scmp.ne.s32.totalorder %s279, %s293
      %p295 = scmp.eq.s32.totalorder %s47, 0
      %p296 = por %p294, %p295
      %s298 = sadd.s32 %s297, 1
      %p301 = scmp.eq.s32.totalorder %s41, 7
      %p302 = scmp.ne.s32.totalorder %s297, %s299
      %p303 = scmp.eq.s32.totalorder %s41, 0
      %p304 = por %p302, %p303
      %p305 = scmp.ne.s32.totalorder %s297, %s299
      %p306 = scmp.eq.s32.totalorder %s46, 7
      %p307 = por %p305, %p306
      %p308 = scmp.ne.s32.totalorder %s299, %s300
      %p309 = scmp.eq.s32.totalorder %s46, 0
      %p310 = por %p308, %p309
      %p311 = scmp.ne.s32.totalorder %s299, %s300
      %p312 = scmp.eq.s32.totalorder %s47, 7
      %p313 = por %p311, %p312
      %p315 = scmp.ne.s32.totalorder %s300, %s314
      %p316 = scmp.eq.s32.totalorder %s47, 0
      %p317 = por %p315, %p316
      %s319 = sadd.s32 %s318, 1
      %p322 = scmp.eq.s32.totalorder %s41, 7
      %p323 = scmp.ne.s32.totalorder %s318, %s320
      %p324 = scmp.eq.s32.totalorder %s41, 0
      %p325 = por %p323, %p324
      %p326 = scmp.ne.s32.totalorder %s318, %s320
      %p327 = scmp.eq.s32.totalorder %s46, 7
      %p328 = por %p326, %p327
      %p329 = scmp.ne.s32.totalorder %s320, %s321
      %p330 = scmp.eq.s32.totalorder %s46, 0
      %p331 = por %p329, %p330
      %p332 = scmp.ne.s32.totalorder %s320, %s321
      %p333 = scmp.eq.s32.totalorder %s47, 7
      %p334 = por %p332, %p333
      %p336 = scmp.ne.s32.totalorder %s321, %s335
      %p337 = scmp.eq.s32.totalorder %s47, 0
      %p338 = por %p336, %p337
      %s340 = sadd.s32 %s339, 1
      %p343 = scmp.eq.s32.totalorder %s41, 7
      %p344 = scmp.ne.s32.totalorder %s339, %s341
      %p345 = scmp.eq.s32.totalorder %s41, 0
      %p346 = por %p344, %p345
      %p347 = scmp.ne.s32.totalorder %s339, %s341
      %p348 = scmp.eq.s32.totalorder %s46, 7
      %p349 = por %p347, %p348
      %p350 = scmp.ne.s32.totalorder %s341, %s342
      %p351 = scmp.eq.s32.totalorder %s46, 0
      %p352 = por %p350, %p351
      %p353 = scmp.ne.s32.totalorder %s341, %s342
      %p354 = scmp.eq.s32.totalorder %s47, 7
      %p355 = por %p353, %p354
      %p357 = scmp.ne.s32.totalorder %s342, %s356
      %p358 = scmp.eq.s32.totalorder %s47, 0
      %p359 = por %p357, %p358
      %s361 = sadd.s32 %s360, 1
      %p364 = scmp.eq.s32.totalorder %s41, 7
      %p365 = scmp.ne.s32.totalorder %s360, %s362
      %p366 = scmp.eq.s32.totalorder %s41, 0
      %p367 = por %p365, %p366
      %p368 = scmp.ne.s32.totalorder %s360, %s362
      %p369 = scmp.eq.s32.totalorder %s46, 7
      %p370 = por %p368, %p369
      %p371 = scmp.ne.s32.totalorder %s362, %s363
      %p372 = scmp.eq.s32.totalorder %s46, 0
      %p373 = por %p371, %p372
      %p374 = scmp.ne.s32.totalorder %s362, %s363
      %p375 = scmp.eq.s32.totalorder %s47, 7
      %p376 = por %p374, %p375
      %p378 = scmp.ne.s32.totalorder %s363, %s377
      %p379 = scmp.eq.s32.totalorder %s47, 0
      %p380 = por %p378, %p379
      %s382 = sadd.s32 %s381, 1
      %p385 = scmp.eq.s32.totalorder %s41, 7
      %p386 = scmp.ne.s32.totalorder %s381, %s383
      %p387 = scmp.eq.s32.totalorder %s41, 0
      %p388 = por %p386, %p387
      %p389 = scmp.ne.s32.totalorder %s381, %s383
      %p390 = scmp.eq.s32.totalorder %s46, 7
      %p391 = por %p389, %p390
      %p392 = scmp.ne.s32.totalorder %s383, %s384
      %p393 = scmp.eq.s32.totalorder %s46, 0
      %p394 = por %p392, %p393
      %p395 = scmp.ne.s32.totalorder %s383, %s384
      %p396 = scmp.eq.s32.totalorder %s47, 7
      %p397 = por %p395, %p396
      %p399 = scmp.ne.s32.totalorder %s384, %s398
      %p400 = scmp.eq.s32.totalorder %s47, 0
      %p401 = por %p399, %p400
      %s403 = sadd.s32 %s402, 1
      %p406 = scmp.eq.s32.totalorder %s41, 7
      %p407 = scmp.ne.s32.totalorder %s402, %s404
      %p408 = scmp.eq.s32.totalorder %s41, 0
      %p409 = por %p407, %p408
      %p410 = scmp.ne.s32.totalorder %s402, %s404
      %p411 = scmp.eq.s32.totalorder %s46, 7
      %p412 = por %p410, %p411
      %p413 = scmp.ne.s32.totalorder %s404, %s405
      %p414 = scmp.eq.s32.totalorder %s46, 0
      %p415 = por %p413, %p414
      %p416 = scmp.ne.s32.totalorder %s404, %s405
      %p417 = scmp.eq.s32.totalorder %s47, 7
      %p418 = por %p416, %p417
      %p420 = scmp.ne.s32.totalorder %s405, %s419
      %p421 = scmp.eq.s32.totalorder %s47, 0
      %p422 = por %p420, %p421
      %s424 = sadd.s32 %s423, 1
      %p427 = scmp.eq.s32.totalorder %s41, 7
      %p428 = scmp.ne.s32.totalorder %s423, %s425
      %p429 = scmp.eq.s32.totalorder %s41, 0
      %p430 = por %p428, %p429
      %p431 = scmp.ne.s32.totalorder %s423, %s425
      %p432 = scmp.eq.s32.totalorder %s46, 7
      %p433 = por %p431, %p432
      %p434 = scmp.ne.s32.totalorder %s425, %s426
      %p435 = scmp.eq.s32.totalorder %s46, 0
      %p436 = por %p434, %p435
      %p437 = scmp.ne.s32.totalorder %s425, %s426
      %p438 = scmp.eq.s32.totalorder %s47, 7
      %p439 = por %p437, %p438
      %p441 = scmp.ne.s32.totalorder %s426, %s440
      %p442 = scmp.eq.s32.totalorder %s47, 0
      %p443 = por %p441, %p442
      %s445 = sadd.s32 %s444, 1
      %p448 = scmp.eq.s32.totalorder %s41, 7
      %p449 = scmp.ne.s32.totalorder %s444, %s446
      %p450 = scmp.eq.s32.totalorder %s41, 0
      %p451 = por %p449, %p450
      %p452 = scmp.ne.s32.totalorder %s444, %s446
      %p453 = scmp.eq.s32.totalorder %s46, 7
      %p454 = por %p452, %p453
      %p455 = scmp.ne.s32.totalorder %s446, %s447
      %p456 = scmp.eq.s32.totalorder %s46, 0
      %p457 = por %p455, %p456
      %p458 = scmp.ne.s32.totalorder %s446, %s447
      %p459 = scmp.eq.s32.totalorder %s47, 7
      %p460 = por %p458, %p459
      %p462 = scmp.ne.s32.totalorder %s447, %s461
      %p463 = scmp.eq.s32.totalorder %s47, 0
      %p464 = por %p462, %p463
      %s466 = sadd.s32 %s465, 1
      %p469 = scmp.eq.s32.totalorder %s41, 7
      %p470 = scmp.ne.s32.totalorder %s465, %s467
      %p471 = scmp.eq.s32.totalorder %s41, 0
      %p472 = por %p470, %p471
      %p473 = scmp.ne.s32.totalorder %s465, %s467
      %p474 = scmp.eq.s32.totalorder %s46, 7
      %p475 = por %p473, %p474
      %p476 = scmp.ne.s32.totalorder %s467, %s468
      %p477 = scmp.eq.s32.totalorder %s46, 0
      %p478 = por %p476, %p477
      %p479 = scmp.ne.s32.totalorder %s467, %s468
      %p480 = scmp.eq.s32.totalorder %s47, 7
      %p481 = por %p479, %p480
      %p483 = scmp.ne.s32.totalorder %s468, %s482
      %p484 = scmp.eq.s32.totalorder %s47, 0
      %p485 = por %p483, %p484
      %s486 = ssub.s32 %s49, %s56
      %p487 = scmp.eq.s32.totalorder %s486, 0
      %s489 = sadd.s32 %s488, 1
      %s490 = scalar_select %p487, %s488, %s489
      %p493 = pneg %p487
      %p494 = scmp.eq.s32.totalorder %s41, 7
      %p495 = por %p493, %p494
      %p496 = scmp.ne.s32.totalorder %s488, %s491
      %p497 = scmp.eq.s32.totalorder %s41, 0
      %p498 = por %p496, %p497
      %p499 = scmp.ne.s32.totalorder %s488, %s491
      %p500 = scmp.eq.s32.totalorder %s46, 7
      %p501 = por %p499, %p500
      %p502 = scmp.ne.s32.totalorder %s491, %s492
      %p503 = scmp.eq.s32.totalorder %s46, 0
      %p504 = por %p502, %p503
      %p505 = scmp.ne.s32.totalorder %s491, %s492
      %p506 = scmp.eq.s32.totalorder %s47, 7
      %p507 = por %p505, %p506
      %p509 = scmp.ne.s32.totalorder %s492, %s508
      %p510 = scmp.eq.s32.totalorder %s47, 0
      %p511 = por %p509, %p510
      %s512 = ssub.s32 %s49, %s56
      %p513 = scmp.eq.s32.totalorder %s512, 0
      %s515 = sadd.s32 %s514, 1
      %s516 = scalar_select %p513, %s514, %s515
      %p519 = pneg %p513
      %p520 = scmp.eq.s32.totalorder %s41, 7
      %p521 = por %p519, %p520
      %p522 = scmp.ne.s32.totalorder %s514, %s517
      %p523 = scmp.eq.s32.totalorder %s41, 0
      %p524 = por %p522, %p523
      %p525 = scmp.ne.s32.totalorder %s514, %s517
      %p526 = scmp.eq.s32.totalorder %s46, 7
      %p527 = por %p525, %p526
      %p528 = scmp.ne.s32.totalorder %s517, %s518
      %p529 = scmp.eq.s32.totalorder %s46, 0
      %p530 = por %p528, %p529
      %p531 = scmp.ne.s32.totalorder %s517, %s518
      %p532 = scmp.eq.s32.totalorder %s47, 7
      %p533 = por %p531, %p532
      %p535 = scmp.ne.s32.totalorder %s518, %s534
      %p536 = scmp.eq.s32.totalorder %s47, 0
      %p537 = por %p535, %p536
      %s539 = sadd.s32 %s538, 1
      %p542 = scmp.eq.s32.totalorder %s41, 7
      %p543 = scmp.ne.s32.totalorder %s538, %s540
      %p544 = scmp.eq.s32.totalorder %s41, 0
      %p545 = por %p543, %p544
      %p546 = scmp.ne.s32.totalorder %s538, %s540
      %p547 = scmp.eq.s32.totalorder %s46, 7
      %p548 = por %p546, %p547
      %p549 = scmp.ne.s32.totalorder %s540, %s541
      %p550 = scmp.eq.s32.totalorder %s46, 0
      %p551 = por %p549, %p550
      %p552 = scmp.ne.s32.totalorder %s540, %s541
      %p553 = scmp.eq.s32.totalorder %s47, 7
      %p554 = por %p552, %p553
      %p556 = scmp.ne.s32.totalorder %s541, %s555
      %p557 = scmp.eq.s32.totalorder %s47, 0
      %p558 = por %p556, %p557
      %s559 = ssub.s32 %s48, %s60
      %p560 = scmp.eq.s32.totalorder %s559, 0
      %s562 = sadd.s32 %s561, 1
      %s563 = scalar_select %p560, %s561, %s562
      %p566 = pneg %p560
      %p567 = scmp.eq.s32.totalorder %s41, 7
      %p568 = por %p566, %p567
      %p569 = scmp.ne.s32.totalorder %s561, %s564
      %p570 = scmp.eq.s32.totalorder %s41, 0
      %p571 = por %p569, %p570
      %p572 = scmp.ne.s32.totalorder %s561, %s564
      %p573 = scmp.eq.s32.totalorder %s46, 7
      %p574 = por %p572, %p573
      %p575 = scmp.ne.s32.totalorder %s564, %s565
      %p576 = scmp.eq.s32.totalorder %s46, 0
      %p577 = por %p575, %p576
      %p578 = scmp.ne.s32.totalorder %s564, %s565
      %p579 = scmp.eq.s32.totalorder %s47, 7
      %p580 = por %p578, %p579
      %p582 = scmp.ne.s32.totalorder %s565, %s581
      %p583 = scmp.eq.s32.totalorder %s47, 0
      %p584 = por %p582, %p583
      %p585 = scmp.le.s32.totalorder 1, %s41
      %p586 = scmp.lt.s32.totalorder %s41, 9
      %p587 = pnand %p585, %p586
      %p588 = pneg %p587
      // Predicated region
      $region9: #{vocos_gen_forward.1} parent=5 // pred_check
        _
      $region10: #{vocos_gen_forward.1} parent=5 // pred_check_branch
        %590 = sbr.rel (%p587) target = $region12
      $region11: #{vocos_gen_forward.1} parent=5 // pred_region
        %s591 = ssub.s32 %s41, 1
        // Predicated region
        $region13: #{vocos_gen_forward.1} parent=11 // pred_check
          %p592 = pneg %p100
        $region14: #{vocos_gen_forward.1} parent=11 // pred_check_branch
          %594 = sbr.rel (%p592) target = $region16
        $region15: #{vocos_gen_forward.1} parent=11 // pred_region
          _
        $region16: #{vocos_gen_forward.1} parent=11 // pred_fallthru
          _
        // Predicated region
        $region17: #{vocos_gen_forward.1} parent=11 // pred_check
          %p595 = pneg %p121
        $region18: #{vocos_gen_forward.1} parent=11 // pred_check_branch
          %597 = sbr.rel (%p595) target = $region20
        $region19: #{vocos_gen_forward.1} parent=11 // pred_region
          %s599 = ssub.s32 16, 16
          %600 = vsyncadd [#allocation7], %s599
          %s602 = sshll.u32 [#allocation6], 4
          %s603 = int_to_ptr.vmem [resolvable:$true] %s602
          %605 = dma.hbm_to_vmem [thread:$0]  %s2, 16, %s603, [#allocation7]
        $region20: #{vocos_gen_forward.1} parent=11 // pred_fallthru
          _
        // Predicated region
        $region21: #{vocos_gen_forward.1} parent=11 // pred_check
          %p606 = pneg %p142
        $region22: #{vocos_gen_forward.1} parent=11 // pred_check_branch
          %608 = sbr.rel (%p606) target = $region24
        $region23: #{vocos_gen_forward.1} parent=11 // pred_region
          %s610 = ssub.s32 16, 16
          %611 = vsyncadd [#allocation9], %s610
          %s613 = sshll.u32 [#allocation8], 4
          %s614 = int_to_ptr.vmem [resolvable:$true] %s613
          %616 = dma.hbm_to_vmem [thread:$0]  %s3, 16, %s614, [#allocation9]
        $region24: #{vocos_gen_forward.1} parent=11 // pred_fallthru
          _
        // Predicated region
        $region25: #{vocos_gen_forward.1} parent=11 // pred_check
          %p617 = pneg %p163
        $region26: #{vocos_gen_forward.1} parent=11 // pred_check_branch
          %619 = sbr.rel (%p617) target = $region28
        $region27: #{vocos_gen_forward.1} parent=11 // pred_region
          %s621 = ssub.s32 16, 16
          %622 = vsyncadd [#allocation9], %s621
          %s624 = sshll.u32 [#allocation10], 4
          %s625 = int_to_ptr.vmem [resolvable:$true] %s624
          %627 = dma.hbm_to_vmem [thread:$0]  %s4, 16, %s625, [#allocation9]
        $region28: #{vocos_gen_forward.1} parent=11 // pred_fallthru
          _
        // Predicated region
        $region29: #{vocos_gen_forward.1} parent=11 // pred_check
          %p628 = pneg %p184
        $region30: #{vocos_gen_forward.1} parent=11 // pred_check_branch
          %630 = sbr.rel (%p628) target = $region32
        $region31: #{vocos_gen_forward.1} parent=11 // pred_region
          _
        $region32: #{vocos_gen_forward.1} parent=11 // pred_fallthru
          _
        // Predicated region
        $region33: #{vocos_gen_forward.1} parent=11 // pred_check
          %p631 = pneg %p205
        $region34: #{vocos_gen_forward.1} parent=11 // pred_check_branch
          %633 = sbr.rel (%p631) target = $region36
        $region35: #{vocos_gen_forward.1} parent=11 // pred_region
          %s635 = ssub.s32 32, 32
          %636 = vsyncadd [#allocation12], %s635
          %s637 = sshll.u32 [#allocation11], 4
          %s638 = int_to_ptr.vmem [resolvable:$true] %s637
          %643 = dma.hbm_to_vmem [thread:$0]  %s6, 32, %s638, [#allocation12], 16, 16, 1
        $region36: #{vocos_gen_forward.1} parent=11 // pred_fallthru
          _
        // Predicated region
        $region37: #{vocos_gen_forward.1} parent=11 // pred_check
          %p644 = pneg %p226
        $region38: #{vocos_gen_forward.1} parent=11 // pred_check_branch
          %646 = sbr.rel (%p644) target = $region40
        $region39: #{vocos_gen_forward.1} parent=11 // pred_region
          %s648 = ssub.s32 32, 32
          %649 = vsyncadd [#allocation12], %s648
          %s650 = sshll.u32 [#allocation13], 4
          %s651 = int_to_ptr.vmem [resolvable:$true] %s650
          %656 = dma.hbm_to_vmem [thread:$0]  %s7, 32, %s651, [#allocation12], 16, 16, 1
        $region40: #{vocos_gen_forward.1} parent=11 // pred_fallthru
          _
        // Predicated region
        $region41: #{vocos_gen_forward.1} parent=11 // pred_check
          %p657 = pneg %p247
        $region42: #{vocos_gen_forward.1} parent=11 // pred_check_branch
          %659 = sbr.rel (%p657) target = $region44
        $region43: #{vocos_gen_forward.1} parent=11 // pred_region
          %s661 = ssub.s32 32, 32
          %662 = vsyncadd [#allocation15], %s661
          %s663 = sshll.u32 [#allocation14], 4
          %s664 = int_to_ptr.vmem [resolvable:$true] %s663
          %669 = dma.hbm_to_vmem [thread:$0]  %s8, 32, %s664, [#allocation15], 16, 16, 1
        $region44: #{vocos_gen_forward.1} parent=11 // pred_fallthru
          _
        // Predicated region
        $region45: #{vocos_gen_forward.1} parent=11 // pred_check
          %p670 = pneg %p268
        $region46: #{vocos_gen_forward.1} parent=11 // pred_check_branch
          %672 = sbr.rel (%p670) target = $region48
        $region47: #{vocos_gen_forward.1} parent=11 // pred_region
          %s674 = ssub.s32 1024, 1024
          %675 = vsyncadd [#allocation15], %s674
          %s676 = sshll.u32 [#allocation16], 4
          %s677 = int_to_ptr.vmem [resolvable:$true] %s676
          %682 = dma.hbm_to_vmem [thread:$0]  %s9, 1024, %s677, [#allocation15], 128, 128, 8
        $region48: #{vocos_gen_forward.1} parent=11 // pred_fallthru
          _
        // Predicated region
        $region49: #{vocos_gen_forward.1} parent=11 // pred_check
          %p683 = pneg %p289
        $region50: #{vocos_gen_forward.1} parent=11 // pred_check_branch
          %685 = sbr.rel (%p683) target = $region52
        $region51: #{vocos_gen_forward.1} parent=11 // pred_region
          %s687 = ssub.s32 32, 32
          %688 = vsyncadd [#allocation18], %s687
          %s689 = sshll.u32 [#allocation17], 4
          %s690 = int_to_ptr.vmem [resolvable:$true] %s689
          %695 = dma.hbm_to_vmem [thread:$0]  %s10, 32, %s690, [#allocation18], 16, 16, 1
        $region52: #{vocos_gen_forward.1} parent=11 // pred_fallthru
          _
        // Predicated region
        $region53: #{vocos_gen_forward.1} parent=11 // pred_check
          %p696 = pneg %p310
        $region54: #{vocos_gen_forward.1} parent=11 // pred_check_branch
          %698 = sbr.rel (%p696) target = $region56
        $region55: #{vocos_gen_forward.1} parent=11 // pred_region
          _
        $region56: #{vocos_gen_forward.1} parent=11 // pred_fallthru
          _
        // Predicated region
        $region57: #{vocos_gen_forward.1} parent=11 // pred_check
          %p699 = pneg %p331
        $region58: #{vocos_gen_forward.1} parent=11 // pred_check_branch
          %701 = sbr.rel (%p699) target = $region60
        $region59: #{vocos_gen_forward.1} parent=11 // pred_region
          %s703 = ssub.s32 32, 32
          %704 = vsyncadd [#allocation18], %s703
          %s705 = sshll.u32 [#allocation19], 4
          %s706 = int_to_ptr.vmem [resolvable:$true] %s705
          %711 = dma.hbm_to_vmem [thread:$0]  %s12, 32, %s706, [#allocation18], 16, 16, 1
        $region60: #{vocos_gen_forward.1} parent=11 // pred_fallthru
          _
        // Predicated region
        $region61: #{vocos_gen_forward.1} parent=11 // pred_check
          %p712 = pneg %p352
        $region62: #{vocos_gen_forward.1} parent=11 // pred_check_branch
          %714 = sbr.rel (%p712) target = $region64
        $region63: #{vocos_gen_forward.1} parent=11 // pred_region
          %s716 = ssub.s32 32, 32
          %717 = vsyncadd [#allocation21], %s716
          %s718 = sshll.u32 [#allocation20], 4
          %s719 = int_to_ptr.vmem [resolvable:$true] %s718
          %724 = dma.hbm_to_vmem [thread:$0]  %s13, 32, %s719, [#allocation21], 16, 16, 1
        $region64: #{vocos_gen_forward.1} parent=11 // pred_fallthru
          _
        // Predicated region
        $region65: #{vocos_gen_forward.1} parent=11 // pred_check
          %p725 = pneg %p373
        $region66: #{vocos_gen_forward.1} parent=11 // pred_check_branch
          %727 = sbr.rel (%p725) target = $region68
        $region67: #{vocos_gen_forward.1} parent=11 // pred_region
          %s729 = ssub.s32 16, 16
          %730 = vsyncadd [#allocation21], %s729
          %s732 = sshll.u32 [#allocation22], 4
          %s733 = int_to_ptr.vmem [resolvable:$true] %s732
          %735 = dma.hbm_to_vmem [thread:$0]  %s14, 16, %s733, [#allocation21]
        $region68: #{vocos_gen_forward.1} parent=11 // pred_fallthru
          _
        // Predicated region
        $region69: #{vocos_gen_forward.1} parent=11 // pred_check
          %p736 = pneg %p394
        $region70: #{vocos_gen_forward.1} parent=11 // pred_check_branch
          %738 = sbr.rel (%p736) target = $region72
        $region71: #{vocos_gen_forward.1} parent=11 // pred_region
          %s740 = ssub.s32 16, 16
          %741 = vsyncadd [#allocation24], %s740
          %s743 = sshll.u32 [#allocation23], 4
          %s744 = int_to_ptr.vmem [resolvable:$true] %s743
          %746 = dma.hbm_to_vmem [thread:$0]  %s15, 16, %s744, [#allocation24]
        $region72: #{vocos_gen_forward.1} parent=11 // pred_fallthru
          _
        // Predicated region
        $region73: #{vocos_gen_forward.1} parent=11 // pred_check
          %p747 = pneg %p415
        $region74: #{vocos_gen_forward.1} parent=11 // pred_check_branch
          %749 = sbr.rel (%p747) target = $region76
        $region75: #{vocos_gen_forward.1} parent=11 // pred_region
          %s751 = ssub.s32 2048, 2048
          %752 = vsyncadd [#allocation24], %s751
          %s753 = sshll.u32 [#allocation25], 4
          %s754 = int_to_ptr.vmem [resolvable:$true] %s753
          %759 = dma.hbm_to_vmem [thread:$0]  %s16, 2048, %s754, [#allocation24], 512, 512, 32
        $region76: #{vocos_gen_forward.1} parent=11 // pred_fallthru
          _
        // Predicated region
        $region77: #{vocos_gen_forward.1} parent=11 // pred_check
          %p760 = pneg %p436
        $region78: #{vocos_gen_forward.1} parent=11 // pred_check_branch
          %762 = sbr.rel (%p760) target = $region80
        $region79: #{vocos_gen_forward.1} parent=11 // pred_region
          %s764 = ssub.s32 128, 128
          %765 = vsyncadd [#allocation27], %s764
          %s767 = sshll.u32 [#allocation26], 4
          %s768 = int_to_ptr.vmem [resolvable:$true] %s767
          %770 = dma.hbm_to_vmem [thread:$0]  %s17, 128, %s768, [#allocation27]
        $region80: #{vocos_gen_forward.1} parent=11 // pred_fallthru
          _
        // Predicated region
        $region81: #{vocos_gen_forward.1} parent=11 // pred_check
          %p771 = pneg %p457
        $region82: #{vocos_gen_forward.1} parent=11 // pred_check_branch
          %773 = sbr.rel (%p771) target = $region84
        $region83: #{vocos_gen_forward.1} parent=11 // pred_region
          %s775 = ssub.s32 32, 32
          %776 = vsyncadd [#allocation27], %s775
          %s778 = sshll.u32 [#allocation28], 4
          %s779 = int_to_ptr.vmem [resolvable:$true] %s778
          %781 = dma.hbm_to_vmem [thread:$0]  %s18, 32, %s779, [#allocation27]
        $region84: #{vocos_gen_forward.1} parent=11 // pred_fallthru
          _
        // Predicated region
        $region85: #{vocos_gen_forward.1} parent=11 // pred_check
          %p782 = pneg %p478
        $region86: #{vocos_gen_forward.1} parent=11 // pred_check_branch
          %784 = sbr.rel (%p782) target = $region88
        $region87: #{vocos_gen_forward.1} parent=11 // pred_region
          _
        $region88: #{vocos_gen_forward.1} parent=11 // pred_fallthru
          _
        // Predicated region
        $region89: #{vocos_gen_forward.1} parent=11 // pred_check
          %p785 = pneg %p551
        $region90: #{vocos_gen_forward.1} parent=11 // pred_check_branch
          %787 = sbr.rel (%p785) target = $region92
        $region91: #{vocos_gen_forward.1} parent=11 // pred_region
          %s789 = ssub.s32 512, 512
          %790 = vsyncadd [#allocation33], %s789
          %s791 = sshll.u32 [#allocation32], 4
          %s792 = int_to_ptr.vmem [resolvable:$true] %s791
          %797 = dma.hbm_to_vmem [thread:$0]  %s22, 512, %s792, [#allocation33], 256, 256, 16
        $region92: #{vocos_gen_forward.1} parent=11 // pred_fallthru
          _
      $region12: #{vocos_gen_forward.1} parent=5 // pred_fallthru
        _
      %p798 = scmp.lt.s32.totalorder %s41, 8
      // Predicated region
      $region93: #{vocos_gen_forward.1} parent=5 // pred_check
        %p799 = pneg %p798
      $region94: #{vocos_gen_forward.1} parent=5 // pred_check_branch
        %801 = sbr.rel (%p799) target = $region96
      $region95: #{vocos_gen_forward.1} parent=5 // pred_region
        // Predicated region
        $region97: #{vocos_gen_forward.1} parent=95 // pred_check
          %p802 = pneg %p73
        $region98: #{vocos_gen_forward.1} parent=95 // pred_check_branch
          %804 = sbr.rel (%p802) target = $region100
        $region99: #{vocos_gen_forward.1} parent=95 // pred_region
          %p805 = scmp.lt.s32.totalorder %s48, 1
          %s806 = scalar_select %p805, %s48, 1
          %s807 = smul.addr %s806, 8
          %s808 = scalar_lea.vmem %s0, %s807
        $region100: #{vocos_gen_forward.1} parent=95 // pred_fallthru
          _
        // Predicated region
        $region101: #{vocos_gen_forward.1} parent=95 // pred_check
          %p809 = pneg %p498
        $region102: #{vocos_gen_forward.1} parent=95 // pred_check_branch
          %811 = sbr.rel (%p809) target = $region104
        $region103: #{vocos_gen_forward.1} parent=95 // pred_region
          %s812 = sand.u32 %s41, 1
          %s813 = scalar_lea.sflag [#allocation30], %s812
          %s814 = sand.u32 %s488, 1
          %s815 = smul.addr %s814, 1024
          %s816 = scalar_lea.vmem [#allocation29], %s815
          %s817 = smul.u32 2, %s49
          %s819 = ssub.s32 16384, 16384
          %820 = vsyncadd %s813, %s819
          %s821 = smul.addr %s817, 64
          %s822 = scalar_lea.hbm %s20, %s821
          %s823 = sshll.u32 %s816, 4
          %s824 = int_to_ptr.vmem [resolvable:$true] %s823
          %829 = dma.hbm_to_vmem [thread:$0]  %s822, 16384, %s824, %s813, 512, 128, 8
        $region104: #{vocos_gen_forward.1} parent=95 // pred_fallthru
          _
        // Predicated region
        $region105: #{vocos_gen_forward.1} parent=95 // pred_check
          %p830 = pneg %p524
        $region106: #{vocos_gen_forward.1} parent=95 // pred_check_branch
          %832 = sbr.rel (%p830) target = $region108
        $region107: #{vocos_gen_forward.1} parent=95 // pred_region
          %s833 = sand.u32 %s41, 1
          %s834 = scalar_lea.sflag [#allocation30], %s833
          %s835 = sand.u32 %s514, 1
          %s836 = smul.addr %s835, 2
          %s837 = scalar_lea.vmem [#allocation31], %s836
          %s838 = smul.u32 2, %s49
          %s840 = ssub.s32 32, 32
          %841 = vsyncadd %s834, %s840
          %s842 = smul.addr %s838, 16
          %s843 = scalar_lea.hbm %s21, %s842
          %s845 = sshll.u32 %s837, 4
          %s846 = int_to_ptr.vmem [resolvable:$true] %s845
          %848 = dma.hbm_to_vmem [thread:$0]  %s843, 32, %s846, %s834
        $region108: #{vocos_gen_forward.1} parent=95 // pred_fallthru
          _
      $region96: #{vocos_gen_forward.1} parent=5 // pred_fallthru
        _
      %p849 = scmp.le.s32.totalorder 1, %s41
      %p850 = scmp.lt.s32.totalorder %s41, 9
      %p851 = pnand %p849, %p850
      %p852 = pneg %p851
      // Predicated region
      $region109: #{vocos_gen_forward.1} parent=5 // pred_check
        _
      $region110: #{vocos_gen_forward.1} parent=5 // pred_check_branch
        %854 = sbr.rel (%p851) target = $region112
      $region111: #{vocos_gen_forward.1} parent=5 // pred_region
        %s855 = ssub.s32 %s41, 1
        // Predicated region
        $region113: #{vocos_gen_forward.1} parent=111 // pred_check
          %p856 = pneg %p121
        $region114: #{vocos_gen_forward.1} parent=111 // pred_check_branch
          %858 = sbr.rel (%p856) target = $region116
        $region115: #{vocos_gen_forward.1} parent=111 // pred_region
          %859 = dma.done [#allocation7], 16
        $region116: #{vocos_gen_forward.1} parent=111 // pred_fallthru
          _
        // Predicated region
        $region117: #{vocos_gen_forward.1} parent=111 // pred_check
          %p860 = pneg %p142
        $region118: #{vocos_gen_forward.1} parent=111 // pred_check_branch
          %862 = sbr.rel (%p860) target = $region120
        $region119: #{vocos_gen_forward.1} parent=111 // pred_region
          %863 = dma.done [#allocation9], 16
        $region120: #{vocos_gen_forward.1} parent=111 // pred_fallthru
          _
        // Predicated region
        $region121: #{vocos_gen_forward.1} parent=111 // pred_check
          %p864 = pneg %p163
        $region122: #{vocos_gen_forward.1} parent=111 // pred_check_branch
          %866 = sbr.rel (%p864) target = $region124
        $region123: #{vocos_gen_forward.1} parent=111 // pred_region
          %867 = dma.done [#allocation9], 16
        $region124: #{vocos_gen_forward.1} parent=111 // pred_fallthru
          _
        // Predicated region
        $region125: #{vocos_gen_forward.1} parent=111 // pred_check
          %p868 = pneg %p205
        $region126: #{vocos_gen_forward.1} parent=111 // pred_check_branch
          %870 = sbr.rel (%p868) target = $region128
        $region127: #{vocos_gen_forward.1} parent=111 // pred_region
          %871 = dma.done [#allocation12], 32
        $region128: #{vocos_gen_forward.1} parent=111 // pred_fallthru
          _
        // Predicated region
        $region129: #{vocos_gen_forward.1} parent=111 // pred_check
          %p872 = pneg %p226
        $region130: #{vocos_gen_forward.1} parent=111 // pred_check_branch
          %874 = sbr.rel (%p872) target = $region132
        $region131: #{vocos_gen_forward.1} parent=111 // pred_region
          %875 = dma.done [#allocation12], 32
        $region132: #{vocos_gen_forward.1} parent=111 // pred_fallthru
          _
        // Predicated region
        $region133: #{vocos_gen_forward.1} parent=111 // pred_check
          %p876 = pneg %p247
        $region134: #{vocos_gen_forward.1} parent=111 // pred_check_branch
          %878 = sbr.rel (%p876) target = $region136
        $region135: #{vocos_gen_forward.1} parent=111 // pred_region
          %879 = dma.done [#allocation15], 32
        $region136: #{vocos_gen_forward.1} parent=111 // pred_fallthru
          _
        // Predicated region
        $region137: #{vocos_gen_forward.1} parent=111 // pred_check
          %p880 = pneg %p268
        $region138: #{vocos_gen_forward.1} parent=111 // pred_check_branch
          %882 = sbr.rel (%p880) target = $region140
        $region139: #{vocos_gen_forward.1} parent=111 // pred_region
          %883 = dma.done [#allocation15], 1024
        $region140: #{vocos_gen_forward.1} parent=111 // pred_fallthru
          _
        // Predicated region
        $region141: #{vocos_gen_forward.1} parent=111 // pred_check
          %p884 = pneg %p289
        $region142: #{vocos_gen_forward.1} parent=111 // pred_check_branch
          %886 = sbr.rel (%p884) target = $region144
        $region143: #{vocos_gen_forward.1} parent=111 // pred_region
          %887 = dma.done [#allocation18], 32
        $region144: #{vocos_gen_forward.1} parent=111 // pred_fallthru
          _
        // Predicated region
        $region145: #{vocos_gen_forward.1} parent=111 // pred_check
          %p888 = pneg %p331
        $region146: #{vocos_gen_forward.1} parent=111 // pred_check_branch
          %890 = sbr.rel (%p888) target = $region148
        $region147: #{vocos_gen_forward.1} parent=111 // pred_region
          %891 = dma.done [#allocation18], 32
        $region148: #{vocos_gen_forward.1} parent=111 // pred_fallthru
          _
        // Predicated region
        $region149: #{vocos_gen_forward.1} parent=111 // pred_check
          %p892 = pneg %p352
        $region150: #{vocos_gen_forward.1} parent=111 // pred_check_branch
          %894 = sbr.rel (%p892) target = $region152
        $region151: #{vocos_gen_forward.1} parent=111 // pred_region
          %895 = dma.done [#allocation21], 32
        $region152: #{vocos_gen_forward.1} parent=111 // pred_fallthru
          _
        // Predicated region
        $region153: #{vocos_gen_forward.1} parent=111 // pred_check
          %p896 = pneg %p373
        $region154: #{vocos_gen_forward.1} parent=111 // pred_check_branch
          %898 = sbr.rel (%p896) target = $region156
        $region155: #{vocos_gen_forward.1} parent=111 // pred_region
          %899 = dma.done [#allocation21], 16
        $region156: #{vocos_gen_forward.1} parent=111 // pred_fallthru
          _
        // Predicated region
        $region157: #{vocos_gen_forward.1} parent=111 // pred_check
          %p900 = pneg %p394
        $region158: #{vocos_gen_forward.1} parent=111 // pred_check_branch
          %902 = sbr.rel (%p900) target = $region160
        $region159: #{vocos_gen_forward.1} parent=111 // pred_region
          %903 = dma.done [#allocation24], 16
        $region160: #{vocos_gen_forward.1} parent=111 // pred_fallthru
          _
        // Predicated region
        $region161: #{vocos_gen_forward.1} parent=111 // pred_check
          %p904 = pneg %p415
        $region162: #{vocos_gen_forward.1} parent=111 // pred_check_branch
          %906 = sbr.rel (%p904) target = $region164
        $region163: #{vocos_gen_forward.1} parent=111 // pred_region
          %907 = dma.done [#allocation24], 2048
        $region164: #{vocos_gen_forward.1} parent=111 // pred_fallthru
          _
        // Predicated region
        $region165: #{vocos_gen_forward.1} parent=111 // pred_check
          %p908 = pneg %p436
        $region166: #{vocos_gen_forward.1} parent=111 // pred_check_branch
          %910 = sbr.rel (%p908) target = $region168
        $region167: #{vocos_gen_forward.1} parent=111 // pred_region
          %911 = dma.done [#allocation27], 128
        $region168: #{vocos_gen_forward.1} parent=111 // pred_fallthru
          _
        // Predicated region
        $region169: #{vocos_gen_forward.1} parent=111 // pred_check
          %p912 = pneg %p457
        $region170: #{vocos_gen_forward.1} parent=111 // pred_check_branch
          %914 = sbr.rel (%p912) target = $region172
        $region171: #{vocos_gen_forward.1} parent=111 // pred_region
          %915 = dma.done [#allocation27], 32
        $region172: #{vocos_gen_forward.1} parent=111 // pred_fallthru
          _
        %s916 = sand.u32 %s46, 1
        %s917 = scalar_lea.sflag [#allocation30], %s916
        %s918 = sand.u32 %s491, 1
        %s919 = smul.addr %s918, 1024
        %s920 = scalar_lea.vmem [#allocation29], %s919
        // Predicated region
        $region173: #{vocos_gen_forward.1} parent=111 // pred_check
          %p921 = pneg %p504
        $region174: #{vocos_gen_forward.1} parent=111 // pred_check_branch
          %923 = sbr.rel (%p921) target = $region176
        $region175: #{vocos_gen_forward.1} parent=111 // pred_region
          %924 = dma.done %s917, 16384
        $region176: #{vocos_gen_forward.1} parent=111 // pred_fallthru
          _
        %s925 = sand.u32 %s46, 1
        %s926 = scalar_lea.sflag [#allocation30], %s925
        %s927 = sand.u32 %s517, 1
        %s928 = smul.addr %s927, 2
        %s929 = scalar_lea.vmem [#allocation31], %s928
        // Predicated region
        $region177: #{vocos_gen_forward.1} parent=111 // pred_check
          %p930 = pneg %p530
        $region178: #{vocos_gen_forward.1} parent=111 // pred_check_branch
          %932 = sbr.rel (%p930) target = $region180
        $region179: #{vocos_gen_forward.1} parent=111 // pred_region
          %933 = dma.done %s926, 32
        $region180: #{vocos_gen_forward.1} parent=111 // pred_fallthru
          _
        // Predicated region
        $region181: #{vocos_gen_forward.1} parent=111 // pred_check
          %p934 = pneg %p551
        $region182: #{vocos_gen_forward.1} parent=111 // pred_check_branch
          %936 = sbr.rel (%p934) target = $region184
        $region183: #{vocos_gen_forward.1} parent=111 // pred_region
          %937 = dma.done [#allocation33], 512
        $region184: #{vocos_gen_forward.1} parent=111 // pred_fallthru
          _
        %p938 = scmp.lt.s32.totalorder %s50, 1
        %s939 = scalar_select %p938, %s50, 1
        %s940 = smul.addr %s939, 8
        %s941 = scalar_lea.vmem %s0, %s940
        %p942 = pneg %p79
        %p943 = pneg %p76
        %p944 = pneg %p100
        %p945 = pneg %p97
        %p946 = pneg %p121
        %p947 = pneg %p118
        %p948 = pneg %p142
        %p949 = pneg %p139
        %p950 = pneg %p163
        %p951 = pneg %p160
        %p952 = pneg %p184
        %p953 = pneg %p181
        %p954 = pneg %p205
        %p955 = pneg %p202
        %p956 = pneg %p226
        %p957 = pneg %p223
        %p958 = pneg %p247
        %p959 = pneg %p244
        %p960 = pneg %p268
        %p961 = pneg %p265
        %p962 = pneg %p289
        %p963 = pneg %p286
        %p964 = pneg %p310
        %p965 = pneg %p307
        %p966 = pneg %p331
        %p967 = pneg %p328
        %p968 = pneg %p352
        %p969 = pneg %p349
        %p970 = pneg %p373
        %p971 = pneg %p370
        %p972 = pneg %p394
        %p973 = pneg %p391
        %p974 = pneg %p415
        %p975 = pneg %p412
        %p976 = pneg %p436
        %p977 = pneg %p433
        %p978 = pneg %p457
        %p979 = pneg %p454
        %p980 = pneg %p478
        %p981 = pneg %p475
        %s982 = sand.u32 %s46, 1
        %s983 = scalar_lea.sflag [#allocation30], %s982
        %s984 = sand.u32 %s491, 1
        %s985 = smul.addr %s984, 1024
        %s986 = scalar_lea.vmem [#allocation29], %s985
        %p987 = pneg %p504
        %p988 = pneg %p501
        %s989 = sand.u32 %s46, 1
        %s990 = scalar_lea.sflag [#allocation30], %s989
        %s991 = sand.u32 %s517, 1
        %s992 = smul.addr %s991, 2
        %s993 = scalar_lea.vmem [#allocation31], %s992
        %p994 = pneg %p530
        %p995 = pneg %p527
        %p996 = pneg %p551
        %p997 = pneg %p548
        %p998 = pneg %p577
        %p999 = pneg %p574
        %s1000 = smul.u32 2, %s50
        %p1001 = scmp.lt.s32.totalorder %s1000, 3
        %s1002 = scalar_select %p1001, %s1000, 3
        %s1003 = smul.addr %s1002, 2
        %s1004 = smul.addr %s1003, 8
        %s1005 = scalar_lea.vmem %s23, %s1004
        %p1006 = scmp.lt.s32.totalorder %s50, 1
        %s1007 = scalar_select %p1006, %s50, 1
        %s1008 = smul.addr %s1007, 8
        %s1009 = scalar_lea.vmem %s0, %s1008
        %s1010 = smul.u32 2, %s51
        %s1011 = smul.u32 2, %s51
        %s1012 = smul.u32 2, %s50
        %p1013 = scmp.lt.s32.totalorder %s1012, 3
        %s1014 = scalar_select %p1013, %s1012, 3
        %s1015 = smul.addr %s1014, 2
        %s1016 = smul.addr %s1015, 8
        %s1017 = scalar_lea.vmem %s23, %s1016
        %s1018 = smul.u32 2, %s50
        %p1020 = scmp.eq.s32.totalorder %s51, 0
        // Predicated region
        $region185: #{vocos_gen_forward.1} parent=111 // pred_check
          %p1021 = pneg %p1020
        $region186: #{vocos_gen_forward.1} parent=111 // pred_check_branch
          %1023 = sbr.rel (%p1021) target = $region188
        $region187: #{vocos_gen_forward.1} parent=111 // pred_region
          %v1024 = vld [vmem:[%s1009] sm:$0xff]
          %v1025 = vld [vmem:[%s1] sm:$0xff]
          %v1026 = vld [vmem:[%s1 + $0x8] sm:$0xff]
          %v1027 = vld [vmem:[%s1 + $0x10] sm:$0xff]
          %v1028 = vld [vmem:[%s1 + $0x18] sm:$0xff]
          %v1029 = vld [vmem:[%s1 + $0x20] sm:$0xff]
          %v1030 = vld [vmem:[%s1 + $0x28] sm:$0xff]
          %v1031 = vld [vmem:[%s1 + $0x30] sm:$0xff]
          %v1032 = vld [vmem:[%s1 + $0x38] sm:$0xff]
          %v1033 = vld [vmem:[#allocation6] sm:$0x1]
          %v1035 = vlaneseq
          %v1036 = vshrl.u32 %v1035, 7
          %v1037 = vsub.s32 0, %v1036
          %v1038 = vrot.slane %v1033, %v1037
          %vm1040 = vcmask 523264
          %v1042 = vsel %vm1040, %v1024, 0
          %1044 = vmatprep.subr.mxu0 0.0
          %1045 = vmatpush1.msra.mxu0 %v1025
          %1046 = vmatprep.subr.mxu0 0.0
          %1047 = vmatpush1.msra.mxu0 %v1026
          %1048 = vmatprep.subr.mxu0 0.0
          %1049 = vmatpush1.msra.mxu0 %v1027
          %1050 = vmatprep.subr.mxu0 0.0
          %1051 = vmatpush1.msra.mxu0 %v1028
          %1052 = vmatprep.subr.mxu0 0.0
          %1053 = vmatpush1.msra.mxu0 %v1029
          %1054 = vmatprep.subr.mxu0 0.0
          %1055 = vmatpush1.msra.mxu0 %v1030
          %1056 = vmatprep.subr.mxu0 0.0
          %1057 = vmatpush1.msra.mxu0 %v1031
          %1058 = vmatprep.subr.mxu0 0.0
          %1059 = vmatpush1.msra.mxu0 %v1032
          %1060 = vmatprep.subr.mxu0 0.0
          %1061 = vmatpush1.msra.mxu0 0.0
          %1062 = vmatprep.subr.mxu0 0.0
          %1063 = vmatpush1.msra.mxu0 0.0
          %1064 = vmatprep.subr.mxu0 0.0
          %1065 = vmatpush1.msra.mxu0 0.0
          %1066 = vmatprep.subr.mxu0 0.0
          %1067 = vmatpush1.msra.mxu0 0.0
          %1068 = vmatprep.subr.mxu0 0.0
          %1069 = vmatpush1.msra.mxu0 0.0
          %1070 = vmatprep.subr.mxu0 0.0
          %1071 = vmatpush1.msra.mxu0 0.0
          %1072 = vmatprep.subr.mxu0 0.0
          %1073 = vmatpush1.msra.mxu0 0.0
          %1074 = vmatprep.subr.mxu0 0.0
          %1075 = vmatpush1.msra.mxu0 0.0
          %1076 = vmatprep.subr.mxu0 0.0
          %1077 = vmatpush1.msra.mxu0 0.0
          %1078 = vmatprep.subr.mxu0 0.0
          %1079 = vmatpush1.msra.mxu0 0.0
          %1080 = vmatprep.subr.mxu0 0.0
          %1081 = vmatpush1.msra.mxu0 0.0
          %1082 = vmatprep.subr.mxu0 0.0
          %1083 = vmatpush1.msra.mxu0 0.0
          %1084 = vmatprep.subr.mxu0 0.0
          %1085 = vmatpush1.msra.mxu0 0.0
          %1086 = vmatprep.subr.mxu0 0.0
          %1087 = vmatpush1.msra.mxu0 0.0
          %1088 = vmatprep.subr.mxu0 0.0
          %1089 = vmatpush1.msra.mxu0 0.0
          %1090 = vmatprep.subr.mxu0 0.0
          %1091 = vmatpush1.msra.mxu0 0.0
          %1092 = vmatprep.subr.mxu0 0.0
          %1093 = vmatpush1.msra.mxu0 0.0
          %1094 = vmatprep.subr.mxu0 0.0
          %1095 = vmatpush1.msra.mxu0 0.0
          %1096 = vmatprep.subr.mxu0 0.0
          %1097 = vmatpush1.msra.mxu0 0.0
          %1098 = vmatprep.subr.mxu0 0.0
          %1099 = vmatpush1.msra.mxu0 0.0
          %1100 = vmatprep.subr.mxu0 0.0
          %1101 = vmatpush1.msra.mxu0 0.0
          %1102 = vmatprep.subr.mxu0 0.0
          %1103 = vmatpush1.msra.mxu0 0.0
          %1104 = vmatprep.subr.mxu0 0.0
          %1105 = vmatpush1.msra.mxu0 0.0
          %1106 = vmatprep.subr.mxu0 0.0
          %1107 = vmatpush1.msra.mxu0 0.0
          %1108 = vmatprep.mubr.f32.mxu0 0.0
          %1109 = vmatmul.mubr.f32.gmra.mrb[0].mxu0 %v1042
          %v1110 = vpop.f32.mrb[0].mxu0
          %v1111 = vadd.f32 %v1038, %v1110
          %v1112 = vpop.f32.mrb[0].mxu0
          %1113 = vdwg.mxu0
          %v1114 = vld [vmem:[#allocation8] sm:$0x1]
          %v1115 = vld [vmem:[#allocation10] sm:$0x1]
          %vm1116 = vcmask 261120
          %v1117 = vsel %vm1116, %v1111, 0.0
          %1118 = vadd.xlane.f32.xlu0 %v1117
          %v1119 = vpop.xlane.xlu0 %1118
          %v1120 = vrcp.pop 32.0
          %v1121 = vmul.f32 %v1119, %v1120
          %v1122 = vsub.f32 %v1111, %v1121
          %v1123 = vmul.f32 %v1122, %v1122
          %v1124 = vsel %vm1116, %v1123, 0.0
          %1125 = vadd.xlane.f32.xlu0 %v1124
          %v1126 = vpop.xlane.xlu0 %1125
          %v1127 = vmul.f32 %v1126, %v1120
          %v1128 = vadd.f32 %v1127, 1e-06
          %v1129 = vrsqrt.pop %v1128
          %v1130 = vmul.f32 %v1122, %v1129
          %v1132 = vlaneseq
          %v1133 = vshrl.u32 %v1132, 7
          %v1134 = vsub.s32 0, %v1133
          %v1135 = vrot.slane %v1114, %v1134
          %v1137 = vmul.f32 %v1130, %v1135
          %v1139 = vlaneseq
          %v1140 = vshrl.u32 %v1139, 7
          %v1141 = vsub.s32 0, %v1140
          %v1142 = vrot.slane %v1115, %v1141
          %v1144 = vadd.f32 %v1137, %v1142
          %v1145 = vlaneseq
          %v1146 = vshrl.u32 %v1145, 7
          %v1147 = vld [vmem:[%s5] sm:$0x7f]
          %v1148 = vlaneseq
          %v1149 = vshrl.u32 %v1148, 7
          %v1150 = vsub.s32 3, %v1149
          %v1151 = vrot.slane %v1147, %v1150
          %v1152 = vmul.f32 %v1144, %v1151
          %v1153 = vrot.slane %v1144, 5
          %vm1154 = vcmp.ge.s32.totalorder %v1146, 3
          %v1155 = vsel %vm1154, %v1153, 0.0
          %v1156 = vlaneseq
          %v1157 = vshrl.u32 %v1156, 7
          %v1158 = vsub.s32 0, %v1157
          %v1159 = vrot.slane %v1147, %v1158
          %v1160 = vmul.f32 %v1155, %v1159
          %v1161 = vadd.f32 %v1152, %v1160
          %v1162 = vrot.slane %v1144, 6
          %vm1163 = vcmp.ge.s32.totalorder %v1146, 2
          %v1164 = vsel %vm1163, %v1162, 0.0
          %v1165 = vlaneseq
          %v1166 = vshrl.u32 %v1165, 7
          %v1167 = vsub.s32 1, %v1166
          %v1168 = vrot.slane %v1147, %v1167
          %v1169 = vmul.f32 %v1164, %v1168
          %v1170 = vadd.f32 %v1161, %v1169
          %v1171 = vrot.slane %v1144, 7
          %vm1172 = vcmp.ge.s32.totalorder %v1146, 1
          %v1173 = vsel %vm1172, %v1171, 0.0
          %v1174 = vlaneseq
          %v1175 = vshrl.u32 %v1174, 7
          %v1176 = vsub.s32 2, %v1175
          %v1177 = vrot.slane %v1147, %v1176
          %v1178 = vmul.f32 %v1173, %v1177
          %v1179 = vadd.f32 %v1170, %v1178
          %v1180 = vrot.slane %v1144, 1
          %vm1181 = vcmp.lt.s32.totalorder %v1146, 7
          %v1182 = vsel %vm1181, %v1180, 0.0
          %v1183 = vlaneseq
          %v1184 = vshrl.u32 %v1183, 7
          %v1185 = vsub.s32 4, %v1184
          %v1186 = vrot.slane %v1147, %v1185
          %v1187 = vmul.f32 %v1182, %v1186
          %v1188 = vadd.f32 %v1179, %v1187
          %v1189 = vrot.slane %v1144, 2
          %vm1190 = vcmp.lt.s32.totalorder %v1146, 6
          %v1191 = vsel %vm1190, %v1189, 0.0
          %v1192 = vlaneseq
          %v1193 = vshrl.u32 %v1192, 7
          %v1194 = vsub.s32 5, %v1193
          %v1195 = vrot.slane %v1147, %v1194
          %v1196 = vmul.f32 %v1191, %v1195
          %v1197 = vadd.f32 %v1188, %v1196
          %v1198 = vrot.slane %v1144, 3
          %vm1199 = vcmp.lt.s32.totalorder %v1146, 5
          %v1200 = vsel %vm1199, %v1198, 0.0
          %v1201 = vlaneseq
          %v1202 = vshrl.u32 %v1201, 7
          %v1203 = vsub.s32 6, %v1202
          %v1204 = vrot.slane %v1147, %v1203
          %v1205 = vmul.f32 %v1200, %v1204
          %v1206 = vadd.f32 %v1197, %v1205
          %v1207 = vld [vmem:[#allocation11] sm:$0x1]
          %v1209 = vlaneseq
          %v1210 = vshrl.u32 %v1209, 7
          %v1211 = vsub.s32 0, %v1210
          %v1212 = vrot.slane %v1207, %v1211
          %v1214 = vadd.f32 %v1206, %v1212
          %v1215 = vld [vmem:[#allocation13] sm:$0x1]
          %v1216 = vld [vmem:[#allocation14] sm:$0x1]
          %v1217 = vsel %vm1116, %v1214, 0.0
          %1218 = vadd.xlane.f32.xlu0 %v1217
          %v1219 = vpop.xlane.xlu0 %1218
          %v1220 = vmul.f32 %v1219, %v1120
          %v1221 = vsub.f32 %v1214, %v1220
          %v1222 = vmul.f32 %v1221, %v1221
          %v1223 = vsel %vm1116, %v1222, 0.0
          %1224 = vadd.xlane.f32.xlu0 %v1223
          %v1225 = vpop.xlane.xlu0 %1224
          %v1226 = vmul.f32 %v1225, %v1120
          %v1227 = vadd.f32 %v1226, 1e-06
          %v1228 = vrsqrt.pop %v1227
          %v1229 = vmul.f32 %v1221, %v1228
          %v1231 = vlaneseq
          %v1232 = vshrl.u32 %v1231, 7
          %v1233 = vsub.s32 0, %v1232
          %v1234 = vrot.slane %v1215, %v1233
          %v1236 = vmul.f32 %v1229, %v1234
          %v1238 = vlaneseq
          %v1239 = vshrl.u32 %v1238, 7
          %v1240 = vsub.s32 0, %v1239
          %v1241 = vrot.slane %v1216, %v1240
          %v1243 = vadd.f32 %v1236, %v1241
          %v1244 = vld [vmem:[#allocation16] sm:$0xff]
          %v1245 = vld [vmem:[#allocation16 + $0x8] sm:$0xff]
          %v1246 = vld [vmem:[#allocation16 + $0x10] sm:$0xff]
          %v1247 = vld [vmem:[#allocation16 + $0x18] sm:$0xff]
          %v1248 = vld [vmem:[#allocation17] sm:$0x1]
          %v1250 = vlaneseq
          %v1251 = vshrl.u32 %v1250, 7
          %v1252 = vsub.s32 0, %v1251
          %v1253 = vrot.slane %v1248, %v1252
          %v1256 = vsel %vm1116, %v1243, 0
          %1258 = vmatprep.subr.mxu0 0.0
          %1259 = vmatpush1.msra.mxu0 %v1244
          %1260 = vmatprep.subr.mxu0 0.0
          %1261 = vmatpush1.msra.mxu0 %v1245
          %1262 = vmatprep.subr.mxu0 0.0
          %1263 = vmatpush1.msra.mxu0 %v1246
          %1264 = vmatprep.subr.mxu0 0.0
          %1265 = vmatpush1.msra.mxu0 %v1247
          %1266 = vmatprep.subr.mxu0 0.0
          %1267 = vmatpush1.msra.mxu0 0.0
          %1268 = vmatprep.subr.mxu0 0.0
          %1269 = vmatpush1.msra.mxu0 0.0
          %1270 = vmatprep.subr.mxu0 0.0
          %1271 = vmatpush1.msra.mxu0 0.0
          %1272 = vmatprep.subr.mxu0 0.0
          %1273 = vmatpush1.msra.mxu0 0.0
          %1274 = vmatprep.subr.mxu0 0.0
          %1275 = vmatpush1.msra.mxu0 0.0
          %1276 = vmatprep.subr.mxu0 0.0
          %1277 = vmatpush1.msra.mxu0 0.0
          %1278 = vmatprep.subr.mxu0 0.0
          %1279 = vmatpush1.msra.mxu0 0.0
          %1280 = vmatprep.subr.mxu0 0.0
          %1281 = vmatpush1.msra.mxu0 0.0
          %1282 = vmatprep.subr.mxu0 0.0
          %1283 = vmatpush1.msra.mxu0 0.0
          %1284 = vmatprep.subr.mxu0 0.0
          %1285 = vmatpush1.msra.mxu0 0.0
          %1286 = vmatprep.subr.mxu0 0.0
          %1287 = vmatpush1.msra.mxu0 0.0
          %1288 = vmatprep.subr.mxu0 0.0
          %1289 = vmatpush1.msra.mxu0 0.0
          %1290 = vmatprep.subr.mxu0 0.0
          %1291 = vmatpush1.msra.mxu0 0.0
          %1292 = vmatprep.subr.mxu0 0.0
          %1293 = vmatpush1.msra.mxu0 0.0
          %1294 = vmatprep.subr.mxu0 0.0
          %1295 = vmatpush1.msra.mxu0 0.0
          %1296 = vmatprep.subr.mxu0 0.0
          %1297 = vmatpush1.msra.mxu0 0.0
          %1298 = vmatprep.subr.mxu0 0.0
          %1299 = vmatpush1.msra.mxu0 0.0
          %1300 = vmatprep.subr.mxu0 0.0
          %1301 = vmatpush1.msra.mxu0 0.0
          %1302 = vmatprep.subr.mxu0 0.0
          %1303 = vmatpush1.msra.mxu0 0.0
          %1304 = vmatprep.subr.mxu0 0.0
          %1305 = vmatpush1.msra.mxu0 0.0
          %1306 = vmatprep.subr.mxu0 0.0
          %1307 = vmatpush1.msra.mxu0 0.0
          %1308 = vmatprep.subr.mxu0 0.0
          %1309 = vmatpush1.msra.mxu0 0.0
          %1310 = vmatprep.subr.mxu0 0.0
          %1311 = vmatpush1.msra.mxu0 0.0
          %1312 = vmatprep.subr.mxu0 0.0
          %1313 = vmatpush1.msra.mxu0 0.0
          %1314 = vmatprep.subr.mxu0 0.0
          %1315 = vmatpush1.msra.mxu0 0.0
          %1316 = vmatprep.subr.mxu0 0.0
          %1317 = vmatpush1.msra.mxu0 0.0
          %1318 = vmatprep.subr.mxu0 0.0
          %1319 = vmatpush1.msra.mxu0 0.0
          %1320 = vmatprep.subr.mxu0 0.0
          %1321 = vmatpush1.msra.mxu0 0.0
          %1322 = vmatprep.mubr.f32.mxu0 0.0
          %1323 = vmatmul.mubr.f32.gmra.mrb[0].mxu0 %v1256
          %v1324 = vpop.f32.mrb[0].mxu0
          %v1325 = vadd.f32 %v1253, %v1324
          %v1326 = vpop.f32.mrb[0].mxu0
          %1327 = vdwg.mxu0
          %v1328 = vmul.f32 %v1325, 0.5
          %v1329 = vmul.f32 %v1325, 0.044715
          %v1330 = vmul.f32 %v1329, %v1325
          %v1331 = vmul.f32 %v1330, %v1325
          %v1332 = vadd.f32 %v1325, %v1331
          %v1333 = vmul.f32 %v1332, 0.7978846
          %v1334 = vtanh.pop %v1333
          %v1335 = vadd.f32 %v1334, 1.0
          %v1336 = vmul.f32 %v1328, %v1335
          %v1337 = vld [vmem:[%s11] sm:$0xff]
          %v1338 = vld [vmem:[%s11 + $0x8] sm:$0xff]
          %v1339 = vld [vmem:[%s11 + $0x10] sm:$0xff]
          %v1340 = vld [vmem:[%s11 + $0x18] sm:$0xff]
          %v1341 = vld [vmem:[%s11 + $0x20] sm:$0xff]
          %v1342 = vld [vmem:[%s11 + $0x28] sm:$0xff]
          %v1343 = vld [vmem:[%s11 + $0x30] sm:$0xff]
          %v1344 = vld [vmem:[%s11 + $0x38] sm:$0xff]
          %v1345 = vld [vmem:[#allocation19] sm:$0x1]
          %v1347 = vlaneseq
          %v1348 = vshrl.u32 %v1347, 7
          %v1349 = vsub.s32 0, %v1348
          %v1350 = vrot.slane %v1345, %v1349
          %v1353 = vsel %vm1040, %v1336, 0
          %1355 = vmatprep.subr.mxu0 0.0
          %1356 = vmatpush1.msra.mxu0 %v1337
          %1357 = vmatprep.subr.mxu0 0.0
          %1358 = vmatpush1.msra.mxu0 %v1338
          %1359 = vmatprep.subr.mxu0 0.0
          %1360 = vmatpush1.msra.mxu0 %v1339
          %1361 = vmatprep.subr.mxu0 0.0
          %1362 = vmatpush1.msra.mxu0 %v1340
          %1363 = vmatprep.subr.mxu0 0.0
          %1364 = vmatpush1.msra.mxu0 %v1341
          %1365 = vmatprep.subr.mxu0 0.0
          %1366 = vmatpush1.msra.mxu0 %v1342
          %1367 = vmatprep.subr.mxu0 0.0
          %1368 = vmatpush1.msra.mxu0 %v1343
          %1369 = vmatprep.subr.mxu0 0.0
          %1370 = vmatpush1.msra.mxu0 %v1344
          %1371 = vmatprep.subr.mxu0 0.0
          %1372 = vmatpush1.msra.mxu0 0.0
          %1373 = vmatprep.subr.mxu0 0.0
          %1374 = vmatpush1.msra.mxu0 0.0
          %1375 = vmatprep.subr.mxu0 0.0
          %1376 = vmatpush1.msra.mxu0 0.0
          %1377 = vmatprep.subr.mxu0 0.0
          %1378 = vmatpush1.msra.mxu0 0.0
          %1379 = vmatprep.subr.mxu0 0.0
          %1380 = vmatpush1.msra.mxu0 0.0
          %1381 = vmatprep.subr.mxu0 0.0
          %1382 = vmatpush1.msra.mxu0 0.0
          %1383 = vmatprep.subr.mxu0 0.0
          %1384 = vmatpush1.msra.mxu0 0.0
          %1385 = vmatprep.subr.mxu0 0.0
          %1386 = vmatpush1.msra.mxu0 0.0
          %1387 = vmatprep.subr.mxu0 0.0
          %1388 = vmatpush1.msra.mxu0 0.0
          %1389 = vmatprep.subr.mxu0 0.0
          %1390 = vmatpush1.msra.mxu0 0.0
          %1391 = vmatprep.subr.mxu0 0.0
          %1392 = vmatpush1.msra.mxu0 0.0
          %1393 = vmatprep.subr.mxu0 0.0
          %1394 = vmatpush1.msra.mxu0 0.0
          %1395 = vmatprep.subr.mxu0 0.0
          %1396 = vmatpush1.msra.mxu0 0.0
          %1397 = vmatprep.subr.mxu0 0.0
          %1398 = vmatpush1.msra.mxu0 0.0
          %1399 = vmatprep.subr.mxu0 0.0
          %1400 = vmatpush1.msra.mxu0 0.0
          %1401 = vmatprep.subr.mxu0 0.0
          %1402 = vmatpush1.msra.mxu0 0.0
          %1403 = vmatprep.subr.mxu0 0.0
          %1404 = vmatpush1.msra.mxu0 0.0
          %1405 = vmatprep.subr.mxu0 0.0
          %1406 = vmatpush1.msra.mxu0 0.0
          %1407 = vmatprep.subr.mxu0 0.0
          %1408 = vmatpush1.msra.mxu0 0.0
          %1409 = vmatprep.subr.mxu0 0.0
          %1410 = vmatpush1.msra.mxu0 0.0
          %1411 = vmatprep.subr.mxu0 0.0
          %1412 = vmatpush1.msra.mxu0 0.0
          %1413 = vmatprep.subr.mxu0 0.0
          %1414 = vmatpush1.msra.mxu0 0.0
          %1415 = vmatprep.subr.mxu0 0.0
          %1416 = vmatpush1.msra.mxu0 0.0
          %1417 = vmatprep.subr.mxu0 0.0
          %1418 = vmatpush1.msra.mxu0 0.0
          %1419 = vmatprep.mubr.f32.mxu0 0.0
          %1420 = vmatmul.mubr.f32.gmra.mrb[0].mxu0 %v1353
          %v1421 = vpop.f32.mrb[0].mxu0
          %v1422 = vadd.f32 %v1350, %v1421
          %v1423 = vpop.f32.mrb[0].mxu0
          %1424 = vdwg.mxu0
          %v1425 = vld [vmem:[#allocation20] sm:$0x1]
          %v1427 = vlaneseq
          %v1428 = vshrl.u32 %v1427, 7
          %v1429 = vsub.s32 0, %v1428
          %v1430 = vrot.slane %v1425, %v1429
          %v1432 = vmul.f32 %v1430, %v1422
          %v1433 = vadd.f32 %v1144, %v1432
          %s1434 = scalar_lea.vmem %s5, 8
          %v1435 = vld [vmem:[%s1434] sm:$0x7f]
          %v1436 = vlaneseq
          %v1437 = vshrl.u32 %v1436, 7
          %v1438 = vsub.s32 3, %v1437
          %v1439 = vrot.slane %v1435, %v1438
          %v1440 = vmul.f32 %v1433, %v1439
          %v1441 = vrot.slane %v1433, 5
          %v1442 = vsel %vm1154, %v1441, 0.0
          %v1443 = vlaneseq
          %v1444 = vshrl.u32 %v1443, 7
          %v1445 = vsub.s32 0, %v1444
          %v1446 = vrot.slane %v1435, %v1445
          %v1447 = vmul.f32 %v1442, %v1446
          %v1448 = vadd.f32 %v1440, %v1447
          %v1449 = vrot.slane %v1433, 6
          %v1450 = vsel %vm1163, %v1449, 0.0
          %v1451 = vlaneseq
          %v1452 = vshrl.u32 %v1451, 7
          %v1453 = vsub.s32 1, %v1452
          %v1454 = vrot.slane %v1435, %v1453
          %v1455 = vmul.f32 %v1450, %v1454
          %v1456 = vadd.f32 %v1448, %v1455
          %v1457 = vrot.slane %v1433, 7
          %v1458 = vsel %vm1172, %v1457, 0.0
          %v1459 = vlaneseq
          %v1460 = vshrl.u32 %v1459, 7
          %v1461 = vsub.s32 2, %v1460
          %v1462 = vrot.slane %v1435, %v1461
          %v1463 = vmul.f32 %v1458, %v1462
          %v1464 = vadd.f32 %v1456, %v1463
          %v1465 = vrot.slane %v1433, 1
          %v1466 = vsel %vm1181, %v1465, 0.0
          %v1467 = vlaneseq
          %v1468 = vshrl.u32 %v1467, 7
          %v1469 = vsub.s32 4, %v1468
          %v1470 = vrot.slane %v1435, %v1469
          %v1471 = vmul.f32 %v1466, %v1470
          %v1472 = vadd.f32 %v1464, %v1471
          %v1473 = vrot.slane %v1433, 2
          %v1474 = vsel %vm1190, %v1473, 0.0
          %v1475 = vlaneseq
          %v1476 = vshrl.u32 %v1475, 7
          %v1477 = vsub.s32 5, %v1476
          %v1478 = vrot.slane %v1435, %v1477
          %v1479 = vmul.f32 %v1474, %v1478
          %v1480 = vadd.f32 %v1472, %v1479
          %v1481 = vrot.slane %v1433, 3
          %v1482 = vsel %vm1199, %v1481, 0.0
          %v1483 = vlaneseq
          %v1484 = vshrl.u32 %v1483, 7
          %v1485 = vsub.s32 6, %v1484
          %v1486 = vrot.slane %v1435, %v1485
          %v1487 = vmul.f32 %v1482, %v1486
          %v1488 = vadd.f32 %v1480, %v1487
          %s1489 = scalar_lea.vmem [#allocation11], 1
          %v1490 = vld [vmem:[%s1489] sm:$0x1]
          %v1492 = vlaneseq
          %v1493 = vshrl.u32 %v1492, 7
          %v1494 = vsub.s32 0, %v1493
          %v1495 = vrot.slane %v1490, %v1494
          %v1497 = vadd.f32 %v1488, %v1495
          %s1498 = scalar_lea.vmem [#allocation13], 1
          %v1499 = vld [vmem:[%s1498] sm:$0x1]
          %s1500 = scalar_lea.vmem [#allocation14], 1
          %v1501 = vld [vmem:[%s1500] sm:$0x1]
          %v1502 = vsel %vm1116, %v1497, 0.0
          %1503 = vadd.xlane.f32.xlu0 %v1502
          %v1504 = vpop.xlane.xlu0 %1503
          %v1505 = vmul.f32 %v1504, %v1120
          %v1506 = vsub.f32 %v1497, %v1505
          %v1507 = vmul.f32 %v1506, %v1506
          %v1508 = vsel %vm1116, %v1507, 0.0
          %1509 = vadd.xlane.f32.xlu0 %v1508
          %v1510 = vpop.xlane.xlu0 %1509
          %v1511 = vmul.f32 %v1510, %v1120
          %v1512 = vadd.f32 %v1511, 1e-06
          %v1513 = vrsqrt.pop %v1512
          %v1514 = vmul.f32 %v1506, %v1513
          %v1516 = vlaneseq
          %v1517 = vshrl.u32 %v1516, 7
          %v1518 = vsub.s32 0, %v1517
          %v1519 = vrot.slane %v1499, %v1518
          %v1521 = vmul.f32 %v1514, %v1519
          %v1523 = vlaneseq
          %v1524 = vshrl.u32 %v1523, 7
          %v1525 = vsub.s32 0, %v1524
          %v1526 = vrot.slane %v1501, %v1525
          %v1528 = vadd.f32 %v1521, %v1526
          %s1529 = scalar_lea.vmem [#allocation16], 32
          %v1530 = vld [vmem:[%s1529] sm:$0xff]
          %v1531 = vld [vmem:[%s1529 + $0x8] sm:$0xff]
          %v1532 = vld [vmem:[%s1529 + $0x10] sm:$0xff]
          %v1533 = vld [vmem:[%s1529 + $0x18] sm:$0xff]
          %s1534 = scalar_lea.vmem [#allocation17], 1
          %v1535 = vld [vmem:[%s1534] sm:$0x1]
          %v1537 = vlaneseq
          %v1538 = vshrl.u32 %v1537, 7
          %v1539 = vsub.s32 0, %v1538
          %v1540 = vrot.slane %v1535, %v1539
          %v1543 = vsel %vm1116, %v1528, 0
          %1545 = vmatprep.subr.mxu0 0.0
          %1546 = vmatpush1.msra.mxu0 %v1530
          %1547 = vmatprep.subr.mxu0 0.0
          %1548 = vmatpush1.msra.mxu0 %v1531
          %1549 = vmatprep.subr.mxu0 0.0
          %1550 = vmatpush1.msra.mxu0 %v1532
          %1551 = vmatprep.subr.mxu0 0.0
          %1552 = vmatpush1.msra.mxu0 %v1533
          %1553 = vmatprep.subr.mxu0 0.0
          %1554 = vmatpush1.msra.mxu0 0.0
          %1555 = vmatprep.subr.mxu0 0.0
          %1556 = vmatpush1.msra.mxu0 0.0
          %1557 = vmatprep.subr.mxu0 0.0
          %1558 = vmatpush1.msra.mxu0 0.0
          %1559 = vmatprep.subr.mxu0 0.0
          %1560 = vmatpush1.msra.mxu0 0.0
          %1561 = vmatprep.subr.mxu0 0.0
          %1562 = vmatpush1.msra.mxu0 0.0
          %1563 = vmatprep.subr.mxu0 0.0
          %1564 = vmatpush1.msra.mxu0 0.0
          %1565 = vmatprep.subr.mxu0 0.0
          %1566 = vmatpush1.msra.mxu0 0.0
          %1567 = vmatprep.subr.mxu0 0.0
          %1568 = vmatpush1.msra.mxu0 0.0
          %1569 = vmatprep.subr.mxu0 0.0
          %1570 = vmatpush1.msra.mxu0 0.0
          %1571 = vmatprep.subr.mxu0 0.0
          %1572 = vmatpush1.msra.mxu0 0.0
          %1573 = vmatprep.subr.mxu0 0.0
          %1574 = vmatpush1.msra.mxu0 0.0
          %1575 = vmatprep.subr.mxu0 0.0
          %1576 = vmatpush1.msra.mxu0 0.0
          %1577 = vmatprep.subr.mxu0 0.0
          %1578 = vmatpush1.msra.mxu0 0.0
          %1579 = vmatprep.subr.mxu0 0.0
          %1580 = vmatpush1.msra.mxu0 0.0
          %1581 = vmatprep.subr.mxu0 0.0
          %1582 = vmatpush1.msra.mxu0 0.0
          %1583 = vmatprep.subr.mxu0 0.0
          %1584 = vmatpush1.msra.mxu0 0.0
          %1585 = vmatprep.subr.mxu0 0.0
          %1586 = vmatpush1.msra.mxu0 0.0
          %1587 = vmatprep.subr.mxu0 0.0
          %1588 = vmatpush1.msra.mxu0 0.0
          %1589 = vmatprep.subr.mxu0 0.0
          %1590 = vmatpush1.msra.mxu0 0.0
          %1591 = vmatprep.subr.mxu0 0.0
          %1592 = vmatpush1.msra.mxu0 0.0
          %1593 = vmatprep.subr.mxu0 0.0
          %1594 = vmatpush1.msra.mxu0 0.0
          %1595 = vmatprep.subr.mxu0 0.0
          %1596 = vmatpush1.msra.mxu0 0.0
          %1597 = vmatprep.subr.mxu0 0.0
          %1598 = vmatpush1.msra.mxu0 0.0
          %1599 = vmatprep.subr.mxu0 0.0
          %1600 = vmatpush1.msra.mxu0 0.0
          %1601 = vmatprep.subr.mxu0 0.0
          %1602 = vmatpush1.msra.mxu0 0.0
          %1603 = vmatprep.subr.mxu0 0.0
          %1604 = vmatpush1.msra.mxu0 0.0
          %1605 = vmatprep.subr.mxu0 0.0
          %1606 = vmatpush1.msra.mxu0 0.0
          %1607 = vmatprep.subr.mxu0 0.0
          %1608 = vmatpush1.msra.mxu0 0.0
          %1609 = vmatprep.mubr.f32.mxu0 0.0
          %1610 = vmatmul.mubr.f32.gmra.mrb[0].mxu0 %v1543
          %v1611 = vpop.f32.mrb[0].mxu0
          %v1612 = vadd.f32 %v1540, %v1611
          %v1613 = vpop.f32.mrb[0].mxu0
          %1614 = vdwg.mxu0
          %v1615 = vmul.f32 %v1612, 0.5
          %v1616 = vmul.f32 %v1612, 0.044715
          %v1617 = vmul.f32 %v1616, %v1612
          %v1618 = vmul.f32 %v1617, %v1612
          %v1619 = vadd.f32 %v1612, %v1618
          %v1620 = vmul.f32 %v1619, 0.7978846
          %v1621 = vtanh.pop %v1620
          %v1622 = vadd.f32 %v1621, 1.0
          %v1623 = vmul.f32 %v1615, %v1622
          %s1624 = scalar_lea.vmem %s11, 64
          %v1625 = vld [vmem:[%s1624] sm:$0xff]
          %v1626 = vld [vmem:[%s1624 + $0x8] sm:$0xff]
          %v1627 = vld [vmem:[%s1624 + $0x10] sm:$0xff]
          %v1628 = vld [vmem:[%s1624 + $0x18] sm:$0xff]
          %v1629 = vld [vmem:[%s1624 + $0x20] sm:$0xff]
          %v1630 = vld [vmem:[%s1624 + $0x28] sm:$0xff]
          %v1631 = vld [vmem:[%s1624 + $0x30] sm:$0xff]
          %v1632 = vld [vmem:[%s1624 + $0x38] sm:$0xff]
          %s1633 = scalar_lea.vmem [#allocation19], 1
          %v1634 = vld [vmem:[%s1633] sm:$0x1]
          %v1636 = vlaneseq
          %v1637 = vshrl.u32 %v1636, 7
          %v1638 = vsub.s32 0, %v1637
          %v1639 = vrot.slane %v1634, %v1638
          %v1642 = vsel %vm1040, %v1623, 0
          %1644 = vmatprep.subr.mxu0 0.0
          %1645 = vmatpush1.msra.mxu0 %v1625
          %1646 = vmatprep.subr.mxu0 0.0
          %1647 = vmatpush1.msra.mxu0 %v1626
          %1648 = vmatprep.subr.mxu0 0.0
          %1649 = vmatpush1.msra.mxu0 %v1627
          %1650 = vmatprep.subr.mxu0 0.0
          %1651 = vmatpush1.msra.mxu0 %v1628
          %1652 = vmatprep.subr.mxu0 0.0
          %1653 = vmatpush1.msra.mxu0 %v1629
          %1654 = vmatprep.subr.mxu0 0.0
          %1655 = vmatpush1.msra.mxu0 %v1630
          %1656 = vmatprep.subr.mxu0 0.0
          %1657 = vmatpush1.msra.mxu0 %v1631
          %1658 = vmatprep.subr.mxu0 0.0
          %1659 = vmatpush1.msra.mxu0 %v1632
          %1660 = vmatprep.subr.mxu0 0.0
          %1661 = vmatpush1.msra.mxu0 0.0
          %1662 = vmatprep.subr.mxu0 0.0
          %1663 = vmatpush1.msra.mxu0 0.0
          %1664 = vmatprep.subr.mxu0 0.0
          %1665 = vmatpush1.msra.mxu0 0.0
          %1666 = vmatprep.subr.mxu0 0.0
          %1667 = vmatpush1.msra.mxu0 0.0
          %1668 = vmatprep.subr.mxu0 0.0
          %1669 = vmatpush1.msra.mxu0 0.0
          %1670 = vmatprep.subr.mxu0 0.0
          %1671 = vmatpush1.msra.mxu0 0.0
          %1672 = vmatprep.subr.mxu0 0.0
          %1673 = vmatpush1.msra.mxu0 0.0
          %1674 = vmatprep.subr.mxu0 0.0
          %1675 = vmatpush1.msra.mxu0 0.0
          %1676 = vmatprep.subr.mxu0 0.0
          %1677 = vmatpush1.msra.mxu0 0.0
          %1678 = vmatprep.subr.mxu0 0.0
          %1679 = vmatpush1.msra.mxu0 0.0
          %1680 = vmatprep.subr.mxu0 0.0
          %1681 = vmatpush1.msra.mxu0 0.0
          %1682 = vmatprep.subr.mxu0 0.0
          %1683 = vmatpush1.msra.mxu0 0.0
          %1684 = vmatprep.subr.mxu0 0.0
          %1685 = vmatpush1.msra.mxu0 0.0
          %1686 = vmatprep.subr.mxu0 0.0
          %1687 = vmatpush1.msra.mxu0 0.0
          %1688 = vmatprep.subr.mxu0 0.0
          %1689 = vmatpush1.msra.mxu0 0.0
          %1690 = vmatprep.subr.mxu0 0.0
          %1691 = vmatpush1.msra.mxu0 0.0
          %1692 = vmatprep.subr.mxu0 0.0
          %1693 = vmatpush1.msra.mxu0 0.0
          %1694 = vmatprep.subr.mxu0 0.0
          %1695 = vmatpush1.msra.mxu0 0.0
          %1696 = vmatprep.subr.mxu0 0.0
          %1697 = vmatpush1.msra.mxu0 0.0
          %1698 = vmatprep.subr.mxu0 0.0
          %1699 = vmatpush1.msra.mxu0 0.0
          %1700 = vmatprep.subr.mxu0 0.0
          %1701 = vmatpush1.msra.mxu0 0.0
          %1702 = vmatprep.subr.mxu0 0.0
          %1703 = vmatpush1.msra.mxu0 0.0
          %1704 = vmatprep.subr.mxu0 0.0
          %1705 = vmatpush1.msra.mxu0 0.0
          %1706 = vmatprep.subr.mxu0 0.0
          %1707 = vmatpush1.msra.mxu0 0.0
          %1708 = vmatprep.mubr.f32.mxu0 0.0
          %1709 = vmatmul.mubr.f32.gmra.mrb[0].mxu0 %v1642
          %v1710 = vpop.f32.mrb[0].mxu0
          %v1711 = vadd.f32 %v1639, %v1710
          %v1712 = vpop.f32.mrb[0].mxu0
          %1713 = vdwg.mxu0
          %s1714 = scalar_lea.vmem [#allocation20], 1
          %v1715 = vld [vmem:[%s1714] sm:$0x1]
          %v1717 = vlaneseq
          %v1718 = vshrl.u32 %v1717, 7
          %v1719 = vsub.s32 0, %v1718
          %v1720 = vrot.slane %v1715, %v1719
          %v1722 = vmul.f32 %v1720, %v1711
          %v1723 = vadd.f32 %v1433, %v1722
          %v1724 = vld [vmem:[#allocation22] sm:$0x1]
          %v1725 = vld [vmem:[#allocation23] sm:$0x1]
          %v1726 = vsel %vm1116, %v1723, 0.0
          %1727 = vadd.xlane.f32.xlu0 %v1726
          %v1728 = vpop.xlane.xlu0 %1727
          %v1729 = vmul.f32 %v1728, %v1120
          %v1730 = vsub.f32 %v1723, %v1729
          %v1731 = vmul.f32 %v1730, %v1730
          %v1732 = vsel %vm1116, %v1731, 0.0
          %1733 = vadd.xlane.f32.xlu0 %v1732
          %v1734 = vpop.xlane.xlu0 %1733
          %v1735 = vmul.f32 %v1734, %v1120
          %v1736 = vadd.f32 %v1735, 1e-06
          %v1737 = vrsqrt.pop %v1736
          %v1738 = vmul.f32 %v1730, %v1737
          %v1740 = vlaneseq
          %v1741 = vshrl.u32 %v1740, 7
          %v1742 = vsub.s32 0, %v1741
          %v1743 = vrot.slane %v1724, %v1742
          %v1745 = vmul.f32 %v1738, %v1743
          %v1747 = vlaneseq
          %v1748 = vshrl.u32 %v1747, 7
          %v1749 = vsub.s32 0, %v1748
          %v1750 = vrot.slane %v1725, %v1749
          %v1752 = vadd.f32 %v1745, %v1750
          %v1753 = vpack.c.bf16 %v1752, %v1752
          %v1754 = vld [vmem:[#allocation25] sm:$0xff]
          %v1755 = vld [vmem:[#allocation25 + $0x8] sm:$0xff]
          %v1756 = vld [vmem:[#allocation25 + $0x10] sm:$0xff]
          %v1757 = vld [vmem:[#allocation25 + $0x18] sm:$0xff]
          %v1758 = vld [vmem:[#allocation25 + $0x20] sm:$0xff]
          %v1759 = vld [vmem:[#allocation25 + $0x28] sm:$0xff]
          %v1760 = vld [vmem:[#allocation25 + $0x30] sm:$0xff]
          %v1761 = vld [vmem:[#allocation25 + $0x38] sm:$0xff]
          %v1762 = vld [vmem:[#allocation25 + $0x40] sm:$0xff]
          %v1763 = vld [vmem:[#allocation25 + $0x48] sm:$0xff]
          %v1764 = vld [vmem:[#allocation25 + $0x50] sm:$0xff]
          %v1765 = vld [vmem:[#allocation25 + $0x58] sm:$0xff]
          %v1766 = vld [vmem:[#allocation25 + $0x60] sm:$0xff]
          %v1767 = vld [vmem:[#allocation25 + $0x68] sm:$0xff]
          %v1768 = vld [vmem:[#allocation25 + $0x70] sm:$0xff]
          %v1769 = vld [vmem:[#allocation25 + $0x78] sm:$0xff]
          %v1770 = vld [vmem:[#allocation26] sm:$0xff]
          %v1772 = vlaneseq
          %v1773 = vshrl.u32 %v1772, 7
          %v1774 = vsub.s32 0, %v1773
          %v1775 = vrot.slane %v1770, %v1774
          %v1776 = vlaneseq
          %v1777 = vshrl.u32 %v1776, 7
          %v1778 = vsub.s32 1, %v1777
          %v1779 = vrot.slane %v1770, %v1778
          %v1780 = vlaneseq
          %v1781 = vshrl.u32 %v1780, 7
          %v1782 = vsub.s32 2, %v1781
          %v1783 = vrot.slane %v1770, %v1782
          %v1784 = vlaneseq
          %v1785 = vshrl.u32 %v1784, 7
          %v1786 = vsub.s32 3, %v1785
          %v1787 = vrot.slane %v1770, %v1786
          %v1788 = vlaneseq
          %v1789 = vshrl.u32 %v1788, 7
          %v1790 = vsub.s32 4, %v1789
          %v1791 = vrot.slane %v1770, %v1790
          %v1792 = vlaneseq
          %v1793 = vshrl.u32 %v1792, 7
          %v1794 = vsub.s32 5, %v1793
          %v1795 = vrot.slane %v1770, %v1794
          %v1796 = vlaneseq
          %v1797 = vshrl.u32 %v1796, 7
          %v1798 = vsub.s32 6, %v1797
          %v1799 = vrot.slane %v1770, %v1798
          %v1800 = vlaneseq
          %v1801 = vshrl.u32 %v1800, 7
          %v1802 = vsub.s32 7, %v1801
          %v1803 = vrot.slane %v1770, %v1802
          %v1828 = vunpack.c.l.b16 %v1754
          %v1829 = vunpack.c.h.b16 %v1754
          %v1830 = vunpack.c.l.b16 %v1755
          %v1831 = vunpack.c.h.b16 %v1755
          %v1832 = vunpack.c.l.b16 %v1756
          %v1833 = vunpack.c.h.b16 %v1756
          %v1834 = vunpack.c.l.b16 %v1757
          %v1835 = vunpack.c.h.b16 %v1757
          %v1836 = vunpack.c.l.b16 %v1758
          %v1837 = vunpack.c.h.b16 %v1758
          %v1838 = vunpack.c.l.b16 %v1759
          %v1839 = vunpack.c.h.b16 %v1759
          %v1840 = vunpack.c.l.b16 %v1760
          %v1841 = vunpack.c.h.b16 %v1760
          %v1842 = vunpack.c.l.b16 %v1761
          %v1843 = vunpack.c.h.b16 %v1761
          %v1844 = vunpack.c.l.b16 %v1762
          %v1845 = vunpack.c.h.b16 %v1762
          %v1846 = vunpack.c.l.b16 %v1763
          %v1847 = vunpack.c.h.b16 %v1763
          %v1848 = vunpack.c.l.b16 %v1764
          %v1849 = vunpack.c.h.b16 %v1764
          %v1850 = vunpack.c.l.b16 %v1765
          %v1851 = vunpack.c.h.b16 %v1765
          %v1852 = vunpack.c.l.b16 %v1766
          %v1853 = vunpack.c.h.b16 %v1766
          %v1854 = vunpack.c.l.b16 %v1767
          %v1855 = vunpack.c.h.b16 %v1767
          %v1856 = vunpack.c.l.b16 %v1768
          %v1857 = vunpack.c.h.b16 %v1768
          %v1858 = vunpack.c.l.b16 %v1769
          %v1859 = vunpack.c.h.b16 %v1769
          %v1860 = vpack.c.b16 %v1836, %v1828
          %v1861 = vpack.c.b16 %v1837, %v1829
          %v1862 = vpack.c.b16 %v1838, %v1830
          %v1863 = vpack.c.b16 %v1839, %v1831
          %v1864 = vpack.c.b16 %v1840, %v1832
          %v1865 = vpack.c.b16 %v1841, %v1833
          %v1866 = vpack.c.b16 %v1842, %v1834
          %v1867 = vpack.c.b16 %v1843, %v1835
          %v1868 = vpack.c.b16 %v1852, %v1844
          %v1869 = vpack.c.b16 %v1853, %v1845
          %v1870 = vpack.c.b16 %v1854, %v1846
          %v1871 = vpack.c.b16 %v1855, %v1847
          %v1872 = vpack.c.b16 %v1856, %v1848
          %v1873 = vpack.c.b16 %v1857, %v1849
          %v1874 = vpack.c.b16 %v1858, %v1850
          %v1875 = vpack.c.b16 %v1859, %v1851
          %v1893 = vsel %vm1116, %v1753, 0
          %1895 = vmatprep.subr.bf16.mxu0 %v1861
          %1896 = vmatpush1.bf16.msra.mxu0 %v1860
          %1897 = vmatprep.subr.bf16.mxu0 %v1869
          %1898 = vmatpush1.bf16.msra.mxu0 %v1868
          %1899 = vmatprep.subr.bf16.mxu0 0
          %1900 = vmatpush1.bf16.msra.mxu0 0
          %1901 = vmatprep.subr.bf16.mxu0 0
          %1902 = vmatpush1.bf16.msra.mxu0 0
          %1903 = vmatprep.subr.bf16.mxu0 0
          %1904 = vmatpush1.bf16.msra.mxu0 0
          %1905 = vmatprep.subr.bf16.mxu0 0
          %1906 = vmatpush1.bf16.msra.mxu0 0
          %1907 = vmatprep.subr.bf16.mxu0 0
          %1908 = vmatpush1.bf16.msra.mxu0 0
          %1909 = vmatprep.subr.bf16.mxu0 0
          %1910 = vmatpush1.bf16.msra.mxu0 0
          %1911 = vmatprep.subr.bf16.mxu0 0
          %1912 = vmatpush1.bf16.msra.mxu0 0
          %1913 = vmatprep.subr.bf16.mxu0 0
          %1914 = vmatpush1.bf16.msra.mxu0 0
          %1915 = vmatprep.subr.bf16.mxu0 0
          %1916 = vmatpush1.bf16.msra.mxu0 0
          %1917 = vmatprep.subr.bf16.mxu0 0
          %1918 = vmatpush1.bf16.msra.mxu0 0
          %1919 = vmatprep.subr.bf16.mxu0 0
          %1920 = vmatpush1.bf16.msra.mxu0 0
          %1921 = vmatprep.subr.bf16.mxu0 0
          %1922 = vmatpush1.bf16.msra.mxu0 0
          %1923 = vmatprep.subr.bf16.mxu0 0
          %1924 = vmatpush1.bf16.msra.mxu0 0
          %1925 = vmatprep.subr.bf16.mxu0 0
          %1926 = vmatpush1.bf16.msra.mxu0 0
          %1927 = vmatprep.mubr.bf16.mxu0 0
          %1928 = vmatmul.mubr.bf16.gmra.mrb[0].mxu0 %v1893
          %v1929 = vpop.f32.mrb[0].mxu0
          %v1930 = vadd.f32 %v1775, %v1929
          %v1931 = vpop.f32.mrb[0].mxu0
          %v1932 = vadd.f32 %v1779, %v1931
          %v1933 = vpop.f32.mrb[0].mxu0
          %v1934 = vpop.f32.mrb[0].mxu0
          %1935 = vdwg.mxu0
          %1936 = vmatprep.subr.bf16.mxu0 %v1863
          %1937 = vmatpush1.bf16.msra.mxu0 %v1862
          %1938 = vmatprep.subr.bf16.mxu0 %v1871
          %1939 = vmatpush1.bf16.msra.mxu0 %v1870
          %1940 = vmatprep.subr.bf16.mxu0 0
          %1941 = vmatpush1.bf16.msra.mxu0 0
          %1942 = vmatprep.subr.bf16.mxu0 0
          %1943 = vmatpush1.bf16.msra.mxu0 0
          %1944 = vmatprep.subr.bf16.mxu0 0
          %1945 = vmatpush1.bf16.msra.mxu0 0
          %1946 = vmatprep.subr.bf16.mxu0 0
          %1947 = vmatpush1.bf16.msra.mxu0 0
          %1948 = vmatprep.subr.bf16.mxu0 0
          %1949 = vmatpush1.bf16.msra.mxu0 0
          %1950 = vmatprep.subr.bf16.mxu0 0
          %1951 = vmatpush1.bf16.msra.mxu0 0
          %1952 = vmatprep.subr.bf16.mxu0 0
          %1953 = vmatpush1.bf16.msra.mxu0 0
          %1954 = vmatprep.subr.bf16.mxu0 0
          %1955 = vmatpush1.bf16.msra.mxu0 0
          %1956 = vmatprep.subr.bf16.mxu0 0
          %1957 = vmatpush1.bf16.msra.mxu0 0
          %1958 = vmatprep.subr.bf16.mxu0 0
          %1959 = vmatpush1.bf16.msra.mxu0 0
          %1960 = vmatprep.subr.bf16.mxu0 0
          %1961 = vmatpush1.bf16.msra.mxu0 0
          %1962 = vmatprep.subr.bf16.mxu0 0
          %1963 = vmatpush1.bf16.msra.mxu0 0
          %1964 = vmatprep.subr.bf16.mxu0 0
          %1965 = vmatpush1.bf16.msra.mxu0 0
          %1966 = vmatprep.subr.bf16.mxu0 0
          %1967 = vmatpush1.bf16.msra.mxu0 0
          %1968 = vmatprep.mubr.bf16.mxu0 0
          %1969 = vmatmul.mubr.bf16.gmra.mrb[0].mxu0 %v1893
          %v1970 = vpop.f32.mrb[0].mxu0
          %v1971 = vadd.f32 %v1783, %v1970
          %v1972 = vpop.f32.mrb[0].mxu0
          %v1973 = vadd.f32 %v1787, %v1972
          %v1974 = vpop.f32.mrb[0].mxu0
          %v1975 = vpop.f32.mrb[0].mxu0
          %1976 = vdwg.mxu0
          %1977 = vmatprep.subr.bf16.mxu0 %v1865
          %1978 = vmatpush1.bf16.msra.mxu0 %v1864
          %1979 = vmatprep.subr.bf16.mxu0 %v1873
          %1980 = vmatpush1.bf16.msra.mxu0 %v1872
          %1981 = vmatprep.subr.bf16.mxu0 0
          %1982 = vmatpush1.bf16.msra.mxu0 0
          %1983 = vmatprep.subr.bf16.mxu0 0
          %1984 = vmatpush1.bf16.msra.mxu0 0
          %1985 = vmatprep.subr.bf16.mxu0 0
          %1986 = vmatpush1.bf16.msra.mxu0 0
          %1987 = vmatprep.subr.bf16.mxu0 0
          %1988 = vmatpush1.bf16.msra.mxu0 0
          %1989 = vmatprep.subr.bf16.mxu0 0
          %1990 = vmatpush1.bf16.msra.mxu0 0
          %1991 = vmatprep.subr.bf16.mxu0 0
          %1992 = vmatpush1.bf16.msra.mxu0 0
          %1993 = vmatprep.subr.bf16.mxu0 0
          %1994 = vmatpush1.bf16.msra.mxu0 0
          %1995 = vmatprep.subr.bf16.mxu0 0
          %1996 = vmatpush1.bf16.msra.mxu0 0
          %1997 = vmatprep.subr.bf16.mxu0 0
          %1998 = vmatpush1.bf16.msra.mxu0 0
          %1999 = vmatprep.subr.bf16.mxu0 0
          %2000 = vmatpush1.bf16.msra.mxu0 0
          %2001 = vmatprep.subr.bf16.mxu0 0
          %2002 = vmatpush1.bf16.msra.mxu0 0
          %2003 = vmatprep.subr.bf16.mxu0 0
          %2004 = vmatpush1.bf16.msra.mxu0 0
          %2005 = vmatprep.subr.bf16.mxu0 0
          %2006 = vmatpush1.bf16.msra.mxu0 0
          %2007 = vmatprep.subr.bf16.mxu0 0
          %2008 = vmatpush1.bf16.msra.mxu0 0
          %2009 = vmatprep.mubr.bf16.mxu0 0
          %2010 = vmatmul.mubr.bf16.gmra.mrb[0].mxu0 %v1893
          %v2011 = vpop.f32.mrb[0].mxu0
          %v2012 = vadd.f32 %v1791, %v2011
          %v2013 = vpop.f32.mrb[0].mxu0
          %v2014 = vadd.f32 %v1795, %v2013
          %v2015 = vpop.f32.mrb[0].mxu0
          %v2016 = vpop.f32.mrb[0].mxu0
          %2017 = vdwg.mxu0
          %2018 = vmatprep.subr.bf16.mxu0 %v1867
          %2019 = vmatpush1.bf16.msra.mxu0 %v1866
          %2020 = vmatprep.subr.bf16.mxu0 %v1875
          %2021 = vmatpush1.bf16.msra.mxu0 %v1874
          %2022 = vmatprep.subr.bf16.mxu0 0
          %2023 = vmatpush1.bf16.msra.mxu0 0
          %2024 = vmatprep.subr.bf16.mxu0 0
          %2025 = vmatpush1.bf16.msra.mxu0 0
          %2026 = vmatprep.subr.bf16.mxu0 0
          %2027 = vmatpush1.bf16.msra.mxu0 0
          %2028 = vmatprep.subr.bf16.mxu0 0
          %2029 = vmatpush1.bf16.msra.mxu0 0
          %2030 = vmatprep.subr.bf16.mxu0 0
          %2031 = vmatpush1.bf16.msra.mxu0 0
          %2032 = vmatprep.subr.bf16.mxu0 0
          %2033 = vmatpush1.bf16.msra.mxu0 0
          %2034 = vmatprep.subr.bf16.mxu0 0
          %2035 = vmatpush1.bf16.msra.mxu0 0
          %2036 = vmatprep.subr.bf16.mxu0 0
          %2037 = vmatpush1.bf16.msra.mxu0 0
          %2038 = vmatprep.subr.bf16.mxu0 0
          %2039 = vmatpush1.bf16.msra.mxu0 0
          %2040 = vmatprep.subr.bf16.mxu0 0
          %2041 = vmatpush1.bf16.msra.mxu0 0
          %2042 = vmatprep.subr.bf16.mxu0 0
          %2043 = vmatpush1.bf16.msra.mxu0 0
          %2044 = vmatprep.subr.bf16.mxu0 0
          %2045 = vmatpush1.bf16.msra.mxu0 0
          %2046 = vmatprep.subr.bf16.mxu0 0
          %2047 = vmatpush1.bf16.msra.mxu0 0
          %2048 = vmatprep.subr.bf16.mxu0 0
          %2049 = vmatpush1.bf16.msra.mxu0 0
          %2050 = vmatprep.mubr.bf16.mxu0 0
          %2051 = vmatmul.mubr.bf16.gmra.mrb[0].mxu0 %v1893
          %v2052 = vpop.f32.mrb[0].mxu0
          %v2053 = vadd.f32 %v1799, %v2052
          %v2054 = vpop.f32.mrb[0].mxu0
          %v2055 = vadd.f32 %v1803, %v2054
          %v2056 = vpop.f32.mrb[0].mxu0
          %v2057 = vpop.f32.mrb[0].mxu0
          %2058 = vdwg.mxu0
          %v2059 = vmul.f32 %v1930, 1.442695
          %v2060 = vpow.pop %v2059
          %v2061 = vmul.f32 %v1932, 1.442695
          %v2062 = vpow.pop %v2061
          %v2063 = vmul.f32 %v1971, 1.442695
          %v2064 = vpow.pop %v2063
          %v2065 = vmul.f32 %v1973, 1.442695
          %v2066 = vpow.pop %v2065
          %v2067 = vmin.f32 %v2060, 100.0
          %v2068 = vmin.f32 %v2062, 100.0
          %v2069 = vmin.f32 %v2064, 100.0
          %v2070 = vmin.f32 %v2066, 100.0
          %v2071 = vand.u32 2147483647, %v2012
          %vm2072 = vcmp.le.f32.partialorder %v2071, 0.7853982
          %vm2073 = vcmp.lt.s32.totalorder %v2012, 0
          %v2074 = vand.u32 %v2012, 2139095040
          %v2075 = vshrl.u32 %v2074, 23
          %v2076 = vsub.s32 %v2075, 127
          %v2077 = vand.u32 2147483647, %v2012
          %v2078 = vand.u32 %v2077, 8388607
          %v2079 = vor.u32 %v2078, 8388608
          %v2080 = vsub.s32 0, %v2079
          %v2081 = vadd.s32 %v2076, 1
          %vm2082 = vcmp.gt.s32.totalorder %v2081, 0
          %v2083 = vsel %vm2082, %v2081, 0
          %v2084 = vshrl.u32 %v2083, 5
          %v2085 = vand.u32 %v2083, 31
          %v2086 = vsub.s32 32, %v2085
          %v2087 = vshrl.u32 683565275, %v2086
          %v2088 = vshll.u32 683565275, %v2085
          %v2089 = vshrl.u32 2475754826, %v2086
          %v2090 = vor.u32 %v2088, %v2089
          %v2091 = vshll.u32 2475754826, %v2085
          %v2092 = vshrl.u32 2131351028, %v2086
          %v2093 = vor.u32 %v2091, %v2092
          %v2094 = vshll.u32 2131351028, %v2085
          %v2095 = vshrl.u32 2102212464, %v2086
          %v2096 = vor.u32 %v2094, %v2095
          %v2097 = vshll.u32 2102212464, %v2085
          %v2098 = vshrl.u32 920167782, %v2086
          %v2099 = vor.u32 %v2097, %v2098
          %v2100 = vshll.u32 920167782, %v2085
          %v2101 = vshrl.u32 1326507024, %v2086
          %v2102 = vor.u32 %v2100, %v2101
          %vm2103 = vcmp.lt.s32.totalorder %v2084, 1
          %vm2104 = vcmp.lt.s32.totalorder %v2084, 2
          %vm2105 = vcmp.lt.s32.totalorder %v2084, 3
          %vm2106 = vcmp.lt.s32.totalorder %v2084, 4
          %v2107 = vsel %vm2103, %v2087, %v2090
          %v2108 = vsel %vm2106, %v2096, 2102212464
          %v2109 = vsel %vm2105, %v2093, %v2108
          %v2110 = vsel %vm2104, %v2107, %v2109
          %v2111 = vsel %vm2103, %v2090, %v2093
          %v2112 = vsel %vm2106, %v2099, 920167782
          %v2113 = vsel %vm2105, %v2096, %v2112
          %v2114 = vsel %vm2104, %v2111, %v2113
          %v2115 = vsel %vm2103, %v2093, %v2096
          %v2116 = vsel %vm2106, %v2102, 1326507024
          %v2117 = vsel %vm2105, %v2099, %v2116
          %v2118 = vsel %vm2104, %v2115, %v2117
          %v2119 = vshll.u32 %v2079, 8
          %v2120 = vmul.u32.u64.compose %v2119, %v2118
          %v2121 = vextract.low.u32 %v2120
          %v2122 = vextract.high.u32 %v2120
          %v2123 = vmul.u32.u64.compose %v2119, %v2114
          %v2124 = vextract.low.u32 %v2123
          %v2125 = vextract.high.u32 %v2123
          %v2126 = vmul.u32 %v2119, %v2110
          %v2127 = vadd.s32 %v2122, %v2124
          %vm2128 = vc.u32 %v2122, %v2124
          %v2129 = vadd.s32 %v2125, 1
          %v2130 = vsel %vm2128, %v2129, %v2125
          %v2131 = vadd.s32 %v2126, %v2130
          %v2132 = vadd.s32 %v2131, 536870912
          %v2133 = vshrl.u32 %v2132, 30
          %v2134 = vshll.u32 %v2133, 30
          %v2135 = vsub.s32 %v2131, %v2134
          %vm2136 = vcmp.lt.s32.totalorder %v2135, 0
          %v2137 = vsub.s32 0, %v2135
          %v2138 = vsel %vm2136, %v2137, %v2135
          %v2139 = vclz %v2138
          %v2140 = vsub.s32 %v2139, 2
          %vm2141 = vcmp.gt.s32.totalorder 0, %v2140
          %v2142 = vsel %vm2141, 0, %v2140
          %v2143 = vsub.s32 32, %v2142
          %v2144 = vshll.u32 %v2135, %v2142
          %v2145 = vshrl.u32 %v2127, %v2143
          %v2146 = vor.u32 %v2144, %v2145
          %v2147 = vsub.s32 4294967266, %v2142
          %v2148 = vadd.s32 %v2147, 127
          %v2149 = vshll.u32 %v2148, 23
          %v2150 = vor.u32 4788187, %v2149
          %v2151 = vand.u32 2147483647, %v2150
          %v2153 = vcvt.s32.f32 %v2146
          %v2154 = vmul.f32 %v2153, %v2151
          %v2155 = vxor.u32 %v2154, 2147483648
          %v2156 = vsel %vm2073, %v2155, %v2154
          %v2157 = vsub.s32 4, %v2133
          %v2158 = vsel %vm2073, %v2157, %v2133
          %v2159 = vsel %vm2072, %v2012, %v2156
          %v2160 = vsel %vm2072, 0, %v2158
          %v2161 = vcosq.f32.pop %v2159
          %v2162 = vsinq.f32.pop %v2159
          %vm2163 = vweird.f32 %v2012
          %v2164 = vand.u32 %v2160, 3
          %vm2165 = vcmp.lt.s32.totalorder %v2164, 2
          %vm2166 = vcmp.eq.s32.totalorder %v2164, 0
          %v2167 = vxor.u32 %v2162, 2147483648
          %v2168 = vsel %vm2166, %v2161, %v2167
          %vm2169 = vcmp.eq.s32.totalorder %v2164, 2
          %v2170 = vxor.u32 %v2161, 2147483648
          %v2171 = vsel %vm2169, %v2170, %v2162
          %v2172 = vsel %vm2165, %v2168, %v2171
          %v2173 = vsel %vm2163, nan, %v2172
          %v2174 = vand.u32 2147483647, %v2014
          %vm2175 = vcmp.le.f32.partialorder %v2174, 0.7853982
          %vm2176 = vcmp.lt.s32.totalorder %v2014, 0
          %v2177 = vand.u32 %v2014, 2139095040
          %v2178 = vshrl.u32 %v2177, 23
          %v2179 = vsub.s32 %v2178, 127
          %v2180 = vand.u32 2147483647, %v2014
          %v2181 = vand.u32 %v2180, 8388607
          %v2182 = vor.u32 %v2181, 8388608
          %v2183 = vsub.s32 0, %v2182
          %v2184 = vadd.s32 %v2179, 1
          %vm2185 = vcmp.gt.s32.totalorder %v2184, 0
          %v2186 = vsel %vm2185, %v2184, 0
          %v2187 = vshrl.u32 %v2186, 5
          %v2188 = vand.u32 %v2186, 31
          %v2189 = vsub.s32 32, %v2188
          %v2190 = vshrl.u32 683565275, %v2189
          %v2191 = vshll.u32 683565275, %v2188
          %v2192 = vshrl.u32 2475754826, %v2189
          %v2193 = vor.u32 %v2191, %v2192
          %v2194 = vshll.u32 2475754826, %v2188
          %v2195 = vshrl.u32 2131351028, %v2189
          %v2196 = vor.u32 %v2194, %v2195
          %v2197 = vshll.u32 2131351028, %v2188
          %v2198 = vshrl.u32 2102212464, %v2189
          %v2199 = vor.u32 %v2197, %v2198
          %v2200 = vshll.u32 2102212464, %v2188
          %v2201 = vshrl.u32 920167782, %v2189
          %v2202 = vor.u32 %v2200, %v2201
          %v2203 = vshll.u32 920167782, %v2188
          %v2204 = vshrl.u32 1326507024, %v2189
          %v2205 = vor.u32 %v2203, %v2204
          %vm2206 = vcmp.lt.s32.totalorder %v2187, 1
          %vm2207 = vcmp.lt.s32.totalorder %v2187, 2
          %vm2208 = vcmp.lt.s32.totalorder %v2187, 3
          %vm2209 = vcmp.lt.s32.totalorder %v2187, 4
          %v2210 = vsel %vm2206, %v2190, %v2193
          %v2211 = vsel %vm2209, %v2199, 2102212464
          %v2212 = vsel %vm2208, %v2196, %v2211
          %v2213 = vsel %vm2207, %v2210, %v2212
          %v2214 = vsel %vm2206, %v2193, %v2196
          %v2215 = vsel %vm2209, %v2202, 920167782
          %v2216 = vsel %vm2208, %v2199, %v2215
          %v2217 = vsel %vm2207, %v2214, %v2216
          %v2218 = vsel %vm2206, %v2196, %v2199
          %v2219 = vsel %vm2209, %v2205, 1326507024
          %v2220 = vsel %vm2208, %v2202, %v2219
          %v2221 = vsel %vm2207, %v2218, %v2220
          %v2222 = vshll.u32 %v2182, 8
          %v2223 = vmul.u32.u64.compose %v2222, %v2221
          %v2224 = vextract.low.u32 %v2223
          %v2225 = vextract.high.u32 %v2223
          %v2226 = vmul.u32.u64.compose %v2222, %v2217
          %v2227 = vextract.low.u32 %v2226
          %v2228 = vextract.high.u32 %v2226
          %v2229 = vmul.u32 %v2222, %v2213
          %v2230 = vadd.s32 %v2225, %v2227
          %vm2231 = vc.u32 %v2225, %v2227
          %v2232 = vadd.s32 %v2228, 1
          %v2233 = vsel %vm2231, %v2232, %v2228
          %v2234 = vadd.s32 %v2229, %v2233
          %v2235 = vadd.s32 %v2234, 536870912
          %v2236 = vshrl.u32 %v2235, 30
          %v2237 = vshll.u32 %v2236, 30
          %v2238 = vsub.s32 %v2234, %v2237
          %vm2239 = vcmp.lt.s32.totalorder %v2238, 0
          %v2240 = vsub.s32 0, %v2238
          %v2241 = vsel %vm2239, %v2240, %v2238
          %v2242 = vclz %v2241
          %v2243 = vsub.s32 %v2242, 2
          %vm2244 = vcmp.gt.s32.totalorder 0, %v2243
          %v2245 = vsel %vm2244, 0, %v2243
          %v2246 = vsub.s32 32, %v2245
          %v2247 = vshll.u32 %v2238, %v2245
          %v2248 = vshrl.u32 %v2230, %v2246
          %v2249 = vor.u32 %v2247, %v2248
          %v2250 = vsub.s32 4294967266, %v2245
          %v2251 = vadd.s32 %v2250, 127
          %v2252 = vshll.u32 %v2251, 23
          %v2253 = vor.u32 4788187, %v2252
          %v2254 = vand.u32 2147483647, %v2253
          %v2256 = vcvt.s32.f32 %v2249
          %v2257 = vmul.f32 %v2256, %v2254
          %v2258 = vxor.u32 %v2257, 2147483648
          %v2259 = vsel %vm2176, %v2258, %v2257
          %v2260 = vsub.s32 4, %v2236
          %v2261 = vsel %vm2176, %v2260, %v2236
          %v2262 = vsel %vm2175, %v2014, %v2259
          %v2263 = vsel %vm2175, 0, %v2261
          %v2264 = vcosq.f32.pop %v2262
          %v2265 = vsinq.f32.pop %v2262
          %vm2266 = vweird.f32 %v2014
          %v2267 = vand.u32 %v2263, 3
          %vm2268 = vcmp.lt.s32.totalorder %v2267, 2
          %vm2269 = vcmp.eq.s32.totalorder %v2267, 0
          %v2270 = vxor.u32 %v2265, 2147483648
          %v2271 = vsel %vm2269, %v2264, %v2270
          %vm2272 = vcmp.eq.s32.totalorder %v2267, 2
          %v2273 = vxor.u32 %v2264, 2147483648
          %v2274 = vsel %vm2272, %v2273, %v2265
          %v2275 = vsel %vm2268, %v2271, %v2274
          %v2276 = vsel %vm2266, nan, %v2275
          %v2277 = vand.u32 2147483647, %v2053
          %vm2278 = vcmp.le.f32.partialorder %v2277, 0.7853982
          %vm2279 = vcmp.lt.s32.totalorder %v2053, 0
          %v2280 = vand.u32 %v2053, 2139095040
          %v2281 = vshrl.u32 %v2280, 23
          %v2282 = vsub.s32 %v2281, 127
          %v2283 = vand.u32 2147483647, %v2053
          %v2284 = vand.u32 %v2283, 8388607
          %v2285 = vor.u32 %v2284, 8388608
          %v2286 = vsub.s32 0, %v2285
          %v2287 = vadd.s32 %v2282, 1
          %vm2288 = vcmp.gt.s32.totalorder %v2287, 0
          %v2289 = vsel %vm2288, %v2287, 0
          %v2290 = vshrl.u32 %v2289, 5
          %v2291 = vand.u32 %v2289, 31
          %v2292 = vsub.s32 32, %v2291
          %v2293 = vshrl.u32 683565275, %v2292
          %v2294 = vshll.u32 683565275, %v2291
          %v2295 = vshrl.u32 2475754826, %v2292
          %v2296 = vor.u32 %v2294, %v2295
          %v2297 = vshll.u32 2475754826, %v2291
          %v2298 = vshrl.u32 2131351028, %v2292
          %v2299 = vor.u32 %v2297, %v2298
          %v2300 = vshll.u32 2131351028, %v2291
          %v2301 = vshrl.u32 2102212464, %v2292
          %v2302 = vor.u32 %v2300, %v2301
          %v2303 = vshll.u32 2102212464, %v2291
          %v2304 = vshrl.u32 920167782, %v2292
          %v2305 = vor.u32 %v2303, %v2304
          %v2306 = vshll.u32 920167782, %v2291
          %v2307 = vshrl.u32 1326507024, %v2292
          %v2308 = vor.u32 %v2306, %v2307
          %vm2309 = vcmp.lt.s32.totalorder %v2290, 1
          %vm2310 = vcmp.lt.s32.totalorder %v2290, 2
          %vm2311 = vcmp.lt.s32.totalorder %v2290, 3
          %vm2312 = vcmp.lt.s32.totalorder %v2290, 4
          %v2313 = vsel %vm2309, %v2293, %v2296
          %v2314 = vsel %vm2312, %v2302, 2102212464
          %v2315 = vsel %vm2311, %v2299, %v2314
          %v2316 = vsel %vm2310, %v2313, %v2315
          %v2317 = vsel %vm2309, %v2296, %v2299
          %v2318 = vsel %vm2312, %v2305, 920167782
          %v2319 = vsel %vm2311, %v2302, %v2318
          %v2320 = vsel %vm2310, %v2317, %v2319
          %v2321 = vsel %vm2309, %v2299, %v2302
          %v2322 = vsel %vm2312, %v2308, 1326507024
          %v2323 = vsel %vm2311, %v2305, %v2322
          %v2324 = vsel %vm2310, %v2321, %v2323
          %v2325 = vshll.u32 %v2285, 8
          %v2326 = vmul.u32.u64.compose %v2325, %v2324
          %v2327 = vextract.low.u32 %v2326
          %v2328 = vextract.high.u32 %v2326
          %v2329 = vmul.u32.u64.compose %v2325, %v2320
          %v2330 = vextract.low.u32 %v2329
          %v2331 = vextract.high.u32 %v2329
          %v2332 = vmul.u32 %v2325, %v2316
          %v2333 = vadd.s32 %v2328, %v2330
          %vm2334 = vc.u32 %v2328, %v2330
          %v2335 = vadd.s32 %v2331, 1
          %v2336 = vsel %vm2334, %v2335, %v2331
          %v2337 = vadd.s32 %v2332, %v2336
          %v2338 = vadd.s32 %v2337, 536870912
          %v2339 = vshrl.u32 %v2338, 30
          %v2340 = vshll.u32 %v2339, 30
          %v2341 = vsub.s32 %v2337, %v2340
          %vm2342 = vcmp.lt.s32.totalorder %v2341, 0
          %v2343 = vsub.s32 0, %v2341
          %v2344 = vsel %vm2342, %v2343, %v2341
          %v2345 = vclz %v2344
          %v2346 = vsub.s32 %v2345, 2
          %vm2347 = vcmp.gt.s32.totalorder 0, %v2346
          %v2348 = vsel %vm2347, 0, %v2346
          %v2349 = vsub.s32 32, %v2348
          %v2350 = vshll.u32 %v2341, %v2348
          %v2351 = vshrl.u32 %v2333, %v2349
          %v2352 = vor.u32 %v2350, %v2351
          %v2353 = vsub.s32 4294967266, %v2348
          %v2354 = vadd.s32 %v2353, 127
          %v2355 = vshll.u32 %v2354, 23
          %v2356 = vor.u32 4788187, %v2355
          %v2357 = vand.u32 2147483647, %v2356
          %v2359 = vcvt.s32.f32 %v2352
          %v2360 = vmul.f32 %v2359, %v2357
          %v2361 = vxor.u32 %v2360, 2147483648
          %v2362 = vsel %vm2279, %v2361, %v2360
          %v2363 = vsub.s32 4, %v2339
          %v2364 = vsel %vm2279, %v2363, %v2339
          %v2365 = vsel %vm2278, %v2053, %v2362
          %v2366 = vsel %vm2278, 0, %v2364
          %v2367 = vcosq.f32.pop %v2365
          %v2368 = vsinq.f32.pop %v2365
          %vm2369 = vweird.f32 %v2053
          %v2370 = vand.u32 %v2366, 3
          %vm2371 = vcmp.lt.s32.totalorder %v2370, 2
          %vm2372 = vcmp.eq.s32.totalorder %v2370, 0
          %v2373 = vxor.u32 %v2368, 2147483648
          %v2374 = vsel %vm2372, %v2367, %v2373
          %vm2375 = vcmp.eq.s32.totalorder %v2370, 2
          %v2376 = vxor.u32 %v2367, 2147483648
          %v2377 = vsel %vm2375, %v2376, %v2368
          %v2378 = vsel %vm2371, %v2374, %v2377
          %v2379 = vsel %vm2369, nan, %v2378
          %v2380 = vand.u32 2147483647, %v2055
          %vm2381 = vcmp.le.f32.partialorder %v2380, 0.7853982
          %vm2382 = vcmp.lt.s32.totalorder %v2055, 0
          %v2383 = vand.u32 %v2055, 2139095040
          %v2384 = vshrl.u32 %v2383, 23
          %v2385 = vsub.s32 %v2384, 127
          %v2386 = vand.u32 2147483647, %v2055
          %v2387 = vand.u32 %v2386, 8388607
          %v2388 = vor.u32 %v2387, 8388608
          %v2389 = vsub.s32 0, %v2388
          %v2390 = vadd.s32 %v2385, 1
          %vm2391 = vcmp.gt.s32.totalorder %v2390, 0
          %v2392 = vsel %vm2391, %v2390, 0
          %v2393 = vshrl.u32 %v2392, 5
          %v2394 = vand.u32 %v2392, 31
          %v2395 = vsub.s32 32, %v2394
          %v2396 = vshrl.u32 683565275, %v2395
          %v2397 = vshll.u32 683565275, %v2394
          %v2398 = vshrl.u32 2475754826, %v2395
          %v2399 = vor.u32 %v2397, %v2398
          %v2400 = vshll.u32 2475754826, %v2394
          %v2401 = vshrl.u32 2131351028, %v2395
          %v2402 = vor.u32 %v2400, %v2401
          %v2403 = vshll.u32 2131351028, %v2394
          %v2404 = vshrl.u32 2102212464, %v2395
          %v2405 = vor.u32 %v2403, %v2404
          %v2406 = vshll.u32 2102212464, %v2394
          %v2407 = vshrl.u32 920167782, %v2395
          %v2408 = vor.u32 %v2406, %v2407
          %v2409 = vshll.u32 920167782, %v2394
          %v2410 = vshrl.u32 1326507024, %v2395
          %v2411 = vor.u32 %v2409, %v2410
          %vm2412 = vcmp.lt.s32.totalorder %v2393, 1
          %vm2413 = vcmp.lt.s32.totalorder %v2393, 2
          %vm2414 = vcmp.lt.s32.totalorder %v2393, 3
          %vm2415 = vcmp.lt.s32.totalorder %v2393, 4
          %v2416 = vsel %vm2412, %v2396, %v2399
          %v2417 = vsel %vm2415, %v2405, 2102212464
          %v2418 = vsel %vm2414, %v2402, %v2417
          %v2419 = vsel %vm2413, %v2416, %v2418
          %v2420 = vsel %vm2412, %v2399, %v2402
          %v2421 = vsel %vm2415, %v2408, 920167782
          %v2422 = vsel %vm2414, %v2405, %v2421
          %v2423 = vsel %vm2413, %v2420, %v2422
          %v2424 = vsel %vm2412, %v2402, %v2405
          %v2425 = vsel %vm2415, %v2411, 1326507024
          %v2426 = vsel %vm2414, %v2408, %v2425
          %v2427 = vsel %vm2413, %v2424, %v2426
          %v2428 = vshll.u32 %v2388, 8
          %v2429 = vmul.u32.u64.compose %v2428, %v2427
          %v2430 = vextract.low.u32 %v2429
          %v2431 = vextract.high.u32 %v2429
          %v2432 = vmul.u32.u64.compose %v2428, %v2423
          %v2433 = vextract.low.u32 %v2432
          %v2434 = vextract.high.u32 %v2432
          %v2435 = vmul.u32 %v2428, %v2419
          %v2436 = vadd.s32 %v2431, %v2433
          %vm2437 = vc.u32 %v2431, %v2433
          %v2438 = vadd.s32 %v2434, 1
          %v2439 = vsel %vm2437, %v2438, %v2434
          %v2440 = vadd.s32 %v2435, %v2439
          %v2441 = vadd.s32 %v2440, 536870912
          %v2442 = vshrl.u32 %v2441, 30
          %v2443 = vshll.u32 %v2442, 30
          %v2444 = vsub.s32 %v2440, %v2443
          %vm2445 = vcmp.lt.s32.totalorder %v2444, 0
          %v2446 = vsub.s32 0, %v2444
          %v2447 = vsel %vm2445, %v2446, %v2444
          %v2448 = vclz %v2447
          %v2449 = vsub.s32 %v2448, 2
          %vm2450 = vcmp.gt.s32.totalorder 0, %v2449
          %v2451 = vsel %vm2450, 0, %v2449
          %v2452 = vsub.s32 32, %v2451
          %v2453 = vshll.u32 %v2444, %v2451
          %v2454 = vshrl.u32 %v2436, %v2452
          %v2455 = vor.u32 %v2453, %v2454
          %v2456 = vsub.s32 4294967266, %v2451
          %v2457 = vadd.s32 %v2456, 127
          %v2458 = vshll.u32 %v2457, 23
          %v2459 = vor.u32 4788187, %v2458
          %v2460 = vand.u32 2147483647, %v2459
          %v2462 = vcvt.s32.f32 %v2455
          %v2463 = vmul.f32 %v2462, %v2460
          %v2464 = vxor.u32 %v2463, 2147483648
          %v2465 = vsel %vm2382, %v2464, %v2463
          %v2466 = vsub.s32 4, %v2442
          %v2467 = vsel %vm2382, %v2466, %v2442
          %v2468 = vsel %vm2381, %v2055, %v2465
          %v2469 = vsel %vm2381, 0, %v2467
          %v2470 = vcosq.f32.pop %v2468
          %v2471 = vsinq.f32.pop %v2468
          %vm2472 = vweird.f32 %v2055
          %v2473 = vand.u32 %v2469, 3
          %vm2474 = vcmp.lt.s32.totalorder %v2473, 2
          %vm2475 = vcmp.eq.s32.totalorder %v2473, 0
          %v2476 = vxor.u32 %v2471, 2147483648
          %v2477 = vsel %vm2475, %v2470, %v2476
          %vm2478 = vcmp.eq.s32.totalorder %v2473, 2
          %v2479 = vxor.u32 %v2470, 2147483648
          %v2480 = vsel %vm2478, %v2479, %v2471
          %v2481 = vsel %vm2474, %v2477, %v2480
          %v2482 = vsel %vm2472, nan, %v2481
          %v2483 = vmul.f32 %v2067, %v2173
          %v2484 = vmul.f32 %v2068, %v2276
          %v2485 = vmul.f32 %v2069, %v2379
          %v2486 = vmul.f32 %v2070, %v2482
          %2487 = vst [vmem:[#allocation2] sm:$0xff] %v2483
          %2488 = vst [vmem:[#allocation2 + $0x8] sm:$0xff] %v2484
          %2489 = vst [vmem:[#allocation2 + $0x10] sm:$0xff] %v2485
          %2490 = vst [vmem:[#allocation2 + $0x18] sm:$0xff] %v2486
          %v2491 = vand.u32 2147483647, %v2012
          %vm2492 = vcmp.le.f32.partialorder %v2491, 0.7853982
          %vm2493 = vcmp.lt.s32.totalorder %v2012, 0
          %v2494 = vand.u32 %v2012, 2139095040
          %v2495 = vshrl.u32 %v2494, 23
          %v2496 = vsub.s32 %v2495, 127
          %v2497 = vand.u32 2147483647, %v2012
          %v2498 = vand.u32 %v2497, 8388607
          %v2499 = vor.u32 %v2498, 8388608
          %v2500 = vsub.s32 0, %v2499
          %v2501 = vadd.s32 %v2496, 1
          %vm2502 = vcmp.gt.s32.totalorder %v2501, 0
          %v2503 = vsel %vm2502, %v2501, 0
          %v2504 = vshrl.u32 %v2503, 5
          %v2505 = vand.u32 %v2503, 31
          %v2506 = vsub.s32 32, %v2505
          %v2507 = vshrl.u32 683565275, %v2506
          %v2508 = vshll.u32 683565275, %v2505
          %v2509 = vshrl.u32 2475754826, %v2506
          %v2510 = vor.u32 %v2508, %v2509
          %v2511 = vshll.u32 2475754826, %v2505
          %v2512 = vshrl.u32 2131351028, %v2506
          %v2513 = vor.u32 %v2511, %v2512
          %v2514 = vshll.u32 2131351028, %v2505
          %v2515 = vshrl.u32 2102212464, %v2506
          %v2516 = vor.u32 %v2514, %v2515
          %v2517 = vshll.u32 2102212464, %v2505
          %v2518 = vshrl.u32 920167782, %v2506
          %v2519 = vor.u32 %v2517, %v2518
          %v2520 = vshll.u32 920167782, %v2505
          %v2521 = vshrl.u32 1326507024, %v2506
          %v2522 = vor.u32 %v2520, %v2521
          %vm2523 = vcmp.lt.s32.totalorder %v2504, 1
          %vm2524 = vcmp.lt.s32.totalorder %v2504, 2
          %vm2525 = vcmp.lt.s32.totalorder %v2504, 3
          %vm2526 = vcmp.lt.s32.totalorder %v2504, 4
          %v2527 = vsel %vm2523, %v2507, %v2510
          %v2528 = vsel %vm2526, %v2516, 2102212464
          %v2529 = vsel %vm2525, %v2513, %v2528
          %v2530 = vsel %vm2524, %v2527, %v2529
          %v2531 = vsel %vm2523, %v2510, %v2513
          %v2532 = vsel %vm2526, %v2519, 920167782
          %v2533 = vsel %vm2525, %v2516, %v2532
          %v2534 = vsel %vm2524, %v2531, %v2533
          %v2535 = vsel %vm2523, %v2513, %v2516
          %v2536 = vsel %vm2526, %v2522, 1326507024
          %v2537 = vsel %vm2525, %v2519, %v2536
          %v2538 = vsel %vm2524, %v2535, %v2537
          %v2539 = vshll.u32 %v2499, 8
          %v2540 = vmul.u32.u64.compose %v2539, %v2538
          %v2541 = vextract.low.u32 %v2540
          %v2542 = vextract.high.u32 %v2540
          %v2543 = vmul.u32.u64.compose %v2539, %v2534
          %v2544 = vextract.low.u32 %v2543
          %v2545 = vextract.high.u32 %v2543
          %v2546 = vmul.u32 %v2539, %v2530
          %v2547 = vadd.s32 %v2542, %v2544
          %vm2548 = vc.u32 %v2542, %v2544
          %v2549 = vadd.s32 %v2545, 1
          %v2550 = vsel %vm2548, %v2549, %v2545
          %v2551 = vadd.s32 %v2546, %v2550
          %v2552 = vadd.s32 %v2551, 536870912
          %v2553 = vshrl.u32 %v2552, 30
          %v2554 = vshll.u32 %v2553, 30
          %v2555 = vsub.s32 %v2551, %v2554
          %vm2556 = vcmp.lt.s32.totalorder %v2555, 0
          %v2557 = vsub.s32 0, %v2555
          %v2558 = vsel %vm2556, %v2557, %v2555
          %v2559 = vclz %v2558
          %v2560 = vsub.s32 %v2559, 2
          %vm2561 = vcmp.gt.s32.totalorder 0, %v2560
          %v2562 = vsel %vm2561, 0, %v2560
          %v2563 = vsub.s32 32, %v2562
          %v2564 = vshll.u32 %v2555, %v2562
          %v2565 = vshrl.u32 %v2547, %v2563
          %v2566 = vor.u32 %v2564, %v2565
          %v2567 = vsub.s32 4294967266, %v2562
          %v2568 = vadd.s32 %v2567, 127
          %v2569 = vshll.u32 %v2568, 23
          %v2570 = vor.u32 4788187, %v2569
          %v2571 = vand.u32 2147483647, %v2570
          %v2573 = vcvt.s32.f32 %v2566
          %v2574 = vmul.f32 %v2573, %v2571
          %v2575 = vxor.u32 %v2574, 2147483648
          %v2576 = vsel %vm2493, %v2575, %v2574
          %v2577 = vsub.s32 4, %v2553
          %v2578 = vsel %vm2493, %v2577, %v2553
          %v2579 = vsel %vm2492, %v2012, %v2576
          %v2580 = vsel %vm2492, 0, %v2578
          %v2581 = vcosq.f32.pop %v2579
          %v2582 = vsinq.f32.pop %v2579
          %vm2583 = vweird.f32 %v2012
          %v2584 = vadd.s32 %v2580, 3
          %v2585 = vand.u32 %v2584, 3
          %vm2586 = vcmp.lt.s32.totalorder %v2585, 2
          %vm2587 = vcmp.eq.s32.totalorder %v2585, 0
          %v2588 = vxor.u32 %v2582, 2147483648
          %v2589 = vsel %vm2587, %v2581, %v2588
          %vm2590 = vcmp.eq.s32.totalorder %v2585, 2
          %v2591 = vxor.u32 %v2581, 2147483648
          %v2592 = vsel %vm2590, %v2591, %v2582
          %v2593 = vsel %vm2586, %v2589, %v2592
          %v2594 = vsel %vm2583, nan, %v2593
          %v2595 = vand.u32 2147483647, %v2014
          %vm2596 = vcmp.le.f32.partialorder %v2595, 0.7853982
          %vm2597 = vcmp.lt.s32.totalorder %v2014, 0
          %v2598 = vand.u32 %v2014, 2139095040
          %v2599 = vshrl.u32 %v2598, 23
          %v2600 = vsub.s32 %v2599, 127
          %v2601 = vand.u32 2147483647, %v2014
          %v2602 = vand.u32 %v2601, 8388607
          %v2603 = vor.u32 %v2602, 8388608
          %v2604 = vsub.s32 0, %v2603
          %v2605 = vadd.s32 %v2600, 1
          %vm2606 = vcmp.gt.s32.totalorder %v2605, 0
          %v2607 = vsel %vm2606, %v2605, 0
          %v2608 = vshrl.u32 %v2607, 5
          %v2609 = vand.u32 %v2607, 31
          %v2610 = vsub.s32 32, %v2609
          %v2611 = vshrl.u32 683565275, %v2610
          %v2612 = vshll.u32 683565275, %v2609
          %v2613 = vshrl.u32 2475754826, %v2610
          %v2614 = vor.u32 %v2612, %v2613
          %v2615 = vshll.u32 2475754826, %v2609
          %v2616 = vshrl.u32 2131351028, %v2610
          %v2617 = vor.u32 %v2615, %v2616
          %v2618 = vshll.u32 2131351028, %v2609
          %v2619 = vshrl.u32 2102212464, %v2610
          %v2620 = vor.u32 %v2618, %v2619
          %v2621 = vshll.u32 2102212464, %v2609
          %v2622 = vshrl.u32 920167782, %v2610
          %v2623 = vor.u32 %v2621, %v2622
          %v2624 = vshll.u32 920167782, %v2609
          %v2625 = vshrl.u32 1326507024, %v2610
          %v2626 = vor.u32 %v2624, %v2625
          %vm2627 = vcmp.lt.s32.totalorder %v2608, 1
          %vm2628 = vcmp.lt.s32.totalorder %v2608, 2
          %vm2629 = vcmp.lt.s32.totalorder %v2608, 3
          %vm2630 = vcmp.lt.s32.totalorder %v2608, 4
          %v2631 = vsel %vm2627, %v2611, %v2614
          %v2632 = vsel %vm2630, %v2620, 2102212464
          %v2633 = vsel %vm2629, %v2617, %v2632
          %v2634 = vsel %vm2628, %v2631, %v2633
          %v2635 = vsel %vm2627, %v2614, %v2617
          %v2636 = vsel %vm2630, %v2623, 920167782
          %v2637 = vsel %vm2629, %v2620, %v2636
          %v2638 = vsel %vm2628, %v2635, %v2637
          %v2639 = vsel %vm2627, %v2617, %v2620
          %v2640 = vsel %vm2630, %v2626, 1326507024
          %v2641 = vsel %vm2629, %v2623, %v2640
          %v2642 = vsel %vm2628, %v2639, %v2641
          %v2643 = vshll.u32 %v2603, 8
          %v2644 = vmul.u32.u64.compose %v2643, %v2642
          %v2645 = vextract.low.u32 %v2644
          %v2646 = vextract.high.u32 %v2644
          %v2647 = vmul.u32.u64.compose %v2643, %v2638
          %v2648 = vextract.low.u32 %v2647
          %v2649 = vextract.high.u32 %v2647
          %v2650 = vmul.u32 %v2643, %v2634
          %v2651 = vadd.s32 %v2646, %v2648
          %vm2652 = vc.u32 %v2646, %v2648
          %v2653 = vadd.s32 %v2649, 1
          %v2654 = vsel %vm2652, %v2653, %v2649
          %v2655 = vadd.s32 %v2650, %v2654
          %v2656 = vadd.s32 %v2655, 536870912
          %v2657 = vshrl.u32 %v2656, 30
          %v2658 = vshll.u32 %v2657, 30
          %v2659 = vsub.s32 %v2655, %v2658
          %vm2660 = vcmp.lt.s32.totalorder %v2659, 0
          %v2661 = vsub.s32 0, %v2659
          %v2662 = vsel %vm2660, %v2661, %v2659
          %v2663 = vclz %v2662
          %v2664 = vsub.s32 %v2663, 2
          %vm2665 = vcmp.gt.s32.totalorder 0, %v2664
          %v2666 = vsel %vm2665, 0, %v2664
          %v2667 = vsub.s32 32, %v2666
          %v2668 = vshll.u32 %v2659, %v2666
          %v2669 = vshrl.u32 %v2651, %v2667
          %v2670 = vor.u32 %v2668, %v2669
          %v2671 = vsub.s32 4294967266, %v2666
          %v2672 = vadd.s32 %v2671, 127
          %v2673 = vshll.u32 %v2672, 23
          %v2674 = vor.u32 4788187, %v2673
          %v2675 = vand.u32 2147483647, %v2674
          %v2677 = vcvt.s32.f32 %v2670
          %v2678 = vmul.f32 %v2677, %v2675
          %v2679 = vxor.u32 %v2678, 2147483648
          %v2680 = vsel %vm2597, %v2679, %v2678
          %v2681 = vsub.s32 4, %v2657
          %v2682 = vsel %vm2597, %v2681, %v2657
          %v2683 = vsel %vm2596, %v2014, %v2680
          %v2684 = vsel %vm2596, 0, %v2682
          %v2685 = vcosq.f32.pop %v2683
          %v2686 = vsinq.f32.pop %v2683
          %vm2687 = vweird.f32 %v2014
          %v2688 = vadd.s32 %v2684, 3
          %v2689 = vand.u32 %v2688, 3
          %vm2690 = vcmp.lt.s32.totalorder %v2689, 2
          %vm2691 = vcmp.eq.s32.totalorder %v2689, 0
          %v2692 = vxor.u32 %v2686, 2147483648
          %v2693 = vsel %vm2691, %v2685, %v2692
          %vm2694 = vcmp.eq.s32.totalorder %v2689, 2
          %v2695 = vxor.u32 %v2685, 2147483648
          %v2696 = vsel %vm2694, %v2695, %v2686
          %v2697 = vsel %vm2690, %v2693, %v2696
          %v2698 = vsel %vm2687, nan, %v2697
          %v2699 = vand.u32 2147483647, %v2053
          %vm2700 = vcmp.le.f32.partialorder %v2699, 0.7853982
          %vm2701 = vcmp.lt.s32.totalorder %v2053, 0
          %v2702 = vand.u32 %v2053, 2139095040
          %v2703 = vshrl.u32 %v2702, 23
          %v2704 = vsub.s32 %v2703, 127
          %v2705 = vand.u32 2147483647, %v2053
          %v2706 = vand.u32 %v2705, 8388607
          %v2707 = vor.u32 %v2706, 8388608
          %v2708 = vsub.s32 0, %v2707
          %v2709 = vadd.s32 %v2704, 1
          %vm2710 = vcmp.gt.s32.totalorder %v2709, 0
          %v2711 = vsel %vm2710, %v2709, 0
          %v2712 = vshrl.u32 %v2711, 5
          %v2713 = vand.u32 %v2711, 31
          %v2714 = vsub.s32 32, %v2713
          %v2715 = vshrl.u32 683565275, %v2714
          %v2716 = vshll.u32 683565275, %v2713
          %v2717 = vshrl.u32 2475754826, %v2714
          %v2718 = vor.u32 %v2716, %v2717
          %v2719 = vshll.u32 2475754826, %v2713
          %v2720 = vshrl.u32 2131351028, %v2714
          %v2721 = vor.u32 %v2719, %v2720
          %v2722 = vshll.u32 2131351028, %v2713
          %v2723 = vshrl.u32 2102212464, %v2714
          %v2724 = vor.u32 %v2722, %v2723
          %v2725 = vshll.u32 2102212464, %v2713
          %v2726 = vshrl.u32 920167782, %v2714
          %v2727 = vor.u32 %v2725, %v2726
          %v2728 = vshll.u32 920167782, %v2713
          %v2729 = vshrl.u32 1326507024, %v2714
          %v2730 = vor.u32 %v2728, %v2729
          %vm2731 = vcmp.lt.s32.totalorder %v2712, 1
          %vm2732 = vcmp.lt.s32.totalorder %v2712, 2
          %vm2733 = vcmp.lt.s32.totalorder %v2712, 3
          %vm2734 = vcmp.lt.s32.totalorder %v2712, 4
          %v2735 = vsel %vm2731, %v2715, %v2718
          %v2736 = vsel %vm2734, %v2724, 2102212464
          %v2737 = vsel %vm2733, %v2721, %v2736
          %v2738 = vsel %vm2732, %v2735, %v2737
          %v2739 = vsel %vm2731, %v2718, %v2721
          %v2740 = vsel %vm2734, %v2727, 920167782
          %v2741 = vsel %vm2733, %v2724, %v2740
          %v2742 = vsel %vm2732, %v2739, %v2741
          %v2743 = vsel %vm2731, %v2721, %v2724
          %v2744 = vsel %vm2734, %v2730, 1326507024
          %v2745 = vsel %vm2733, %v2727, %v2744
          %v2746 = vsel %vm2732, %v2743, %v2745
          %v2747 = vshll.u32 %v2707, 8
          %v2748 = vmul.u32.u64.compose %v2747, %v2746
          %v2749 = vextract.low.u32 %v2748
          %v2750 = vextract.high.u32 %v2748
          %v2751 = vmul.u32.u64.compose %v2747, %v2742
          %v2752 = vextract.low.u32 %v2751
          %v2753 = vextract.high.u32 %v2751
          %v2754 = vmul.u32 %v2747, %v2738
          %v2755 = vadd.s32 %v2750, %v2752
          %vm2756 = vc.u32 %v2750, %v2752
          %v2757 = vadd.s32 %v2753, 1
          %v2758 = vsel %vm2756, %v2757, %v2753
          %v2759 = vadd.s32 %v2754, %v2758
          %v2760 = vadd.s32 %v2759, 536870912
          %v2761 = vshrl.u32 %v2760, 30
          %v2762 = vshll.u32 %v2761, 30
          %v2763 = vsub.s32 %v2759, %v2762
          %vm2764 = vcmp.lt.s32.totalorder %v2763, 0
          %v2765 = vsub.s32 0, %v2763
          %v2766 = vsel %vm2764, %v2765, %v2763
          %v2767 = vclz %v2766
          %v2768 = vsub.s32 %v2767, 2
          %vm2769 = vcmp.gt.s32.totalorder 0, %v2768
          %v2770 = vsel %vm2769, 0, %v2768
          %v2771 = vsub.s32 32, %v2770
          %v2772 = vshll.u32 %v2763, %v2770
          %v2773 = vshrl.u32 %v2755, %v2771
          %v2774 = vor.u32 %v2772, %v2773
          %v2775 = vsub.s32 4294967266, %v2770
          %v2776 = vadd.s32 %v2775, 127
          %v2777 = vshll.u32 %v2776, 23
          %v2778 = vor.u32 4788187, %v2777
          %v2779 = vand.u32 2147483647, %v2778
          %v2781 = vcvt.s32.f32 %v2774
          %v2782 = vmul.f32 %v2781, %v2779
          %v2783 = vxor.u32 %v2782, 2147483648
          %v2784 = vsel %vm2701, %v2783, %v2782
          %v2785 = vsub.s32 4, %v2761
          %v2786 = vsel %vm2701, %v2785, %v2761
          %v2787 = vsel %vm2700, %v2053, %v2784
          %v2788 = vsel %vm2700, 0, %v2786
          %v2789 = vcosq.f32.pop %v2787
          %v2790 = vsinq.f32.pop %v2787
          %vm2791 = vweird.f32 %v2053
          %v2792 = vadd.s32 %v2788, 3
          %v2793 = vand.u32 %v2792, 3
          %vm2794 = vcmp.lt.s32.totalorder %v2793, 2
          %vm2795 = vcmp.eq.s32.totalorder %v2793, 0
          %v2796 = vxor.u32 %v2790, 2147483648
          %v2797 = vsel %vm2795, %v2789, %v2796
          %vm2798 = vcmp.eq.s32.totalorder %v2793, 2
          %v2799 = vxor.u32 %v2789, 2147483648
          %v2800 = vsel %vm2798, %v2799, %v2790
          %v2801 = vsel %vm2794, %v2797, %v2800
          %v2802 = vsel %vm2791, nan, %v2801
          %v2803 = vand.u32 2147483647, %v2055
          %vm2804 = vcmp.le.f32.partialorder %v2803, 0.7853982
          %vm2805 = vcmp.lt.s32.totalorder %v2055, 0
          %v2806 = vand.u32 %v2055, 2139095040
          %v2807 = vshrl.u32 %v2806, 23
          %v2808 = vsub.s32 %v2807, 127
          %v2809 = vand.u32 2147483647, %v2055
          %v2810 = vand.u32 %v2809, 8388607
          %v2811 = vor.u32 %v2810, 8388608
          %v2812 = vsub.s32 0, %v2811
          %v2813 = vadd.s32 %v2808, 1
          %vm2814 = vcmp.gt.s32.totalorder %v2813, 0
          %v2815 = vsel %vm2814, %v2813, 0
          %v2816 = vshrl.u32 %v2815, 5
          %v2817 = vand.u32 %v2815, 31
          %v2818 = vsub.s32 32, %v2817
          %v2819 = vshrl.u32 683565275, %v2818
          %v2820 = vshll.u32 683565275, %v2817
          %v2821 = vshrl.u32 2475754826, %v2818
          %v2822 = vor.u32 %v2820, %v2821
          %v2823 = vshll.u32 2475754826, %v2817
          %v2824 = vshrl.u32 2131351028, %v2818
          %v2825 = vor.u32 %v2823, %v2824
          %v2826 = vshll.u32 2131351028, %v2817
          %v2827 = vshrl.u32 2102212464, %v2818
          %v2828 = vor.u32 %v2826, %v2827
          %v2829 = vshll.u32 2102212464, %v2817
          %v2830 = vshrl.u32 920167782, %v2818
          %v2831 = vor.u32 %v2829, %v2830
          %v2832 = vshll.u32 920167782, %v2817
          %v2833 = vshrl.u32 1326507024, %v2818
          %v2834 = vor.u32 %v2832, %v2833
          %vm2835 = vcmp.lt.s32.totalorder %v2816, 1
          %vm2836 = vcmp.lt.s32.totalorder %v2816, 2
          %vm2837 = vcmp.lt.s32.totalorder %v2816, 3
          %vm2838 = vcmp.lt.s32.totalorder %v2816, 4
          %v2839 = vsel %vm2835, %v2819, %v2822
          %v2840 = vsel %vm2838, %v2828, 2102212464
          %v2841 = vsel %vm2837, %v2825, %v2840
          %v2842 = vsel %vm2836, %v2839, %v2841
          %v2843 = vsel %vm2835, %v2822, %v2825
          %v2844 = vsel %vm2838, %v2831, 920167782
          %v2845 = vsel %vm2837, %v2828, %v2844
          %v2846 = vsel %vm2836, %v2843, %v2845
          %v2847 = vsel %vm2835, %v2825, %v2828
          %v2848 = vsel %vm2838, %v2834, 1326507024
          %v2849 = vsel %vm2837, %v2831, %v2848
          %v2850 = vsel %vm2836, %v2847, %v2849
          %v2851 = vshll.u32 %v2811, 8
          %v2852 = vmul.u32.u64.compose %v2851, %v2850
          %v2853 = vextract.low.u32 %v2852
          %v2854 = vextract.high.u32 %v2852
          %v2855 = vmul.u32.u64.compose %v2851, %v2846
          %v2856 = vextract.low.u32 %v2855
          %v2857 = vextract.high.u32 %v2855
          %v2858 = vmul.u32 %v2851, %v2842
          %v2859 = vadd.s32 %v2854, %v2856
          %vm2860 = vc.u32 %v2854, %v2856
          %v2861 = vadd.s32 %v2857, 1
          %v2862 = vsel %vm2860, %v2861, %v2857
          %v2863 = vadd.s32 %v2858, %v2862
          %v2864 = vadd.s32 %v2863, 536870912
          %v2865 = vshrl.u32 %v2864, 30
          %v2866 = vshll.u32 %v2865, 30
          %v2867 = vsub.s32 %v2863, %v2866
          %vm2868 = vcmp.lt.s32.totalorder %v2867, 0
          %v2869 = vsub.s32 0, %v2867
          %v2870 = vsel %vm2868, %v2869, %v2867
          %v2871 = vclz %v2870
          %v2872 = vsub.s32 %v2871, 2
          %vm2873 = vcmp.gt.s32.totalorder 0, %v2872
          %v2874 = vsel %vm2873, 0, %v2872
          %v2875 = vsub.s32 32, %v2874
          %v2876 = vshll.u32 %v2867, %v2874
          %v2877 = vshrl.u32 %v2859, %v2875
          %v2878 = vor.u32 %v2876, %v2877
          %v2879 = vsub.s32 4294967266, %v2874
          %v2880 = vadd.s32 %v2879, 127
          %v2881 = vshll.u32 %v2880, 23
          %v2882 = vor.u32 4788187, %v2881
          %v2883 = vand.u32 2147483647, %v2882
          %v2885 = vcvt.s32.f32 %v2878
          %v2886 = vmul.f32 %v2885, %v2883
          %v2887 = vxor.u32 %v2886, 2147483648
          %v2888 = vsel %vm2805, %v2887, %v2886
          %v2889 = vsub.s32 4, %v2865
          %v2890 = vsel %vm2805, %v2889, %v2865
          %v2891 = vsel %vm2804, %v2055, %v2888
          %v2892 = vsel %vm2804, 0, %v2890
          %v2893 = vcosq.f32.pop %v2891
          %v2894 = vsinq.f32.pop %v2891
          %vm2895 = vweird.f32 %v2055
          %v2896 = vadd.s32 %v2892, 3
          %v2897 = vand.u32 %v2896, 3
          %vm2898 = vcmp.lt.s32.totalorder %v2897, 2
          %vm2899 = vcmp.eq.s32.totalorder %v2897, 0
          %v2900 = vxor.u32 %v2894, 2147483648
          %v2901 = vsel %vm2899, %v2893, %v2900
          %vm2902 = vcmp.eq.s32.totalorder %v2897, 2
          %v2903 = vxor.u32 %v2893, 2147483648
          %v2904 = vsel %vm2902, %v2903, %v2894
          %v2905 = vsel %vm2898, %v2901, %v2904
          %v2906 = vsel %vm2895, nan, %v2905
          %v2907 = vmul.f32 %v2067, %v2594
          %v2908 = vmul.f32 %v2068, %v2698
          %v2909 = vmul.f32 %v2069, %v2802
          %v2910 = vmul.f32 %v2070, %v2906
          %2911 = vst [vmem:[#allocation3] sm:$0xff] %v2907
          %2912 = vst [vmem:[#allocation3 + $0x8] sm:$0xff] %v2908
          %2913 = vst [vmem:[#allocation3 + $0x10] sm:$0xff] %v2909
          %2914 = vst [vmem:[#allocation3 + $0x18] sm:$0xff] %v2910
          %v2915 = vld [vmem:[#allocation28] sm:$0x3]
          %v2916 = vld [vmem:[%s19] sm:$0x3]
          %v2917 = vlaneseq
          %v2918 = vshrl.u32 %v2917, 7
          %v2919 = vsub.s32 0, %v2918
          %v2920 = vrot.slane %v2915, %v2919
          %v2921 = vmul.f32 %v1752, %v2920
          %v2922 = vsel %vm1116, %v2921, 0.0
          %2923 = vadd.xlane.f32.xlu0 %v2922
          %v2924 = vpop.xlane.xlu0 %2923
          %v2925 = vlaneseq
          %v2926 = vshrl.u32 %v2925, 7
          %v2927 = vsub.s32 0, %v2926
          %v2928 = vrot.slane %v2916, %v2927
          %v2929 = vadd.f32 %v2924, %v2928
          %v2930 = vlaneseq
          %v2931 = vshrl.u32 %v2930, 7
          %v2932 = vsub.s32 1, %v2931
          %v2933 = vrot.slane %v2915, %v2932
          %v2934 = vmul.f32 %v1752, %v2933
          %v2935 = vsel %vm1116, %v2934, 0.0
          %2936 = vadd.xlane.f32.xlu0 %v2935
          %v2937 = vpop.xlane.xlu0 %2936
          %v2938 = vlaneseq
          %v2939 = vshrl.u32 %v2938, 7
          %v2940 = vsub.s32 1, %v2939
          %v2941 = vrot.slane %v2916, %v2940
          %v2942 = vadd.f32 %v2937, %v2941
          %v2943 = vmul.f32 %v2929, 1.442695
          %v2944 = vpow.pop %v2943
          %v2945 = vmin.f32 %v2944, 100.0
          %v2946 = vand.u32 2147483647, %v2942
          %vm2947 = vcmp.le.f32.partialorder %v2946, 0.7853982
          %vm2948 = vcmp.lt.s32.totalorder %v2942, 0
          %v2949 = vand.u32 %v2942, 2139095040
          %v2950 = vshrl.u32 %v2949, 23
          %v2951 = vsub.s32 %v2950, 127
          %v2952 = vand.u32 2147483647, %v2942
          %v2953 = vand.u32 %v2952, 8388607
          %v2954 = vor.u32 %v2953, 8388608
          %v2955 = vsub.s32 0, %v2954
          %v2956 = vadd.s32 %v2951, 1
          %vm2957 = vcmp.gt.s32.totalorder %v2956, 0
          %v2958 = vsel %vm2957, %v2956, 0
          %v2959 = vshrl.u32 %v2958, 5
          %v2960 = vand.u32 %v2958, 31
          %v2961 = vsub.s32 32, %v2960
          %v2962 = vshrl.u32 683565275, %v2961
          %v2963 = vshll.u32 683565275, %v2960
          %v2964 = vshrl.u32 2475754826, %v2961
          %v2965 = vor.u32 %v2963, %v2964
          %v2966 = vshll.u32 2475754826, %v2960
          %v2967 = vshrl.u32 2131351028, %v2961
          %v2968 = vor.u32 %v2966, %v2967
          %v2969 = vshll.u32 2131351028, %v2960
          %v2970 = vshrl.u32 2102212464, %v2961
          %v2971 = vor.u32 %v2969, %v2970
          %v2972 = vshll.u32 2102212464, %v2960
          %v2973 = vshrl.u32 920167782, %v2961
          %v2974 = vor.u32 %v2972, %v2973
          %v2975 = vshll.u32 920167782, %v2960
          %v2976 = vshrl.u32 1326507024, %v2961
          %v2977 = vor.u32 %v2975, %v2976
          %vm2978 = vcmp.lt.s32.totalorder %v2959, 1
          %vm2979 = vcmp.lt.s32.totalorder %v2959, 2
          %vm2980 = vcmp.lt.s32.totalorder %v2959, 3
          %vm2981 = vcmp.lt.s32.totalorder %v2959, 4
          %v2982 = vsel %vm2978, %v2962, %v2965
          %v2983 = vsel %vm2981, %v2971, 2102212464
          %v2984 = vsel %vm2980, %v2968, %v2983
          %v2985 = vsel %vm2979, %v2982, %v2984
          %v2986 = vsel %vm2978, %v2965, %v2968
          %v2987 = vsel %vm2981, %v2974, 920167782
          %v2988 = vsel %vm2980, %v2971, %v2987
          %v2989 = vsel %vm2979, %v2986, %v2988
          %v2990 = vsel %vm2978, %v2968, %v2971
          %v2991 = vsel %vm2981, %v2977, 1326507024
          %v2992 = vsel %vm2980, %v2974, %v2991
          %v2993 = vsel %vm2979, %v2990, %v2992
          %v2994 = vshll.u32 %v2954, 8
          %v2995 = vmul.u32.u64.compose %v2994, %v2993
          %v2996 = vextract.low.u32 %v2995
          %v2997 = vextract.high.u32 %v2995
          %v2998 = vmul.u32.u64.compose %v2994, %v2989
          %v2999 = vextract.low.u32 %v2998
          %v3000 = vextract.high.u32 %v2998
          %v3001 = vmul.u32 %v2994, %v2985
          %v3002 = vadd.s32 %v2997, %v2999
          %vm3003 = vc.u32 %v2997, %v2999
          %v3004 = vadd.s32 %v3000, 1
          %v3005 = vsel %vm3003, %v3004, %v3000
          %v3006 = vadd.s32 %v3001, %v3005
          %v3007 = vadd.s32 %v3006, 536870912
          %v3008 = vshrl.u32 %v3007, 30
          %v3009 = vshll.u32 %v3008, 30
          %v3010 = vsub.s32 %v3006, %v3009
          %vm3011 = vcmp.lt.s32.totalorder %v3010, 0
          %v3012 = vsub.s32 0, %v3010
          %v3013 = vsel %vm3011, %v3012, %v3010
          %v3014 = vclz %v3013
          %v3015 = vsub.s32 %v3014, 2
          %vm3016 = vcmp.gt.s32.totalorder 0, %v3015
          %v3017 = vsel %vm3016, 0, %v3015
          %v3018 = vsub.s32 32, %v3017
          %v3019 = vshll.u32 %v3010, %v3017
          %v3020 = vshrl.u32 %v3002, %v3018
          %v3021 = vor.u32 %v3019, %v3020
          %v3022 = vsub.s32 4294967266, %v3017
          %v3023 = vadd.s32 %v3022, 127
          %v3024 = vshll.u32 %v3023, 23
          %v3025 = vor.u32 4788187, %v3024
          %v3026 = vand.u32 2147483647, %v3025
          %v3028 = vcvt.s32.f32 %v3021
          %v3029 = vmul.f32 %v3028, %v3026
          %v3030 = vxor.u32 %v3029, 2147483648
          %v3031 = vsel %vm2948, %v3030, %v3029
          %v3032 = vsub.s32 4, %v3008
          %v3033 = vsel %vm2948, %v3032, %v3008
          %v3034 = vsel %vm2947, %v2942, %v3031
          %v3035 = vsel %vm2947, 0, %v3033
          %v3036 = vcosq.f32.pop %v3034
          %v3037 = vsinq.f32.pop %v3034
          %vm3038 = vweird.f32 %v2942
          %v3039 = vand.u32 %v3035, 3
          %vm3040 = vcmp.lt.s32.totalorder %v3039, 2
          %vm3041 = vcmp.eq.s32.totalorder %v3039, 0
          %v3042 = vxor.u32 %v3037, 2147483648
          %v3043 = vsel %vm3041, %v3036, %v3042
          %vm3044 = vcmp.eq.s32.totalorder %v3039, 2
          %v3045 = vxor.u32 %v3036, 2147483648
          %v3046 = vsel %vm3044, %v3045, %v3037
          %v3047 = vsel %vm3040, %v3043, %v3046
          %v3048 = vsel %vm3038, nan, %v3047
          %v3049 = vmul.f32 %v2945, %v3048
          %vm3050 = vcmask 7168
          %3051 = vst.msk [vmem:[#allocation4] sm:$0xff] %vm3050, %v3049
          %3052 = vst [vmem:[#allocation5] sm:$0xff] 0.0
          %3053 = vst [vmem:[#allocation5 + $0x8] sm:$0xff] 0.0
          %3054 = vst [vmem:[#allocation5 + $0x10] sm:$0xff] 0.0
          %3055 = vst [vmem:[#allocation5 + $0x18] sm:$0xff] 0.0
        $region188: #{vocos_gen_forward.1} parent=111 // pred_fallthru
          _
        %v3056 = vld [vmem:[#allocation2] sm:$0xff]
        %v3057 = vld [vmem:[#allocation2 + $0x8] sm:$0xff]
        %v3058 = vld [vmem:[#allocation2 + $0x10] sm:$0xff]
        %v3059 = vld [vmem:[#allocation2 + $0x18] sm:$0xff]
        %v3060 = vpack.c.bf16 %v3056, %v3056
        %v3061 = vpack.c.bf16 %v3057, %v3057
        %v3062 = vpack.c.bf16 %v3058, %v3058
        %v3063 = vpack.c.bf16 %v3059, %v3059
        %v3064 = vld [vmem:[%s920] sm:$0xff]
        %v3065 = vld [vmem:[%s920 + $0x8] sm:$0xff]
        %v3066 = vld [vmem:[%s920 + $0x10] sm:$0xff]
        %v3067 = vld [vmem:[%s920 + $0x18] sm:$0xff]
        %v3068 = vld [vmem:[%s920 + $0x20] sm:$0xff]
        %v3069 = vld [vmem:[%s920 + $0x28] sm:$0xff]
        %v3070 = vld [vmem:[%s920 + $0x30] sm:$0xff]
        %v3071 = vld [vmem:[%s920 + $0x38] sm:$0xff]
        %v3072 = vld [vmem:[%s920 + $0x40] sm:$0xff]
        %v3073 = vld [vmem:[%s920 + $0x48] sm:$0xff]
        %v3074 = vld [vmem:[%s920 + $0x50] sm:$0xff]
        %v3075 = vld [vmem:[%s920 + $0x58] sm:$0xff]
        %v3076 = vld [vmem:[%s920 + $0x60] sm:$0xff]
        %v3077 = vld [vmem:[%s920 + $0x68] sm:$0xff]
        %v3078 = vld [vmem:[%s920 + $0x70] sm:$0xff]
        %v3079 = vld [vmem:[%s920 + $0x78] sm:$0xff]
        %v3080 = vld [vmem:[%s920 + $0x80] sm:$0xff]
        %v3081 = vld [vmem:[%s920 + $0x88] sm:$0xff]
        %v3082 = vld [vmem:[%s920 + $0x90] sm:$0xff]
        %v3083 = vld [vmem:[%s920 + $0x98] sm:$0xff]
        %v3084 = vld [vmem:[%s920 + $0xa0] sm:$0xff]
        %v3085 = vld [vmem:[%s920 + $0xa8] sm:$0xff]
        %v3086 = vld [vmem:[%s920 + $0xb0] sm:$0xff]
        %v3087 = vld [vmem:[%s920 + $0xb8] sm:$0xff]
        %v3088 = vld [vmem:[%s920 + $0xc0] sm:$0xff]
        %v3089 = vld [vmem:[%s920 + $0xc8] sm:$0xff]
        %v3090 = vld [vmem:[%s920 + $0xd0] sm:$0xff]
        %v3091 = vld [vmem:[%s920 + $0xd8] sm:$0xff]
        %v3092 = vld [vmem:[%s920 + $0xe0] sm:$0xff]
        %v3093 = vld [vmem:[%s920 + $0xe8] sm:$0xff]
        %v3094 = vld [vmem:[%s920 + $0xf0] sm:$0xff]
        %v3095 = vld [vmem:[%s920 + $0xf8] sm:$0xff]
        %v3096 = vld [vmem:[%s920 + $0x100] sm:$0xff]
        %v3097 = vld [vmem:[%s920 + $0x108] sm:$0xff]
        %v3098 = vld [vmem:[%s920 + $0x110] sm:$0xff]
        %v3099 = vld [vmem:[%s920 + $0x118] sm:$0xff]
        %v3100 = vld [vmem:[%s920 + $0x120] sm:$0xff]
        %v3101 = vld [vmem:[%s920 + $0x128] sm:$0xff]
        %v3102 = vld [vmem:[%s920 + $0x130] sm:$0xff]
        %v3103 = vld [vmem:[%s920 + $0x138] sm:$0xff]
        %v3104 = vld [vmem:[%s920 + $0x140] sm:$0xff]
        %v3105 = vld [vmem:[%s920 + $0x148] sm:$0xff]
        %v3106 = vld [vmem:[%s920 + $0x150] sm:$0xff]
        %v3107 = vld [vmem:[%s920 + $0x158] sm:$0xff]
        %v3108 = vld [vmem:[%s920 + $0x160] sm:$0xff]
        %v3109 = vld [vmem:[%s920 + $0x168] sm:$0xff]
        %v3110 = vld [vmem:[%s920 + $0x170] sm:$0xff]
        %v3111 = vld [vmem:[%s920 + $0x178] sm:$0xff]
        %v3112 = vld [vmem:[%s920 + $0x180] sm:$0xff]
        %v3113 = vld [vmem:[%s920 + $0x188] sm:$0xff]
        %v3114 = vld [vmem:[%s920 + $0x190] sm:$0xff]
        %v3115 = vld [vmem:[%s920 + $0x198] sm:$0xff]
        %v3116 = vld [vmem:[%s920 + $0x1a0] sm:$0xff]
        %v3117 = vld [vmem:[%s920 + $0x1a8] sm:$0xff]
        %v3118 = vld [vmem:[%s920 + $0x1b0] sm:$0xff]
        %v3119 = vld [vmem:[%s920 + $0x1b8] sm:$0xff]
        %v3120 = vld [vmem:[%s920 + $0x1c0] sm:$0xff]
        %v3121 = vld [vmem:[%s920 + $0x1c8] sm:$0xff]
        %v3122 = vld [vmem:[%s920 + $0x1d0] sm:$0xff]
        %v3123 = vld [vmem:[%s920 + $0x1d8] sm:$0xff]
        %v3124 = vld [vmem:[%s920 + $0x1e0] sm:$0xff]
        %v3125 = vld [vmem:[%s920 + $0x1e8] sm:$0xff]
        %v3126 = vld [vmem:[%s920 + $0x1f0] sm:$0xff]
        %v3127 = vld [vmem:[%s920 + $0x1f8] sm:$0xff]
        %v3128 = vld [vmem:[#allocation3] sm:$0xff]
        %v3129 = vld [vmem:[#allocation3 + $0x8] sm:$0xff]
        %v3130 = vld [vmem:[#allocation3 + $0x10] sm:$0xff]
        %v3131 = vld [vmem:[#allocation3 + $0x18] sm:$0xff]
        %v3132 = vpack.c.bf16 %v3128, %v3128
        %v3133 = vpack.c.bf16 %v3129, %v3129
        %v3134 = vpack.c.bf16 %v3130, %v3130
        %v3135 = vpack.c.bf16 %v3131, %v3131
        %v3136 = vld [vmem:[%s920 + $0x200] sm:$0xff]
        %v3137 = vld [vmem:[%s920 + $0x208] sm:$0xff]
        %v3138 = vld [vmem:[%s920 + $0x210] sm:$0xff]
        %v3139 = vld [vmem:[%s920 + $0x218] sm:$0xff]
        %v3140 = vld [vmem:[%s920 + $0x220] sm:$0xff]
        %v3141 = vld [vmem:[%s920 + $0x228] sm:$0xff]
        %v3142 = vld [vmem:[%s920 + $0x230] sm:$0xff]
        %v3143 = vld [vmem:[%s920 + $0x238] sm:$0xff]
        %v3144 = vld [vmem:[%s920 + $0x240] sm:$0xff]
        %v3145 = vld [vmem:[%s920 + $0x248] sm:$0xff]
        %v3146 = vld [vmem:[%s920 + $0x250] sm:$0xff]
        %v3147 = vld [vmem:[%s920 + $0x258] sm:$0xff]
        %v3148 = vld [vmem:[%s920 + $0x260] sm:$0xff]
        %v3149 = vld [vmem:[%s920 + $0x268] sm:$0xff]
        %v3150 = vld [vmem:[%s920 + $0x270] sm:$0xff]
        %v3151 = vld [vmem:[%s920 + $0x278] sm:$0xff]
        %v3152 = vld [vmem:[%s920 + $0x280] sm:$0xff]
        %v3153 = vld [vmem:[%s920 + $0x288] sm:$0xff]
        %v3154 = vld [vmem:[%s920 + $0x290] sm:$0xff]
        %v3155 = vld [vmem:[%s920 + $0x298] sm:$0xff]
        %v3156 = vld [vmem:[%s920 + $0x2a0] sm:$0xff]
        %v3157 = vld [vmem:[%s920 + $0x2a8] sm:$0xff]
        %v3158 = vld [vmem:[%s920 + $0x2b0] sm:$0xff]
        %v3159 = vld [vmem:[%s920 + $0x2b8] sm:$0xff]
        %v3160 = vld [vmem:[%s920 + $0x2c0] sm:$0xff]
        %v3161 = vld [vmem:[%s920 + $0x2c8] sm:$0xff]
        %v3162 = vld [vmem:[%s920 + $0x2d0] sm:$0xff]
        %v3163 = vld [vmem:[%s920 + $0x2d8] sm:$0xff]
        %v3164 = vld [vmem:[%s920 + $0x2e0] sm:$0xff]
        %v3165 = vld [vmem:[%s920 + $0x2e8] sm:$0xff]
        %v3166 = vld [vmem:[%s920 + $0x2f0] sm:$0xff]
        %v3167 = vld [vmem:[%s920 + $0x2f8] sm:$0xff]
        %v3168 = vld [vmem:[%s920 + $0x300] sm:$0xff]
        %v3169 = vld [vmem:[%s920 + $0x308] sm:$0xff]
        %v3170 = vld [vmem:[%s920 + $0x310] sm:$0xff]
        %v3171 = vld [vmem:[%s920 + $0x318] sm:$0xff]
        %v3172 = vld [vmem:[%s920 + $0x320] sm:$0xff]
        %v3173 = vld [vmem:[%s920 + $0x328] sm:$0xff]
        %v3174 = vld [vmem:[%s920 + $0x330] sm:$0xff]
        %v3175 = vld [vmem:[%s920 + $0x338] sm:$0xff]
        %v3176 = vld [vmem:[%s920 + $0x340] sm:$0xff]
        %v3177 = vld [vmem:[%s920 + $0x348] sm:$0xff]
        %v3178 = vld [vmem:[%s920 + $0x350] sm:$0xff]
        %v3179 = vld [vmem:[%s920 + $0x358] sm:$0xff]
        %v3180 = vld [vmem:[%s920 + $0x360] sm:$0xff]
        %v3181 = vld [vmem:[%s920 + $0x368] sm:$0xff]
        %v3182 = vld [vmem:[%s920 + $0x370] sm:$0xff]
        %v3183 = vld [vmem:[%s920 + $0x378] sm:$0xff]
        %v3184 = vld [vmem:[%s920 + $0x380] sm:$0xff]
        %v3185 = vld [vmem:[%s920 + $0x388] sm:$0xff]
        %v3186 = vld [vmem:[%s920 + $0x390] sm:$0xff]
        %v3187 = vld [vmem:[%s920 + $0x398] sm:$0xff]
        %v3188 = vld [vmem:[%s920 + $0x3a0] sm:$0xff]
        %v3189 = vld [vmem:[%s920 + $0x3a8] sm:$0xff]
        %v3190 = vld [vmem:[%s920 + $0x3b0] sm:$0xff]
        %v3191 = vld [vmem:[%s920 + $0x3b8] sm:$0xff]
        %v3192 = vld [vmem:[%s920 + $0x3c0] sm:$0xff]
        %v3193 = vld [vmem:[%s920 + $0x3c8] sm:$0xff]
        %v3194 = vld [vmem:[%s920 + $0x3d0] sm:$0xff]
        %v3195 = vld [vmem:[%s920 + $0x3d8] sm:$0xff]
        %v3196 = vld [vmem:[%s920 + $0x3e0] sm:$0xff]
        %v3197 = vld [vmem:[%s920 + $0x3e8] sm:$0xff]
        %v3198 = vld [vmem:[%s920 + $0x3f0] sm:$0xff]
        %v3199 = vld [vmem:[%s920 + $0x3f8] sm:$0xff]
        %v3264 = vunpack.c.l.b16 %v3136
        %v3265 = vunpack.c.h.b16 %v3136
        %v3266 = vunpack.c.l.b16 %v3137
        %v3267 = vunpack.c.h.b16 %v3137
        %v3268 = vunpack.c.l.b16 %v3138
        %v3269 = vunpack.c.h.b16 %v3138
        %v3270 = vunpack.c.l.b16 %v3139
        %v3271 = vunpack.c.h.b16 %v3139
        %v3272 = vunpack.c.l.b16 %v3140
        %v3273 = vunpack.c.h.b16 %v3140
        %v3274 = vunpack.c.l.b16 %v3141
        %v3275 = vunpack.c.h.b16 %v3141
        %v3276 = vunpack.c.l.b16 %v3142
        %v3277 = vunpack.c.h.b16 %v3142
        %v3278 = vunpack.c.l.b16 %v3143
        %v3279 = vunpack.c.h.b16 %v3143
        %v3280 = vunpack.c.l.b16 %v3144
        %v3281 = vunpack.c.h.b16 %v3144
        %v3282 = vunpack.c.l.b16 %v3145
        %v3283 = vunpack.c.h.b16 %v3145
        %v3284 = vunpack.c.l.b16 %v3146
        %v3285 = vunpack.c.h.b16 %v3146
        %v3286 = vunpack.c.l.b16 %v3147
        %v3287 = vunpack.c.h.b16 %v3147
        %v3288 = vunpack.c.l.b16 %v3148
        %v3289 = vunpack.c.h.b16 %v3148
        %v3290 = vunpack.c.l.b16 %v3149
        %v3291 = vunpack.c.h.b16 %v3149
        %v3292 = vunpack.c.l.b16 %v3150
        %v3293 = vunpack.c.h.b16 %v3150
        %v3294 = vunpack.c.l.b16 %v3151
        %v3295 = vunpack.c.h.b16 %v3151
        %v3296 = vunpack.c.l.b16 %v3152
        %v3297 = vunpack.c.h.b16 %v3152
        %v3298 = vunpack.c.l.b16 %v3153
        %v3299 = vunpack.c.h.b16 %v3153
        %v3300 = vunpack.c.l.b16 %v3154
        %v3301 = vunpack.c.h.b16 %v3154
        %v3302 = vunpack.c.l.b16 %v3155
        %v3303 = vunpack.c.h.b16 %v3155
        %v3304 = vunpack.c.l.b16 %v3156
        %v3305 = vunpack.c.h.b16 %v3156
        %v3306 = vunpack.c.l.b16 %v3157
        %v3307 = vunpack.c.h.b16 %v3157
        %v3308 = vunpack.c.l.b16 %v3158
        %v3309 = vunpack.c.h.b16 %v3158
        %v3310 = vunpack.c.l.b16 %v3159
        %v3311 = vunpack.c.h.b16 %v3159
        %v3312 = vunpack.c.l.b16 %v3160
        %v3313 = vunpack.c.h.b16 %v3160
        %v3314 = vunpack.c.l.b16 %v3161
        %v3315 = vunpack.c.h.b16 %v3161
        %v3316 = vunpack.c.l.b16 %v3162
        %v3317 = vunpack.c.h.b16 %v3162
        %v3318 = vunpack.c.l.b16 %v3163
        %v3319 = vunpack.c.h.b16 %v3163
        %v3320 = vunpack.c.l.b16 %v3164
        %v3321 = vunpack.c.h.b16 %v3164
        %v3322 = vunpack.c.l.b16 %v3165
        %v3323 = vunpack.c.h.b16 %v3165
        %v3324 = vunpack.c.l.b16 %v3166
        %v3325 = vunpack.c.h.b16 %v3166
        %v3326 = vunpack.c.l.b16 %v3167
        %v3327 = vunpack.c.h.b16 %v3167
        %v3328 = vunpack.c.l.b16 %v3168
        %v3329 = vunpack.c.h.b16 %v3168
        %v3330 = vunpack.c.l.b16 %v3169
        %v3331 = vunpack.c.h.b16 %v3169
        %v3332 = vunpack.c.l.b16 %v3170
        %v3333 = vunpack.c.h.b16 %v3170
        %v3334 = vunpack.c.l.b16 %v3171
        %v3335 = vunpack.c.h.b16 %v3171
        %v3336 = vunpack.c.l.b16 %v3172
        %v3337 = vunpack.c.h.b16 %v3172
        %v3338 = vunpack.c.l.b16 %v3173
        %v3339 = vunpack.c.h.b16 %v3173
        %v3340 = vunpack.c.l.b16 %v3174
        %v3341 = vunpack.c.h.b16 %v3174
        %v3342 = vunpack.c.l.b16 %v3175
        %v3343 = vunpack.c.h.b16 %v3175
        %v3344 = vunpack.c.l.b16 %v3176
        %v3345 = vunpack.c.h.b16 %v3176
        %v3346 = vunpack.c.l.b16 %v3177
        %v3347 = vunpack.c.h.b16 %v3177
        %v3348 = vunpack.c.l.b16 %v3178
        %v3349 = vunpack.c.h.b16 %v3178
        %v3350 = vunpack.c.l.b16 %v3179
        %v3351 = vunpack.c.h.b16 %v3179
        %v3352 = vunpack.c.l.b16 %v3180
        %v3353 = vunpack.c.h.b16 %v3180
        %v3354 = vunpack.c.l.b16 %v3181
        %v3355 = vunpack.c.h.b16 %v3181
        %v3356 = vunpack.c.l.b16 %v3182
        %v3357 = vunpack.c.h.b16 %v3182
        %v3358 = vunpack.c.l.b16 %v3183
        %v3359 = vunpack.c.h.b16 %v3183
        %v3360 = vunpack.c.l.b16 %v3184
        %v3361 = vunpack.c.h.b16 %v3184
        %v3362 = vunpack.c.l.b16 %v3185
        %v3363 = vunpack.c.h.b16 %v3185
        %v3364 = vunpack.c.l.b16 %v3186
        %v3365 = vunpack.c.h.b16 %v3186
        %v3366 = vunpack.c.l.b16 %v3187
        %v3367 = vunpack.c.h.b16 %v3187
        %v3368 = vunpack.c.l.b16 %v3188
        %v3369 = vunpack.c.h.b16 %v3188
        %v3370 = vunpack.c.l.b16 %v3189
        %v3371 = vunpack.c.h.b16 %v3189
        %v3372 = vunpack.c.l.b16 %v3190
        %v3373 = vunpack.c.h.b16 %v3190
        %v3374 = vunpack.c.l.b16 %v3191
        %v3375 = vunpack.c.h.b16 %v3191
        %v3376 = vunpack.c.l.b16 %v3192
        %v3377 = vunpack.c.h.b16 %v3192
        %v3378 = vunpack.c.l.b16 %v3193
        %v3379 = vunpack.c.h.b16 %v3193
        %v3380 = vunpack.c.l.b16 %v3194
        %v3381 = vunpack.c.h.b16 %v3194
        %v3382 = vunpack.c.l.b16 %v3195
        %v3383 = vunpack.c.h.b16 %v3195
        %v3384 = vunpack.c.l.b16 %v3196
        %v3385 = vunpack.c.h.b16 %v3196
        %v3386 = vunpack.c.l.b16 %v3197
        %v3387 = vunpack.c.h.b16 %v3197
        %v3388 = vunpack.c.l.b16 %v3198
        %v3389 = vunpack.c.h.b16 %v3198
        %v3390 = vunpack.c.l.b16 %v3199
        %v3391 = vunpack.c.h.b16 %v3199
        %v3392 = vpack.c.b16 %v3266, %v3264
        %v3393 = vpack.c.b16 %v3267, %v3265
        %v3394 = vpack.c.b16 %v3270, %v3268
        %v3395 = vpack.c.b16 %v3271, %v3269
        %v3396 = vpack.c.b16 %v3274, %v3272
        %v3397 = vpack.c.b16 %v3275, %v3273
        %v3398 = vpack.c.b16 %v3278, %v3276
        %v3399 = vpack.c.b16 %v3279, %v3277
        %v3400 = vpack.c.b16 %v3282, %v3280
        %v3401 = vpack.c.b16 %v3283, %v3281
        %v3402 = vpack.c.b16 %v3286, %v3284
        %v3403 = vpack.c.b16 %v3287, %v3285
        %v3404 = vpack.c.b16 %v3290, %v3288
        %v3405 = vpack.c.b16 %v3291, %v3289
        %v3406 = vpack.c.b16 %v3294, %v3292
        %v3407 = vpack.c.b16 %v3295, %v3293
        %v3408 = vpack.c.b16 %v3298, %v3296
        %v3409 = vpack.c.b16 %v3299, %v3297
        %v3410 = vpack.c.b16 %v3302, %v3300
        %v3411 = vpack.c.b16 %v3303, %v3301
        %v3412 = vpack.c.b16 %v3306, %v3304
        %v3413 = vpack.c.b16 %v3307, %v3305
        %v3414 = vpack.c.b16 %v3310, %v3308
        %v3415 = vpack.c.b16 %v3311, %v3309
        %v3416 = vpack.c.b16 %v3314, %v3312
        %v3417 = vpack.c.b16 %v3315, %v3313
        %v3418 = vpack.c.b16 %v3318, %v3316
        %v3419 = vpack.c.b16 %v3319, %v3317
        %v3420 = vpack.c.b16 %v3322, %v3320
        %v3421 = vpack.c.b16 %v3323, %v3321
        %v3422 = vpack.c.b16 %v3326, %v3324
        %v3423 = vpack.c.b16 %v3327, %v3325
        %v3424 = vpack.c.b16 %v3330, %v3328
        %v3425 = vpack.c.b16 %v3331, %v3329
        %v3426 = vpack.c.b16 %v3334, %v3332
        %v3427 = vpack.c.b16 %v3335, %v3333
        %v3428 = vpack.c.b16 %v3338, %v3336
        %v3429 = vpack.c.b16 %v3339, %v3337
        %v3430 = vpack.c.b16 %v3342, %v3340
        %v3431 = vpack.c.b16 %v3343, %v3341
        %v3432 = vpack.c.b16 %v3346, %v3344
        %v3433 = vpack.c.b16 %v3347, %v3345
        %v3434 = vpack.c.b16 %v3350, %v3348
        %v3435 = vpack.c.b16 %v3351, %v3349
        %v3436 = vpack.c.b16 %v3354, %v3352
        %v3437 = vpack.c.b16 %v3355, %v3353
        %v3438 = vpack.c.b16 %v3358, %v3356
        %v3439 = vpack.c.b16 %v3359, %v3357
        %v3440 = vpack.c.b16 %v3362, %v3360
        %v3441 = vpack.c.b16 %v3363, %v3361
        %v3442 = vpack.c.b16 %v3366, %v3364
        %v3443 = vpack.c.b16 %v3367, %v3365
        %v3444 = vpack.c.b16 %v3370, %v3368
        %v3445 = vpack.c.b16 %v3371, %v3369
        %v3446 = vpack.c.b16 %v3374, %v3372
        %v3447 = vpack.c.b16 %v3375, %v3373
        %v3448 = vpack.c.b16 %v3378, %v3376
        %v3449 = vpack.c.b16 %v3379, %v3377
        %v3450 = vpack.c.b16 %v3382, %v3380
        %v3451 = vpack.c.b16 %v3383, %v3381
        %v3452 = vpack.c.b16 %v3386, %v3384
        %v3453 = vpack.c.b16 %v3387, %v3385
        %v3454 = vpack.c.b16 %v3390, %v3388
        %v3455 = vpack.c.b16 %v3391, %v3389
        %3520 = vmatprep.subr.bf16.mxu0 %v3393
        %3521 = vmatpush1.bf16.msra.mxu0 %v3392
        %3522 = vmatprep.subr.bf16.mxu0 %v3395
        %3523 = vmatpush1.bf16.msra.mxu0 %v3394
        %3524 = vmatprep.subr.bf16.mxu0 %v3397
        %3525 = vmatpush1.bf16.msra.mxu0 %v3396
        %3526 = vmatprep.subr.bf16.mxu0 %v3399
        %3527 = vmatpush1.bf16.msra.mxu0 %v3398
        %3528 = vmatprep.subr.bf16.mxu0 %v3401
        %3529 = vmatpush1.bf16.msra.mxu0 %v3400
        %3530 = vmatprep.subr.bf16.mxu0 %v3403
        %3531 = vmatpush1.bf16.msra.mxu0 %v3402
        %3532 = vmatprep.subr.bf16.mxu0 %v3405
        %3533 = vmatpush1.bf16.msra.mxu0 %v3404
        %3534 = vmatprep.subr.bf16.mxu0 %v3407
        %3535 = vmatpush1.bf16.msra.mxu0 %v3406
        %3536 = vmatprep.subr.bf16.mxu0 %v3409
        %3537 = vmatpush1.bf16.msra.mxu0 %v3408
        %3538 = vmatprep.subr.bf16.mxu0 %v3411
        %3539 = vmatpush1.bf16.msra.mxu0 %v3410
        %3540 = vmatprep.subr.bf16.mxu0 %v3413
        %3541 = vmatpush1.bf16.msra.mxu0 %v3412
        %3542 = vmatprep.subr.bf16.mxu0 %v3415
        %3543 = vmatpush1.bf16.msra.mxu0 %v3414
        %3544 = vmatprep.subr.bf16.mxu0 %v3417
        %3545 = vmatpush1.bf16.msra.mxu0 %v3416
        %3546 = vmatprep.subr.bf16.mxu0 %v3419
        %3547 = vmatpush1.bf16.msra.mxu0 %v3418
        %3548 = vmatprep.subr.bf16.mxu0 %v3421
        %3549 = vmatpush1.bf16.msra.mxu0 %v3420
        %3550 = vmatprep.subr.bf16.mxu0 %v3423
        %3551 = vmatpush1.bf16.msra.mxu0 %v3422
        %3552 = vmatprep.mubr.bf16.mxu0 %v3133
        %3553 = vmatmul.mubr.bf16.gmra.mrb[0].mxu0 %v3132
        %v3554 = vpop.f32.mrb[0].mxu0
        %v3555 = vadd.f32 0.0, %v3554
        %v3556 = vpop.f32.mrb[0].mxu0
        %v3557 = vadd.f32 0.0, %v3556
        %v3558 = vpop.f32.mrb[0].mxu0
        %v3559 = vpop.f32.mrb[0].mxu0
        %3560 = vdwg.mxu0
        %3561 = vmatprep.subr.bf16.mxu0 %v3425
        %3562 = vmatpush1.bf16.msra.mxu0 %v3424
        %3563 = vmatprep.subr.bf16.mxu0 %v3427
        %3564 = vmatpush1.bf16.msra.mxu0 %v3426
        %3565 = vmatprep.subr.bf16.mxu0 %v3429
        %3566 = vmatpush1.bf16.msra.mxu0 %v3428
        %3567 = vmatprep.subr.bf16.mxu0 %v3431
        %3568 = vmatpush1.bf16.msra.mxu0 %v3430
        %3569 = vmatprep.subr.bf16.mxu0 %v3433
        %3570 = vmatpush1.bf16.msra.mxu0 %v3432
        %3571 = vmatprep.subr.bf16.mxu0 %v3435
        %3572 = vmatpush1.bf16.msra.mxu0 %v3434
        %3573 = vmatprep.subr.bf16.mxu0 %v3437
        %3574 = vmatpush1.bf16.msra.mxu0 %v3436
        %3575 = vmatprep.subr.bf16.mxu0 %v3439
        %3576 = vmatpush1.bf16.msra.mxu0 %v3438
        %3577 = vmatprep.subr.bf16.mxu0 %v3441
        %3578 = vmatpush1.bf16.msra.mxu0 %v3440
        %3579 = vmatprep.subr.bf16.mxu0 %v3443
        %3580 = vmatpush1.bf16.msra.mxu0 %v3442
        %3581 = vmatprep.subr.bf16.mxu0 %v3445
        %3582 = vmatpush1.bf16.msra.mxu0 %v3444
        %3583 = vmatprep.subr.bf16.mxu0 %v3447
        %3584 = vmatpush1.bf16.msra.mxu0 %v3446
        %3585 = vmatprep.subr.bf16.mxu0 %v3449
        %3586 = vmatpush1.bf16.msra.mxu0 %v3448
        %3587 = vmatprep.subr.bf16.mxu0 %v3451
        %3588 = vmatpush1.bf16.msra.mxu0 %v3450
        %3589 = vmatprep.subr.bf16.mxu0 %v3453
        %3590 = vmatpush1.bf16.msra.mxu0 %v3452
        %3591 = vmatprep.subr.bf16.mxu0 %v3455
        %3592 = vmatpush1.bf16.msra.mxu0 %v3454
        %3593 = vmatprep.mubr.bf16.mxu0 %v3135
        %3594 = vmatmul.mubr.bf16.gmra.mrb[0].mxu0 %v3134
        %v3595 = vpop.f32.mrb[0].mxu0
        %v3596 = vadd.f32 %v3555, %v3595
        %v3597 = vpop.f32.mrb[0].mxu0
        %v3598 = vadd.f32 %v3557, %v3597
        %v3599 = vpop.f32.mrb[0].mxu0
        %v3600 = vpop.f32.mrb[0].mxu0
        %3601 = vdwg.mxu0
        %v3666 = vunpack.c.l.b16 %v3064
        %v3667 = vunpack.c.h.b16 %v3064
        %v3668 = vunpack.c.l.b16 %v3065
        %v3669 = vunpack.c.h.b16 %v3065
        %v3670 = vunpack.c.l.b16 %v3066
        %v3671 = vunpack.c.h.b16 %v3066
        %v3672 = vunpack.c.l.b16 %v3067
        %v3673 = vunpack.c.h.b16 %v3067
        %v3674 = vunpack.c.l.b16 %v3068
        %v3675 = vunpack.c.h.b16 %v3068
        %v3676 = vunpack.c.l.b16 %v3069
        %v3677 = vunpack.c.h.b16 %v3069
        %v3678 = vunpack.c.l.b16 %v3070
        %v3679 = vunpack.c.h.b16 %v3070
        %v3680 = vunpack.c.l.b16 %v3071
        %v3681 = vunpack.c.h.b16 %v3071
        %v3682 = vunpack.c.l.b16 %v3072
        %v3683 = vunpack.c.h.b16 %v3072
        %v3684 = vunpack.c.l.b16 %v3073
        %v3685 = vunpack.c.h.b16 %v3073
        %v3686 = vunpack.c.l.b16 %v3074
        %v3687 = vunpack.c.h.b16 %v3074
        %v3688 = vunpack.c.l.b16 %v3075
        %v3689 = vunpack.c.h.b16 %v3075
        %v3690 = vunpack.c.l.b16 %v3076
        %v3691 = vunpack.c.h.b16 %v3076
        %v3692 = vunpack.c.l.b16 %v3077
        %v3693 = vunpack.c.h.b16 %v3077
        %v3694 = vunpack.c.l.b16 %v3078
        %v3695 = vunpack.c.h.b16 %v3078
        %v3696 = vunpack.c.l.b16 %v3079
        %v3697 = vunpack.c.h.b16 %v3079
        %v3698 = vunpack.c.l.b16 %v3080
        %v3699 = vunpack.c.h.b16 %v3080
        %v3700 = vunpack.c.l.b16 %v3081
        %v3701 = vunpack.c.h.b16 %v3081
        %v3702 = vunpack.c.l.b16 %v3082
        %v3703 = vunpack.c.h.b16 %v3082
        %v3704 = vunpack.c.l.b16 %v3083
        %v3705 = vunpack.c.h.b16 %v3083
        %v3706 = vunpack.c.l.b16 %v3084
        %v3707 = vunpack.c.h.b16 %v3084
        %v3708 = vunpack.c.l.b16 %v3085
        %v3709 = vunpack.c.h.b16 %v3085
        %v3710 = vunpack.c.l.b16 %v3086
        %v3711 = vunpack.c.h.b16 %v3086
        %v3712 = vunpack.c.l.b16 %v3087
        %v3713 = vunpack.c.h.b16 %v3087
        %v3714 = vunpack.c.l.b16 %v3088
        %v3715 = vunpack.c.h.b16 %v3088
        %v3716 = vunpack.c.l.b16 %v3089
        %v3717 = vunpack.c.h.b16 %v3089
        %v3718 = vunpack.c.l.b16 %v3090
        %v3719 = vunpack.c.h.b16 %v3090
        %v3720 = vunpack.c.l.b16 %v3091
        %v3721 = vunpack.c.h.b16 %v3091
        %v3722 = vunpack.c.l.b16 %v3092
        %v3723 = vunpack.c.h.b16 %v3092
        %v3724 = vunpack.c.l.b16 %v3093
        %v3725 = vunpack.c.h.b16 %v3093
        %v3726 = vunpack.c.l.b16 %v3094
        %v3727 = vunpack.c.h.b16 %v3094
        %v3728 = vunpack.c.l.b16 %v3095
        %v3729 = vunpack.c.h.b16 %v3095
        %v3730 = vunpack.c.l.b16 %v3096
        %v3731 = vunpack.c.h.b16 %v3096
        %v3732 = vunpack.c.l.b16 %v3097
        %v3733 = vunpack.c.h.b16 %v3097
        %v3734 = vunpack.c.l.b16 %v3098
        %v3735 = vunpack.c.h.b16 %v3098
        %v3736 = vunpack.c.l.b16 %v3099
        %v3737 = vunpack.c.h.b16 %v3099
        %v3738 = vunpack.c.l.b16 %v3100
        %v3739 = vunpack.c.h.b16 %v3100
        %v3740 = vunpack.c.l.b16 %v3101
        %v3741 = vunpack.c.h.b16 %v3101
        %v3742 = vunpack.c.l.b16 %v3102
        %v3743 = vunpack.c.h.b16 %v3102
        %v3744 = vunpack.c.l.b16 %v3103
        %v3745 = vunpack.c.h.b16 %v3103
        %v3746 = vunpack.c.l.b16 %v3104
        %v3747 = vunpack.c.h.b16 %v3104
        %v3748 = vunpack.c.l.b16 %v3105
        %v3749 = vunpack.c.h.b16 %v3105
        %v3750 = vunpack.c.l.b16 %v3106
        %v3751 = vunpack.c.h.b16 %v3106
        %v3752 = vunpack.c.l.b16 %v3107
        %v3753 = vunpack.c.h.b16 %v3107
        %v3754 = vunpack.c.l.b16 %v3108
        %v3755 = vunpack.c.h.b16 %v3108
        %v3756 = vunpack.c.l.b16 %v3109
        %v3757 = vunpack.c.h.b16 %v3109
        %v3758 = vunpack.c.l.b16 %v3110
        %v3759 = vunpack.c.h.b16 %v3110
        %v3760 = vunpack.c.l.b16 %v3111
        %v3761 = vunpack.c.h.b16 %v3111
        %v3762 = vunpack.c.l.b16 %v3112
        %v3763 = vunpack.c.h.b16 %v3112
        %v3764 = vunpack.c.l.b16 %v3113
        %v3765 = vunpack.c.h.b16 %v3113
        %v3766 = vunpack.c.l.b16 %v3114
        %v3767 = vunpack.c.h.b16 %v3114
        %v3768 = vunpack.c.l.b16 %v3115
        %v3769 = vunpack.c.h.b16 %v3115
        %v3770 = vunpack.c.l.b16 %v3116
        %v3771 = vunpack.c.h.b16 %v3116
        %v3772 = vunpack.c.l.b16 %v3117
        %v3773 = vunpack.c.h.b16 %v3117
        %v3774 = vunpack.c.l.b16 %v3118
        %v3775 = vunpack.c.h.b16 %v3118
        %v3776 = vunpack.c.l.b16 %v3119
        %v3777 = vunpack.c.h.b16 %v3119
        %v3778 = vunpack.c.l.b16 %v3120
        %v3779 = vunpack.c.h.b16 %v3120
        %v3780 = vunpack.c.l.b16 %v3121
        %v3781 = vunpack.c.h.b16 %v3121
        %v3782 = vunpack.c.l.b16 %v3122
        %v3783 = vunpack.c.h.b16 %v3122
        %v3784 = vunpack.c.l.b16 %v3123
        %v3785 = vunpack.c.h.b16 %v3123
        %v3786 = vunpack.c.l.b16 %v3124
        %v3787 = vunpack.c.h.b16 %v3124
        %v3788 = vunpack.c.l.b16 %v3125
        %v3789 = vunpack.c.h.b16 %v3125
        %v3790 = vunpack.c.l.b16 %v3126
        %v3791 = vunpack.c.h.b16 %v3126
        %v3792 = vunpack.c.l.b16 %v3127
        %v3793 = vunpack.c.h.b16 %v3127
        %v3794 = vpack.c.b16 %v3668, %v3666
        %v3795 = vpack.c.b16 %v3669, %v3667
        %v3796 = vpack.c.b16 %v3672, %v3670
        %v3797 = vpack.c.b16 %v3673, %v3671
        %v3798 = vpack.c.b16 %v3676, %v3674
        %v3799 = vpack.c.b16 %v3677, %v3675
        %v3800 = vpack.c.b16 %v3680, %v3678
        %v3801 = vpack.c.b16 %v3681, %v3679
        %v3802 = vpack.c.b16 %v3684, %v3682
        %v3803 = vpack.c.b16 %v3685, %v3683
        %v3804 = vpack.c.b16 %v3688, %v3686
        %v3805 = vpack.c.b16 %v3689, %v3687
        %v3806 = vpack.c.b16 %v3692, %v3690
        %v3807 = vpack.c.b16 %v3693, %v3691
        %v3808 = vpack.c.b16 %v3696, %v3694
        %v3809 = vpack.c.b16 %v3697, %v3695
        %v3810 = vpack.c.b16 %v3700, %v3698
        %v3811 = vpack.c.b16 %v3701, %v3699
        %v3812 = vpack.c.b16 %v3704, %v3702
        %v3813 = vpack.c.b16 %v3705, %v3703
        %v3814 = vpack.c.b16 %v3708, %v3706
        %v3815 = vpack.c.b16 %v3709, %v3707
        %v3816 = vpack.c.b16 %v3712, %v3710
        %v3817 = vpack.c.b16 %v3713, %v3711
        %v3818 = vpack.c.b16 %v3716, %v3714
        %v3819 = vpack.c.b16 %v3717, %v3715
        %v3820 = vpack.c.b16 %v3720, %v3718
        %v3821 = vpack.c.b16 %v3721, %v3719
        %v3822 = vpack.c.b16 %v3724, %v3722
        %v3823 = vpack.c.b16 %v3725, %v3723
        %v3824 = vpack.c.b16 %v3728, %v3726
        %v3825 = vpack.c.b16 %v3729, %v3727
        %v3826 = vpack.c.b16 %v3732, %v3730
        %v3827 = vpack.c.b16 %v3733, %v3731
        %v3828 = vpack.c.b16 %v3736, %v3734
        %v3829 = vpack.c.b16 %v3737, %v3735
        %v3830 = vpack.c.b16 %v3740, %v3738
        %v3831 = vpack.c.b16 %v3741, %v3739
        %v3832 = vpack.c.b16 %v3744, %v3742
        %v3833 = vpack.c.b16 %v3745, %v3743
        %v3834 = vpack.c.b16 %v3748, %v3746
        %v3835 = vpack.c.b16 %v3749, %v3747
        %v3836 = vpack.c.b16 %v3752, %v3750
        %v3837 = vpack.c.b16 %v3753, %v3751
        %v3838 = vpack.c.b16 %v3756, %v3754
        %v3839 = vpack.c.b16 %v3757, %v3755
        %v3840 = vpack.c.b16 %v3760, %v3758
        %v3841 = vpack.c.b16 %v3761, %v3759
        %v3842 = vpack.c.b16 %v3764, %v3762
        %v3843 = vpack.c.b16 %v3765, %v3763
        %v3844 = vpack.c.b16 %v3768, %v3766
        %v3845 = vpack.c.b16 %v3769, %v3767
        %v3846 = vpack.c.b16 %v3772, %v3770
        %v3847 = vpack.c.b16 %v3773, %v3771
        %v3848 = vpack.c.b16 %v3776, %v3774
        %v3849 = vpack.c.b16 %v3777, %v3775
        %v3850 = vpack.c.b16 %v3780, %v3778
        %v3851 = vpack.c.b16 %v3781, %v3779
        %v3852 = vpack.c.b16 %v3784, %v3782
        %v3853 = vpack.c.b16 %v3785, %v3783
        %v3854 = vpack.c.b16 %v3788, %v3786
        %v3855 = vpack.c.b16 %v3789, %v3787
        %v3856 = vpack.c.b16 %v3792, %v3790
        %v3857 = vpack.c.b16 %v3793, %v3791
        %3922 = vmatprep.subr.bf16.mxu0 %v3795
        %3923 = vmatpush1.bf16.msra.mxu0 %v3794
        %3924 = vmatprep.subr.bf16.mxu0 %v3797
        %3925 = vmatpush1.bf16.msra.mxu0 %v3796
        %3926 = vmatprep.subr.bf16.mxu0 %v3799
        %3927 = vmatpush1.bf16.msra.mxu0 %v3798
        %3928 = vmatprep.subr.bf16.mxu0 %v3801
        %3929 = vmatpush1.bf16.msra.mxu0 %v3800
        %3930 = vmatprep.subr.bf16.mxu0 %v3803
        %3931 = vmatpush1.bf16.msra.mxu0 %v3802
        %3932 = vmatprep.subr.bf16.mxu0 %v3805
        %3933 = vmatpush1.bf16.msra.mxu0 %v3804
        %3934 = vmatprep.subr.bf16.mxu0 %v3807
        %3935 = vmatpush1.bf16.msra.mxu0 %v3806
        %3936 = vmatprep.subr.bf16.mxu0 %v3809
        %3937 = vmatpush1.bf16.msra.mxu0 %v3808
        %3938 = vmatprep.subr.bf16.mxu0 %v3811
        %3939 = vmatpush1.bf16.msra.mxu0 %v3810
        %3940 = vmatprep.subr.bf16.mxu0 %v3813
        %3941 = vmatpush1.bf16.msra.mxu0 %v3812
        %3942 = vmatprep.subr.bf16.mxu0 %v3815
        %3943 = vmatpush1.bf16.msra.mxu0 %v3814
        %3944 = vmatprep.subr.bf16.mxu0 %v3817
        %3945 = vmatpush1.bf16.msra.mxu0 %v3816
        %3946 = vmatprep.subr.bf16.mxu0 %v3819
        %3947 = vmatpush1.bf16.msra.mxu0 %v3818
        %3948 = vmatprep.subr.bf16.mxu0 %v3821
        %3949 = vmatpush1.bf16.msra.mxu0 %v3820
        %3950 = vmatprep.subr.bf16.mxu0 %v3823
        %3951 = vmatpush1.bf16.msra.mxu0 %v3822
        %3952 = vmatprep.subr.bf16.mxu0 %v3825
        %3953 = vmatpush1.bf16.msra.mxu0 %v3824
        %3954 = vmatprep.mubr.bf16.mxu0 %v3061
        %3955 = vmatmul.mubr.bf16.gmra.mrb[0].mxu0 %v3060
        %v3956 = vpop.f32.mrb[0].mxu0
        %v3957 = vadd.f32 %v3596, %v3956
        %v3958 = vpop.f32.mrb[0].mxu0
        %v3959 = vadd.f32 %v3598, %v3958
        %v3960 = vpop.f32.mrb[0].mxu0
        %v3961 = vpop.f32.mrb[0].mxu0
        %3962 = vdwg.mxu0
        %3963 = vmatprep.subr.bf16.mxu0 %v3827
        %3964 = vmatpush1.bf16.msra.mxu0 %v3826
        %3965 = vmatprep.subr.bf16.mxu0 %v3829
        %3966 = vmatpush1.bf16.msra.mxu0 %v3828
        %3967 = vmatprep.subr.bf16.mxu0 %v3831
        %3968 = vmatpush1.bf16.msra.mxu0 %v3830
        %3969 = vmatprep.subr.bf16.mxu0 %v3833
        %3970 = vmatpush1.bf16.msra.mxu0 %v3832
        %3971 = vmatprep.subr.bf16.mxu0 %v3835
        %3972 = vmatpush1.bf16.msra.mxu0 %v3834
        %3973 = vmatprep.subr.bf16.mxu0 %v3837
        %3974 = vmatpush1.bf16.msra.mxu0 %v3836
        %3975 = vmatprep.subr.bf16.mxu0 %v3839
        %3976 = vmatpush1.bf16.msra.mxu0 %v3838
        %3977 = vmatprep.subr.bf16.mxu0 %v3841
        %3978 = vmatpush1.bf16.msra.mxu0 %v3840
        %3979 = vmatprep.subr.bf16.mxu0 %v3843
        %3980 = vmatpush1.bf16.msra.mxu0 %v3842
        %3981 = vmatprep.subr.bf16.mxu0 %v3845
        %3982 = vmatpush1.bf16.msra.mxu0 %v3844
        %3983 = vmatprep.subr.bf16.mxu0 %v3847
        %3984 = vmatpush1.bf16.msra.mxu0 %v3846
        %3985 = vmatprep.subr.bf16.mxu0 %v3849
        %3986 = vmatpush1.bf16.msra.mxu0 %v3848
        %3987 = vmatprep.subr.bf16.mxu0 %v3851
        %3988 = vmatpush1.bf16.msra.mxu0 %v3850
        %3989 = vmatprep.subr.bf16.mxu0 %v3853
        %3990 = vmatpush1.bf16.msra.mxu0 %v3852
        %3991 = vmatprep.subr.bf16.mxu0 %v3855
        %3992 = vmatpush1.bf16.msra.mxu0 %v3854
        %3993 = vmatprep.subr.bf16.mxu0 %v3857
        %3994 = vmatpush1.bf16.msra.mxu0 %v3856
        %3995 = vmatprep.mubr.bf16.mxu0 %v3063
        %3996 = vmatmul.mubr.bf16.gmra.mrb[0].mxu0 %v3062
        %v3997 = vpop.f32.mrb[0].mxu0
        %v3998 = vadd.f32 %v3957, %v3997
        %v3999 = vpop.f32.mrb[0].mxu0
        %v4000 = vadd.f32 %v3959, %v3999
        %v4001 = vpop.f32.mrb[0].mxu0
        %v4002 = vpop.f32.mrb[0].mxu0
        %4003 = vdwg.mxu0
        %v4004 = vld [vmem:[#allocation4] sm:$0xff]
        %v4005 = vld [vmem:[%s929] sm:$0x3]
        %4007 = vset.pattern.permute.xlu0 0
        %4008 = vperm.xlu0 %4007, %v4004
        %v4009 = vpop.permute.xlu0 %4008
        %v4012 = vlaneseq
        %v4013 = vshrl.u32 %v4012, 7
        %v4014 = vsub.s32 0, %v4013
        %v4015 = vrot.slane %v4005, %v4014
        %v4016 = vlaneseq
        %v4017 = vshrl.u32 %v4016, 7
        %v4018 = vsub.s32 1, %v4017
        %v4019 = vrot.slane %v4005, %v4018
        %v4022 = vmul.f32 %v4009, %v4015
        %v4023 = vmul.f32 %v4009, %v4019
        %v4024 = vadd.f32 %v3998, %v4022
        %v4025 = vadd.f32 %v4000, %v4023
        // Predicated region
        $region189: #{vocos_gen_forward.1} parent=111 // pred_check
          %p4026 = pneg %p1020
        $region190: #{vocos_gen_forward.1} parent=111 // pred_check_branch
          %4028 = sbr.rel (%p4026) target = $region192
        $region191: #{vocos_gen_forward.1} parent=111 // pred_region
          %v4029 = vld [vmem:[#allocation5] sm:$0xff]
          %v4030 = vld [vmem:[#allocation5 + $0x8] sm:$0xff]
          %v4031 = vld [vmem:[#allocation5 + $0x10] sm:$0xff]
          %v4032 = vld [vmem:[#allocation5 + $0x18] sm:$0xff]
          %v4033 = vadd.f32 %v4029, %v4024
          %v4034 = vadd.f32 %v4030, %v4025
          %v4035 = vadd.f32 %v4031, 0.0
          %v4036 = vadd.f32 %v4032, 0.0
          %4037 = vst [vmem:[#allocation5] sm:$0xff] %v4033
          %4038 = vst [vmem:[#allocation5 + $0x8] sm:$0xff] %v4034
          %4039 = vst [vmem:[#allocation5 + $0x10] sm:$0xff] %v4035
          %4040 = vst [vmem:[#allocation5 + $0x18] sm:$0xff] %v4036
        $region192: #{vocos_gen_forward.1} parent=111 // pred_fallthru
          _
        %p4041 = scmp.eq.s32.totalorder %s51, 1
        // Predicated region
        $region193: #{vocos_gen_forward.1} parent=111 // pred_check
          %p4042 = pneg %p4041
        $region194: #{vocos_gen_forward.1} parent=111 // pred_check_branch
          %4044 = sbr.rel (%p4042) target = $region196
        $region195: #{vocos_gen_forward.1} parent=111 // pred_region
          %v4045 = vrot.slane %v4024, 7
          %v4046 = vrot.slane %v4025, 7
          %v4047 = vlaneseq
          %v4048 = vshrl.u32 %v4047, 7
          %vm4049 = vcmp.lt.s32.totalorder %v4048, 1
          %v4050 = vsel %vm4049, %v4045, 0.0
          %v4051 = vsel %vm4049, %v4046, 0.0
          %v4052 = vsel %vm4049, 0.0, %v4045
          %v4053 = vsel %vm4049, 0.0, %v4046
          %v4054 = vld [vmem:[#allocation5] sm:$0xff]
          %v4055 = vld [vmem:[#allocation5 + $0x8] sm:$0xff]
          %v4056 = vld [vmem:[#allocation5 + $0x10] sm:$0xff]
          %v4057 = vld [vmem:[#allocation5 + $0x18] sm:$0xff]
          %v4058 = vadd.f32 %v4054, %v4052
          %v4059 = vadd.f32 %v4055, %v4053
          %v4060 = vadd.f32 %v4056, %v4050
          %v4061 = vadd.f32 %v4057, %v4051
          %4062 = vst [vmem:[#allocation5] sm:$0xff] %v4058
          %4063 = vst [vmem:[#allocation5 + $0x8] sm:$0xff] %v4059
          %4064 = vst [vmem:[#allocation5 + $0x10] sm:$0xff] %v4060
          %4065 = vst [vmem:[#allocation5 + $0x18] sm:$0xff] %v4061
        $region196: #{vocos_gen_forward.1} parent=111 // pred_fallthru
          _
        %p4066 = scmp.eq.s32.totalorder %s51, 2
        // Predicated region
        $region197: #{vocos_gen_forward.1} parent=111 // pred_check
          %p4067 = pneg %p4066
        $region198: #{vocos_gen_forward.1} parent=111 // pred_check_branch
          %4069 = sbr.rel (%p4067) target = $region200
        $region199: #{vocos_gen_forward.1} parent=111 // pred_region
          %v4070 = vrot.slane %v4024, 6
          %v4071 = vrot.slane %v4025, 6
          %v4072 = vlaneseq
          %v4073 = vshrl.u32 %v4072, 7
          %vm4074 = vcmp.lt.s32.totalorder %v4073, 2
          %v4075 = vsel %vm4074, %v4070, 0.0
          %v4076 = vsel %vm4074, %v4071, 0.0
          %v4077 = vsel %vm4074, 0.0, %v4070
          %v4078 = vsel %vm4074, 0.0, %v4071
          %v4079 = vld [vmem:[#allocation5] sm:$0xff]
          %v4080 = vld [vmem:[#allocation5 + $0x8] sm:$0xff]
          %v4081 = vld [vmem:[#allocation5 + $0x10] sm:$0xff]
          %v4082 = vld [vmem:[#allocation5 + $0x18] sm:$0xff]
          %v4083 = vadd.f32 %v4079, %v4077
          %v4084 = vadd.f32 %v4080, %v4078
          %v4085 = vadd.f32 %v4081, %v4075
          %v4086 = vadd.f32 %v4082, %v4076
          %4087 = vst [vmem:[#allocation5] sm:$0xff] %v4083
          %4088 = vst [vmem:[#allocation5 + $0x8] sm:$0xff] %v4084
          %4089 = vst [vmem:[#allocation5 + $0x10] sm:$0xff] %v4085
          %4090 = vst [vmem:[#allocation5 + $0x18] sm:$0xff] %v4086
        $region200: #{vocos_gen_forward.1} parent=111 // pred_fallthru
          _
        %p4091 = scmp.eq.s32.totalorder %s51, 3
        // Predicated region
        $region201: #{vocos_gen_forward.1} parent=111 // pred_check
          %p4092 = pneg %p4091
        $region202: #{vocos_gen_forward.1} parent=111 // pred_check_branch
          %4094 = sbr.rel (%p4092) target = $region204
        $region203: #{vocos_gen_forward.1} parent=111 // pred_region
          %v4095 = vrot.slane %v4024, 5
          %v4096 = vrot.slane %v4025, 5
          %v4097 = vlaneseq
          %v4098 = vshrl.u32 %v4097, 7
          %vm4099 = vcmp.lt.s32.totalorder %v4098, 3
          %v4100 = vsel %vm4099, %v4095, 0.0
          %v4101 = vsel %vm4099, %v4096, 0.0
          %v4102 = vsel %vm4099, 0.0, %v4095
          %v4103 = vsel %vm4099, 0.0, %v4096
          %v4104 = vld [vmem:[#allocation5] sm:$0xff]
          %v4105 = vld [vmem:[#allocation5 + $0x8] sm:$0xff]
          %v4106 = vld [vmem:[#allocation5 + $0x10] sm:$0xff]
          %v4107 = vld [vmem:[#allocation5 + $0x18] sm:$0xff]
          %v4108 = vadd.f32 %v4104, %v4102
          %v4109 = vadd.f32 %v4105, %v4103
          %v4110 = vadd.f32 %v4106, %v4100
          %v4111 = vadd.f32 %v4107, %v4101
          %4112 = vst [vmem:[#allocation5] sm:$0xff] %v4108
          %4113 = vst [vmem:[#allocation5 + $0x8] sm:$0xff] %v4109
          %4114 = vst [vmem:[#allocation5 + $0x10] sm:$0xff] %v4110
          %4115 = vst [vmem:[#allocation5 + $0x18] sm:$0xff] %v4111
          %v4116 = vld [vmem:[#allocation5] sm:$0xff]
          %v4117 = vld [vmem:[#allocation5 + $0x8] sm:$0xff]
          %v4118 = vld [vmem:[#allocation5 + $0x10] sm:$0xff]
          %v4119 = vld [vmem:[#allocation5 + $0x18] sm:$0xff]
          %v4120 = vld [vmem:[#allocation32] sm:$0xff]
          %v4121 = vld [vmem:[#allocation32 + $0x8] sm:$0xff]
          %v4122 = vld [vmem:[#allocation32 + $0x10] sm:$0xff]
          %v4123 = vld [vmem:[#allocation32 + $0x18] sm:$0xff]
          %v4124 = vmul.f32 %v4116, %v4120
          %v4125 = vmul.f32 %v4117, %v4121
          %v4126 = vmul.f32 %v4118, %v4122
          %v4127 = vmul.f32 %v4119, %v4123
          %4128 = vst [vmem:[%s1017] sm:$0xff] %v4124
          %4129 = vst [vmem:[%s1017 + $0x8] sm:$0xff] %v4125
          %4130 = vst [vmem:[%s1017 + $0x10] sm:$0xff] %v4126
          %4131 = vst [vmem:[%s1017 + $0x18] sm:$0xff] %v4127
        $region204: #{vocos_gen_forward.1} parent=111 // pred_fallthru
          _
        %s4132 = smul.u32 2, %s50
        %p4133 = scmp.lt.s32.totalorder %s4132, 3
        %s4134 = scalar_select %p4133, %s4132, 3
        %s4135 = smul.addr %s4134, 2
        %s4136 = smul.addr %s4135, 8
        %s4137 = scalar_lea.vmem %s23, %s4136
        // Predicated region
        $region205: #{vocos_gen_forward.1} parent=111 // pred_check
          %p4138 = pneg %p574
        $region206: #{vocos_gen_forward.1} parent=111 // pred_check_branch
          %4140 = sbr.rel (%p4138) target = $region208
        $region207: #{vocos_gen_forward.1} parent=111 // pred_region
          %s4141 = smul.u32 2, %s50
        $region208: #{vocos_gen_forward.1} parent=111 // pred_fallthru
          _
      $region112: #{vocos_gen_forward.1} parent=5 // pred_fallthru
        _
      %p4142 = scmp.le.s32.totalorder 2, %s41
      // Predicated region
      $region209: #{vocos_gen_forward.1} parent=5 // pred_check
        %p4143 = pneg %p4142
      $region210: #{vocos_gen_forward.1} parent=5 // pred_check_branch
        %4145 = sbr.rel (%p4143) target = $region212
      $region211: #{vocos_gen_forward.1} parent=5 // pred_region
        %s4146 = ssub.s32 %s41, 2
        // Predicated region
        $region213: #{vocos_gen_forward.1} parent=211 // pred_check
          %p4147 = pneg %p580
        $region214: #{vocos_gen_forward.1} parent=211 // pred_check_branch
          %4149 = sbr.rel (%p4147) target = $region216
        $region215: #{vocos_gen_forward.1} parent=211 // pred_region
          %s4150 = smul.u32 2, %s52
          %p4151 = scmp.lt.s32.totalorder %s4150, 3
          %s4152 = scalar_select %p4151, %s4150, 3
          %s4153 = smul.addr %s4152, 2
          %s4154 = smul.addr %s4153, 8
          %s4155 = scalar_lea.vmem %s23, %s4154
        $region216: #{vocos_gen_forward.1} parent=211 // pred_fallthru
          _
      $region212: #{vocos_gen_forward.1} parent=5 // pred_fallthru
        _
    $region6: #{vocos_gen_forward.1} parent=1 // loop_footer
      %s45 = sadd.s32 1, %s41
    $region7: #{vocos_gen_forward.1} parent=1 // loop_footer_branch
      %40 = sbr.rel target = $region3
    $region8: #{vocos_gen_forward.1} parent=1 // loop_exit
      _
    %4156 = vsyncpa [#allocation7], 1
    %s4157 = scalar_lea.sflag [#allocation7], 1
    %4158 = vsyncpa %s4157, 1
    %4159 = vsyncpa [#allocation9], 1
    %4160 = vsyncpa [#allocation12], 1
    %4161 = vsyncpa [#allocation15], 1
    %4162 = vsyncpa [#allocation18], 1
    %4163 = vsyncpa [#allocation21], 1
    %4164 = vsyncpa [#allocation24], 1
    %4165 = vsyncpa [#allocation27], 1
    %4166 = vsyncpa [#allocation30], 1
    %s4167 = scalar_lea.sflag [#allocation30], 1
    %4168 = vsyncpa %s4167, 1
    %4169 = vsyncpa [#allocation33], 1

</llo_original>
